<compile_context>
chip_gen: v7x
topology: tpu7x:2x2x1
jax: 0.10.0
libtpu: 0.0.40
codegen_flags: <defaults>
</compile_context>

<pallas_src>
import functools

import jax
import jax.numpy as jnp
from jax.experimental import pallas as pl
from jax.experimental.pallas import tpu as pltpu


def _round_up(x, m):
    return ((x + m - 1) // m) * m


def _weight_vmem_bytes(L, ep, hp, cp):
    """Conservative VMEM footprint of the (double-buffered) constant weight blocks."""
    wih = ep * 4 * hp * 2 + max(L - 1, 1) * hp * 4 * hp * 2
    whh = L * hp * 4 * hp * 2
    b = L * 4 * hp * 4
    fc = hp * hp * 2 + hp * 4 + hp * cp * 2 + cp * 4
    return 2 * (wih + whh + b + fc)


def _pick_t_tile(T, bt, ep, hp, budget_bytes):
    """Largest time-chunk length whose per-chunk VMEM footprint fits the budget."""
    # Per timestep row-block of the chunk:
    #   gx_scr  : bt * 4*hp * 4 B   (f32 hoisted input projection)
    #   act_scr : bt * hp   * 4 B   (f32 inter-layer activations)
    #   x block : 2 * bt * ep * 2 B (bf16, double-buffered input DMA)
    per_step = bt * (4 * hp * 4 + hp * 4 + 2 * ep * 2)
    t_tile = max(1, budget_bytes // per_step)
    t_tile = int(min(t_tile, T, 256))
    if t_tile > 8:
        t_tile = (t_tile // 8) * 8      # keep the unroll factor (8) a divisor
    return t_tile


def _vmem_limit_bytes(t_tile, bt, L, ep, hp, cp):
    rows = t_tile * bt
    est = (rows * 4 * hp * 4            # gx_scr
           + rows * hp * 4              # act_scr
           + 2 * L * bt * hp * 4        # h/c carries
           + 2 * rows * ep * 2          # x block (double-buffered)
           + 2 * bt * cp * 4            # logits block
           + _weight_vmem_bytes(L, ep, hp, cp))
    return int(min(max(est + (4 << 20), 16 << 20), 96 << 20))


# ----------------------------------------------------------------------------
# Fused kernel: all LSTM layers over one time chunk + fc head on the last chunk
# ----------------------------------------------------------------------------
def _fused_lstm_kernel(x_ref, wih0_ref, wihr_ref, whh_ref, b_ref,
                       fc1w_ref, fc1b_ref, fc2w_ref, fc2b_ref,
                       out_ref,
                       gx_scr, act_scr, h_scr, c_scr,
                       *, t_valid, mask_tail):
    """Grid = (batch_block, time_chunk).

    x_ref   : (t_tile, bt, Ep)   bf16  embedded inputs for this chunk / batch block
    wih0_ref: (Ep, 4Hp)          bf16  layer-0 input projection
    wihr_ref: (max(L-1,1), Hp, 4Hp) bf16  input projections of layers 1..L-1
    whh_ref : (L, Hp, 4Hp)       bf16  recurrent weights
    b_ref   : (L, 1, 4Hp)        f32   b_ih + b_hh (gate-padded)
    fc*     : fc head weights/biases (padded)
    out_ref : (bt, Cp)           f32   logits (written on the last chunk only)
    gx_scr  : (t_tile*bt, 4Hp)   f32   hoisted per-chunk input projection
    act_scr : (t_tile*bt, Hp)    f32   inter-layer chunk activations (VMEM only)
    h_scr/c_scr: (L, bt, Hp)     f32   per-layer recurrent carries
    """
    t_tile, bt, ep = x_ref.shape
    L, hp, _ = whh_ref.shape
    rows = t_tile * bt
    chunk = pl.program_id(1)

    @pl.when(chunk == 0)
    def _init():
        h_scr[...] = jnp.zeros_like(h_scr)
        c_scr[...] = jnp.zeros_like(c_scr)

    t0 = chunk * t_tile          # first global timestep of this chunk

    def run_layer(l, x2d):
        # Hoisted per-chunk input projection: one big MXU matmul (no serial dep).
        # TODO(synk): issue this matmul in per-substep slices just ahead of the
        # recurrence so it fully overlaps the EUP/VPU-bound serial loop (v5e MXU).
        wih = wih0_ref[...] if l == 0 else wihr_ref[l - 1]
        gx_scr[...] = (
            jnp.dot(x2d, wih, preferred_element_type=jnp.float32) + b_ref[l]
        )
        whh = whh_ref[l]
        write_seq = l < (L - 1)   # last layer only needs its final h (carry)

        def step(i, carry):
            h, c = carry                                         # (bt, hp) f32
            r = pl.multiple_of(i * bt, bt)
            gates = gx_scr[pl.ds(r, bt), :] + jnp.dot(
                h.astype(jnp.bfloat16), whh,
                preferred_element_type=jnp.float32)              # (bt, 4hp) f32
            sig = jax.nn.sigmoid(gates[:, :3 * hp])              # i, f, o in one slab
            i_g = sig[:, 0 * hp:1 * hp]
            f_g = sig[:, 1 * hp:2 * hp]
            o_g = sig[:, 2 * hp:3 * hp]
            g_g = jnp.tanh(gates[:, 3 * hp:4 * hp])
            c_new = f_g * c + i_g * g_g
            h_new = o_g * jnp.tanh(c_new)
            if mask_tail:                                        # padded tail timesteps
                valid = (t0 + i) < t_valid
                c_new = jnp.where(valid, c_new, c)
                h_new = jnp.where(valid, h_new, h)
            if write_seq:
                act_scr[pl.ds(r, bt), :] = h_new                 # in-place is safe:
            return h_new, c_new                                  # row i read before write

        h_fin, c_fin = jax.lax.fori_loop(
            0, t_tile, step, (h_scr[l], c_scr[l]),
            unroll=min(t_tile, 8))                               # cap unroll: no spills
        h_scr[l] = h_fin
        c_scr[l] = c_fin
        return h_fin

    h_last = run_layer(0, x_ref[...].reshape(rows, ep))
    for l in range(1, L):
        h_last = run_layer(l, act_scr[...].astype(jnp.bfloat16))

    @pl.when(chunk == pl.num_programs(1) - 1)
    def _fc_head():
        z = jnp.dot(h_last.astype(jnp.bfloat16), fc1w_ref[...],
                    preferred_element_type=jnp.float32) + fc1b_ref[...]
        z = jnp.maximum(z, 0.0)
        out_ref[...] = jnp.dot(z.astype(jnp.bfloat16), fc2w_ref[...],
                               preferred_element_type=jnp.float32) + fc2b_ref[...]


# ----------------------------------------------------------------------------
# pallas_call wrapper
# ----------------------------------------------------------------------------
def _fused_forward(x_tbe, p, *, t_valid, t_tile, num_batch_blocks, vmem_limit):
    T_pad, Bp, Ep = x_tbe.shape
    L, Hp, H4 = p["whh"].shape
    Lr = p["wih_rest"].shape[0]
    Cp = p["fc2_w_t"].shape[1]
    bt = Bp // num_batch_blocks
    rows = t_tile * bt
    n_chunks = T_pad // t_tile

    kernel = functools.partial(
        _fused_lstm_kernel, t_valid=t_valid, mask_tail=(T_pad != t_valid))

    return pl.pallas_call(
        kernel,
        out_shape=jax.ShapeDtypeStruct((Bp, Cp), jnp.float32),
        grid_spec=pltpu.PrefetchScalarGridSpec(
            num_scalar_prefetch=0,
            grid=(num_batch_blocks, n_chunks),
            in_specs=[
                pl.BlockSpec((t_tile, bt, Ep), lambda b, t: (t, b, 0)),
                pl.BlockSpec((Ep, H4), lambda b, t: (0, 0)),
                pl.BlockSpec((Lr, Hp, H4), lambda b, t: (0, 0, 0)),
                pl.BlockSpec((L, Hp, H4), lambda b, t: (0, 0, 0)),
                pl.BlockSpec((L, 1, H4), lambda b, t: (0, 0, 0)),
                pl.BlockSpec((Hp, Hp), lambda b, t: (0, 0)),
                pl.BlockSpec((1, Hp), lambda b, t: (0, 0)),
                pl.BlockSpec((Hp, Cp), lambda b, t: (0, 0)),
                pl.BlockSpec((1, Cp), lambda b, t: (0, 0)),
            ],
            out_specs=pl.BlockSpec((bt, Cp), lambda b, t: (b, 0)),
            scratch_shapes=[
                pltpu.VMEM((rows, H4), jnp.float32),     # gx_scr
                pltpu.VMEM((rows, Hp), jnp.float32),     # act_scr (inter-layer chunk)
                pltpu.VMEM((L, bt, Hp), jnp.float32),    # h carries
                pltpu.VMEM((L, bt, Hp), jnp.float32),    # c carries
            ],
        ),
        compiler_params=pltpu.CompilerParams(
            dimension_semantics=("parallel", "arbitrary"),
            vmem_limit_bytes=vmem_limit,
        ),
        # TODO(synk): single-buffer the constant weight BlockSpecs
        # (pipeline_mode=pl.Buffered(1)) once verified on the target jax version.
    )(x_tbe, p["wih0"], p["wih_rest"], p["whh"], p["bias"],
      p["fc1_w_t"], p["fc1_b"], p["fc2_w_t"], p["fc2_b"])


# ----------------------------------------------------------------------------
# Full model forward
# ----------------------------------------------------------------------------
@functools.partial(jax.jit, static_argnames=("num_classes", "num_batch_blocks"))
def lstm_model_forward(params, token_ids, *, num_classes, num_batch_blocks=1):
    B, T = token_ids.shape
    Bp = _round_up(B, 8 * num_batch_blocks)
    L, Hp, _ = params["whh"].shape
    Ep = params["embedding"].shape[1]
    Cp = params["fc2_w_t"].shape[1]
    bt = Bp // num_batch_blocks

    budget = max(8 << 20, (48 << 20) - _weight_vmem_bytes(L, Ep, Hp, Cp))
    t_tile = _pick_t_tile(T, bt, Ep, Hp, budget)
    n_chunks = pl.cdiv(T, t_tile)
    T_pad = n_chunks * t_tile

    # Embedding gather (glue; table stored bf16), batch padded, time-major (T, Bp, Ep).
    # TODO(synk): fuse the gather into the kernel via scalar-prefetched token ids +
    # a pl.Element row-gather BlockSpec to avoid materializing it in HBM.
    ids = jnp.zeros((Bp, T), token_ids.dtype).at[:B, :].set(token_ids)
    emb = jnp.take(params["embedding"], ids.T, axis=0)            # (T, Bp, Ep) bf16
    if T_pad != T:
        emb = jnp.concatenate(
            [emb, jnp.zeros((T_pad - T, Bp, Ep), emb.dtype)], axis=0)

    vmem_limit = _vmem_limit_bytes(t_tile, bt, L, Ep, Hp, Cp)
    logits_p = _fused_forward(emb, params, t_valid=T, t_tile=t_tile,
                              num_batch_blocks=num_batch_blocks,
                              vmem_limit=vmem_limit)              # (Bp, Cp)
    return logits_p[:B, :num_classes]


# ----------------------------------------------------------------------------
# Parameter initialization (PyTorch-equivalent shapes, padded / packed / stacked)
# ----------------------------------------------------------------------------
def init_params(key, num_classes, vocab_size, embedding_dims, num_layers, hidden_dims):
    H, Hp = hidden_dims, _round_up(hidden_dims, 128)
    E, Ep = embedding_dims, _round_up(embedding_dims, 128)
    C, Cp = num_classes, _round_up(num_classes, 128)

    keys = iter(jax.random.split(key, 1 + 4 * num_layers + 4))
    nxt = lambda: next(keys)
    scale = 1.0 / float(H) ** 0.5

    # Repack PyTorch's (i, f, g, o) gate order to (i, f, o, g): sigmoid gates contiguous.
    gate_src = (0, 1, 3, 2)

    def pack_gates(w, in_dim_p):
        in_dim = w.shape[1]
        out = jnp.zeros((in_dim_p, 4 * Hp), jnp.float32)
        for slot, g in enumerate(gate_src):
            out = out.at[:in_dim, slot * Hp:slot * Hp + H].set(w[g * H:(g + 1) * H, :].T)
        return out

    def pack_gate_bias(b):
        out = jnp.zeros((1, 4 * Hp), jnp.float32)
        for slot, g in enumerate(gate_src):
            out = out.at[0, slot * Hp:slot * Hp + H].set(b[g * H:(g + 1) * H])
        return out

    params = {}
    emb = jax.random.normal(nxt(), (vocab_size, E), jnp.float32)
    params["embedding"] = (jnp.zeros((vocab_size, Ep), jnp.float32)
                           .at[:, :E].set(emb)).astype(jnp.bfloat16)

    wih0 = None
    wih_rest, whh_all, bias_all = [], [], []
    for l in range(num_layers):
        in_dim = E if l == 0 else H
        in_dim_p = Ep if l == 0 else Hp
        w_ih = jax.random.uniform(nxt(), (4 * H, in_dim), jnp.float32, -scale, scale)
        w_hh = jax.random.uniform(nxt(), (4 * H, H), jnp.float32, -scale, scale)
        b_ih = jax.random.uniform(nxt(), (4 * H,), jnp.float32, -scale, scale)
        b_hh = jax.random.uniform(nxt(), (4 * H,), jnp.float32, -scale, scale)
        packed = pack_gates(w_ih, in_dim_p).astype(jnp.bfloat16)
        if l == 0:
            wih0 = packed
        else:
            wih_rest.append(packed)
        whh_all.append(pack_gates(w_hh, Hp).astype(jnp.bfloat16))
        bias_all.append(pack_gate_bias(b_ih + b_hh))

    params["wih0"] = wih0                                         # (Ep, 4Hp) bf16
    params["wih_rest"] = (jnp.stack(wih_rest) if wih_rest
                          else jnp.zeros((1, Hp, 4 * Hp), jnp.bfloat16))  # dummy if L==1
    params["whh"] = jnp.stack(whh_all)                            # (L, Hp, 4Hp) bf16
    params["bias"] = jnp.stack(bias_all)                          # (L, 1, 4Hp) f32

    fc1_w = jax.random.uniform(nxt(), (H, H), jnp.float32, -scale, scale)
    fc1_b = jax.random.uniform(nxt(), (H,), jnp.float32, -scale, scale)
    fc2_w = jax.random.uniform(nxt(), (C, H), jnp.float32, -scale, scale)
    fc2_b = jax.random.uniform(nxt(), (C,), jnp.float32, -scale, scale)

    params["fc1_w_t"] = (jnp.zeros((Hp, Hp), jnp.float32)
                         .at[:H, :H].set(fc1_w.T)).astype(jnp.bfloat16)
    params["fc1_b"] = jnp.zeros((1, Hp), jnp.float32).at[0, :H].set(fc1_b)
    params["fc2_w_t"] = (jnp.zeros((Hp, Cp), jnp.float32)
                         .at[:H, :C].set(fc2_w.T)).astype(jnp.bfloat16)
    params["fc2_b"] = jnp.zeros((1, Cp), jnp.float32).at[0, :C].set(fc2_b)
    return params


if __name__ == "__main__":
    # Small synthetic config (matches the PyTorch module's constructor).
    num_classes = 4
    vocab_size = 64
    embedding_dims = 16
    num_layers = 2
    hidden_dims = 32
    batch, seq = 2, 8

    key = jax.random.PRNGKey(0)
    pkey, xkey = jax.random.split(key)

    params = init_params(pkey, num_classes, vocab_size,
                         embedding_dims, num_layers, hidden_dims)
    token_ids = jax.random.randint(xkey, (batch, seq), 0, vocab_size, jnp.int32)

    logits = lstm_model_forward(params, token_ids, num_classes=num_classes)
    jax.block_until_ready(logits)

    assert logits.shape == (batch, num_classes), logits.shape
    assert logits.dtype == jnp.float32
    print("KERNEL_OK")
</pallas_src>

<mosaic_0001>
module attributes {stable_mosaic.version = 11 : i64} {
  func.func @_fused_lstm_kernel(%arg0: i32, %arg1: i32, %arg2: memref<8x8x128xbf16, #tpu.memory_space<vmem>>, %arg3: memref<128x512xbf16, #tpu.memory_space<vmem>>, %arg4: memref<1x128x512xbf16, #tpu.memory_space<vmem>>, %arg5: memref<2x128x512xbf16, #tpu.memory_space<vmem>>, %arg6: memref<2x1x512xf32, #tpu.memory_space<vmem>>, %arg7: memref<128x128xbf16, #tpu.memory_space<vmem>>, %arg8: memref<1x128xf32, #tpu.memory_space<vmem>>, %arg9: memref<128x128xbf16, #tpu.memory_space<vmem>>, %arg10: memref<1x128xf32, #tpu.memory_space<vmem>>, %arg11: memref<8x128xf32, #tpu.memory_space<vmem>>, %arg12: memref<64x512xf32, #tpu.memory_space<vmem>>, %arg13: memref<64x128xf32, #tpu.memory_space<vmem>>, %arg14: memref<2x8x128xf32, #tpu.memory_space<vmem>>, %arg15: memref<2x8x128xf32, #tpu.memory_space<vmem>>) attributes {dimension_semantics = [#tpu.dimension_semantics<parallel>, #tpu.dimension_semantics<arbitrary>], iteration_bounds = array<i64: 1, 1>, scalar_prefetch = 0 : i64, scratch_operands = 4 : i64, tpu.core_type = #tpu.core_type<tc>, window_params = [{transform_indices = @transform_0, window_bounds = array<i64: 8, 8, 128>}, {pipeline_mode = #tpu.pipeline_mode<synchronous>, transform_indices = @transform_1, window_bounds = array<i64: 128, 512>}, {pipeline_mode = #tpu.pipeline_mode<synchronous>, transform_indices = @transform_2, window_bounds = array<i64: 1, 128, 512>}, {pipeline_mode = #tpu.pipeline_mode<synchronous>, transform_indices = @transform_3, window_bounds = array<i64: 2, 128, 512>}, {pipeline_mode = #tpu.pipeline_mode<synchronous>, transform_indices = @transform_4, window_bounds = array<i64: 2, 1, 512>}, {pipeline_mode = #tpu.pipeline_mode<synchronous>, transform_indices = @transform_5, window_bounds = array<i64: 128, 128>}, {pipeline_mode = #tpu.pipeline_mode<synchronous>, transform_indices = @transform_6, window_bounds = array<i64: 1, 128>}, {pipeline_mode = #tpu.pipeline_mode<synchronous>, transform_indices = @transform_7, window_bounds = array<i64: 128, 128>}, {pipeline_mode = #tpu.pipeline_mode<synchronous>, transform_indices = @transform_8, window_bounds = array<i64: 1, 128>}, {transform_indices = @transform_9, window_bounds = array<i64: 8, 128>}]} {
    %c0_i32 = arith.constant 0 : i32
    %0 = arith.cmpi eq, %arg1, %c0_i32 : i32
    %1 = arith.extui %0 : i1 to i32
    %c0_i32_0 = arith.constant 0 : i32
    %2 = arith.cmpi ne, %1, %c0_i32_0 : i32
    scf.if %2 {
      %cst_134 = arith.constant 0.000000e+00 : f32
      %433 = vector.broadcast %cst_134 : f32 to vector<2x8x128xf32>
      %c0_135 = arith.constant 0 : index
      %c0_136 = arith.constant 0 : index
      %c0_137 = arith.constant 0 : index
      %434 = vector.load %arg14[%c0_135, %c0_136, %c0_137] : memref<2x8x128xf32, #tpu.memory_space<vmem>>, vector<2x8x128xf32>
      tpu.vector_store %arg14[%c0_135, %c0_136, %c0_137], %433 {strides = array<i32>} : memref<2x8x128xf32, #tpu.memory_space<vmem>>, vector<2x8x128xf32>,
      %cst_138 = arith.constant 0.000000e+00 : f32
      %435 = vector.broadcast %cst_138 : f32 to vector<2x8x128xf32>
      %c0_139 = arith.constant 0 : index
      %c0_140 = arith.constant 0 : index
      %c0_141 = arith.constant 0 : index
      %436 = vector.load %arg15[%c0_139, %c0_140, %c0_141] : memref<2x8x128xf32, #tpu.memory_space<vmem>>, vector<2x8x128xf32>
      tpu.vector_store %arg15[%c0_139, %c0_140, %c0_141], %435 {strides = array<i32>} : memref<2x8x128xf32, #tpu.memory_space<vmem>>, vector<2x8x128xf32>,
    } else {
    }
    %c0 = arith.constant 0 : index
    %c0_1 = arith.constant 0 : index
    %c0_2 = arith.constant 0 : index
    %3 = vector.load %arg2[%c0, %c0_1, %c0_2] : memref<8x8x128xbf16, #tpu.memory_space<vmem>>, vector<8x8x128xbf16>
    %4 = vector.shape_cast %3 : vector<8x8x128xbf16> to vector<64x128xbf16>
    %c0_3 = arith.constant 0 : index
    %c0_4 = arith.constant 0 : index
    %5 = vector.load %arg3[%c0_3, %c0_4] : memref<128x512xbf16, #tpu.memory_space<vmem>>, vector<128x512xbf16>
    %cst = arith.constant dense<0.000000e+00> : vector<64x512xf32>
    %6 = tpu.matmul %4, %5, %cst {dimension_numbers = #tpu.dot_dimension_numbers<[1], [0], [0], [1], [0, 0, 1, 1], [], []>} : vector<64x128xbf16>, vector<128x512xbf16>, vector<64x512xf32> -> vector<64x512xf32>
    %c0_5 = arith.constant 0 : index
    %c0_6 = arith.constant 0 : index
    %c0_7 = arith.constant 0 : index
    %7 = vector.load %arg6[%c0_5, %c0_6, %c0_7] : memref<2x1x512xf32, #tpu.memory_space<vmem>>, vector<1x1x512xf32>
    %8 = vector.shape_cast %7 : vector<1x1x512xf32> to vector<1x512xf32>
    %9 = vector.broadcast %8 : vector<1x512xf32> to vector<64x512xf32>
    %10 = arith.addf %6, %9 : vector<64x512xf32>
    %c0_8 = arith.constant 0 : index
    %c0_9 = arith.constant 0 : index
    %11 = vector.load %arg12[%c0_8, %c0_9] : memref<64x512xf32, #tpu.memory_space<vmem>>, vector<64x512xf32>
    tpu.vector_store %arg12[%c0_8, %c0_9], %10 {strides = array<i32>} : memref<64x512xf32, #tpu.memory_space<vmem>>, vector<64x512xf32>,
    %c0_10 = arith.constant 0 : index
    %c0_11 = arith.constant 0 : index
    %c0_12 = arith.constant 0 : index
    %12 = vector.load %arg5[%c0_10, %c0_11, %c0_12] : memref<2x128x512xbf16, #tpu.memory_space<vmem>>, vector<1x128x512xbf16>
    %13 = vector.shape_cast %12 : vector<1x128x512xbf16> to vector<128x512xbf16>
    %c0_13 = arith.constant 0 : index
    %c0_14 = arith.constant 0 : index
    %c0_15 = arith.constant 0 : index
    %14 = vector.load %arg14[%c0_13, %c0_14, %c0_15] : memref<2x8x128xf32, #tpu.memory_space<vmem>>, vector<1x8x128xf32>
    %15 = vector.shape_cast %14 : vector<1x8x128xf32> to vector<8x128xf32>
    %c0_16 = arith.constant 0 : index
    %c0_17 = arith.constant 0 : index
    %c0_18 = arith.constant 0 : index
    %16 = vector.load %arg15[%c0_16, %c0_17, %c0_18] : memref<2x8x128xf32, #tpu.memory_space<vmem>>, vector<1x8x128xf32>
    %17 = vector.shape_cast %16 : vector<1x8x128xf32> to vector<8x128xf32>
    %c0_i32_19 = arith.constant 0 : i32
    %c8_i32 = arith.constant 8 : i32
    %18 = arith.muli %c0_i32_19, %c8_i32 : i32
    %19 = tpu.assume_multiple %18, 8 : i32
    %20 = arith.index_cast %19 : i32 to index
    %c0_20 = arith.constant 0 : index
    %21 = vector.load %arg12[%20, %c0_20] : memref<64x512xf32, #tpu.memory_space<vmem>>, vector<8x512xf32>
    %22 = arith.truncf %15 : vector<8x128xf32> to vector<8x128xbf16>
    %cst_21 = arith.constant dense<0.000000e+00> : vector<8x512xf32>
    %23 = tpu.matmul %22, %13, %cst_21 {dimension_numbers = #tpu.dot_dimension_numbers<[1], [0], [0], [1], [0, 0, 1, 1], [], []>} : vector<8x128xbf16>, vector<128x512xbf16>, vector<8x512xf32> -> vector<8x512xf32>
    %24 = arith.addf %21, %23 : vector<8x512xf32>
    %25 = vector.extract_strided_slice %24 {offsets = [0, 0], sizes = [8, 384], strides = [1, 1]} : vector<8x512xf32> to vector<8x384xf32>
    %26 = arith.negf %25 : vector<8x384xf32>
    %27 = math.exp %26 : vector<8x384xf32>
    %cst_22 = arith.constant 1.000000e+00 : f32
    %28 = vector.broadcast %cst_22 : f32 to vector<8x384xf32>
    %29 = arith.addf %28, %27 : vector<8x384xf32>
    %30 = arith.divf %28, %29 : vector<8x384xf32>
    %31 = vector.extract_strided_slice %30 {offsets = [0, 0], sizes = [8, 128], strides = [1, 1]} : vector<8x384xf32> to vector<8x128xf32>
    %32 = vector.extract_strided_slice %30 {offsets = [0, 128], sizes = [8, 128], strides = [1, 1]} : vector<8x384xf32> to vector<8x128xf32>
    %33 = vector.extract_strided_slice %30 {offsets = [0, 256], sizes = [8, 128], strides = [1, 1]} : vector<8x384xf32> to vector<8x128xf32>
    %34 = vector.extract_strided_slice %24 {offsets = [0, 384], sizes = [8, 128], strides = [1, 1]} : vector<8x512xf32> to vector<8x128xf32>
    %35 = math.tanh %34 : vector<8x128xf32>
    %36 = arith.mulf %32, %17 : vector<8x128xf32>
    %37 = arith.mulf %31, %35 : vector<8x128xf32>
    %38 = arith.addf %36, %37 : vector<8x128xf32>
    %39 = math.tanh %38 : vector<8x128xf32>
    %40 = arith.mulf %33, %39 : vector<8x128xf32>
    %41 = arith.index_cast %19 : i32 to index
    %c0_23 = arith.constant 0 : index
    %42 = vector.load %arg13[%41, %c0_23] : memref<64x128xf32, #tpu.memory_space<vmem>>, vector<8x128xf32>
    tpu.vector_store %arg13[%41, %c0_23], %40 {strides = array<i32>} : memref<64x128xf32, #tpu.memory_space<vmem>>, vector<8x128xf32>,
    %c1_i32 = arith.constant 1 : i32
    %c8_i32_24 = arith.constant 8 : i32
    %43 = arith.muli %c1_i32, %c8_i32_24 : i32
    %44 = tpu.assume_multiple %43, 8 : i32
    %45 = arith.index_cast %44 : i32 to index
    %c0_25 = arith.constant 0 : index
    %46 = vector.load %arg12[%45, %c0_25] : memref<64x512xf32, #tpu.memory_space<vmem>>, vector<8x512xf32>
    %47 = arith.truncf %40 : vector<8x128xf32> to vector<8x128xbf16>
    %cst_26 = arith.constant dense<0.000000e+00> : vector<8x512xf32>
    %48 = tpu.matmul %47, %13, %cst_26 {dimension_numbers = #tpu.dot_dimension_numbers<[1], [0], [0], [1], [0, 0, 1, 1], [], []>} : vector<8x128xbf16>, vector<128x512xbf16>, vector<8x512xf32> -> vector<8x512xf32>
    %49 = arith.addf %46, %48 : vector<8x512xf32>
    %50 = vector.extract_strided_slice %49 {offsets = [0, 0], sizes = [8, 384], strides = [1, 1]} : vector<8x512xf32> to vector<8x384xf32>
    %51 = arith.negf %50 : vector<8x384xf32>
    %52 = math.exp %51 : vector<8x384xf32>
    %cst_27 = arith.constant 1.000000e+00 : f32
    %53 = vector.broadcast %cst_27 : f32 to vector<8x384xf32>
    %54 = arith.addf %53, %52 : vector<8x384xf32>
    %55 = arith.divf %53, %54 : vector<8x384xf32>
    %56 = vector.extract_strided_slice %55 {offsets = [0, 0], sizes = [8, 128], strides = [1, 1]} : vector<8x384xf32> to vector<8x128xf32>
    %57 = vector.extract_strided_slice %55 {offsets = [0, 128], sizes = [8, 128], strides = [1, 1]} : vector<8x384xf32> to vector<8x128xf32>
    %58 = vector.extract_strided_slice %55 {offsets = [0, 256], sizes = [8, 128], strides = [1, 1]} : vector<8x384xf32> to vector<8x128xf32>
    %59 = vector.extract_strided_slice %49 {offsets = [0, 384], sizes = [8, 128], strides = [1, 1]} : vector<8x512xf32> to vector<8x128xf32>
    %60 = math.tanh %59 : vector<8x128xf32>
    %61 = arith.mulf %57, %38 : vector<8x128xf32>
    %62 = arith.mulf %56, %60 : vector<8x128xf32>
    %63 = arith.addf %61, %62 : vector<8x128xf32>
    %64 = math.tanh %63 : vector<8x128xf32>
    %65 = arith.mulf %58, %64 : vector<8x128xf32>
    %66 = arith.index_cast %44 : i32 to index
    %c0_28 = arith.constant 0 : index
    %67 = vector.load %arg13[%66, %c0_28] : memref<64x128xf32, #tpu.memory_space<vmem>>, vector<8x128xf32>
    tpu.vector_store %arg13[%66, %c0_28], %65 {strides = array<i32>} : memref<64x128xf32, #tpu.memory_space<vmem>>, vector<8x128xf32>,
    %c2_i32 = arith.constant 2 : i32
    %c8_i32_29 = arith.constant 8 : i32
    %68 = arith.muli %c2_i32, %c8_i32_29 : i32
    %69 = tpu.assume_multiple %68, 8 : i32
    %70 = arith.index_cast %69 : i32 to index
    %c0_30 = arith.constant 0 : index
    %71 = vector.load %arg12[%70, %c0_30] : memref<64x512xf32, #tpu.memory_space<vmem>>, vector<8x512xf32>
    %72 = arith.truncf %65 : vector<8x128xf32> to vector<8x128xbf16>
    %cst_31 = arith.constant dense<0.000000e+00> : vector<8x512xf32>
    %73 = tpu.matmul %72, %13, %cst_31 {dimension_numbers = #tpu.dot_dimension_numbers<[1], [0], [0], [1], [0, 0, 1, 1], [], []>} : vector<8x128xbf16>, vector<128x512xbf16>, vector<8x512xf32> -> vector<8x512xf32>
    %74 = arith.addf %71, %73 : vector<8x512xf32>
    %75 = vector.extract_strided_slice %74 {offsets = [0, 0], sizes = [8, 384], strides = [1, 1]} : vector<8x512xf32> to vector<8x384xf32>
    %76 = arith.negf %75 : vector<8x384xf32>
    %77 = math.exp %76 : vector<8x384xf32>
    %cst_32 = arith.constant 1.000000e+00 : f32
    %78 = vector.broadcast %cst_32 : f32 to vector<8x384xf32>
    %79 = arith.addf %78, %77 : vector<8x384xf32>
    %80 = arith.divf %78, %79 : vector<8x384xf32>
    %81 = vector.extract_strided_slice %80 {offsets = [0, 0], sizes = [8, 128], strides = [1, 1]} : vector<8x384xf32> to vector<8x128xf32>
    %82 = vector.extract_strided_slice %80 {offsets = [0, 128], sizes = [8, 128], strides = [1, 1]} : vector<8x384xf32> to vector<8x128xf32>
    %83 = vector.extract_strided_slice %80 {offsets = [0, 256], sizes = [8, 128], strides = [1, 1]} : vector<8x384xf32> to vector<8x128xf32>
    %84 = vector.extract_strided_slice %74 {offsets = [0, 384], sizes = [8, 128], strides = [1, 1]} : vector<8x512xf32> to vector<8x128xf32>
    %85 = math.tanh %84 : vector<8x128xf32>
    %86 = arith.mulf %82, %63 : vector<8x128xf32>
    %87 = arith.mulf %81, %85 : vector<8x128xf32>
    %88 = arith.addf %86, %87 : vector<8x128xf32>
    %89 = math.tanh %88 : vector<8x128xf32>
    %90 = arith.mulf %83, %89 : vector<8x128xf32>
    %91 = arith.index_cast %69 : i32 to index
    %c0_33 = arith.constant 0 : index
    %92 = vector.load %arg13[%91, %c0_33] : memref<64x128xf32, #tpu.memory_space<vmem>>, vector<8x128xf32>
    tpu.vector_store %arg13[%91, %c0_33], %90 {strides = array<i32>} : memref<64x128xf32, #tpu.memory_space<vmem>>, vector<8x128xf32>,
    %c3_i32 = arith.constant 3 : i32
    %c8_i32_34 = arith.constant 8 : i32
    %93 = arith.muli %c3_i32, %c8_i32_34 : i32
    %94 = tpu.assume_multiple %93, 8 : i32
    %95 = arith.index_cast %94 : i32 to index
    %c0_35 = arith.constant 0 : index
    %96 = vector.load %arg12[%95, %c0_35] : memref<64x512xf32, #tpu.memory_space<vmem>>, vector<8x512xf32>
    %97 = arith.truncf %90 : vector<8x128xf32> to vector<8x128xbf16>
    %cst_36 = arith.constant dense<0.000000e+00> : vector<8x512xf32>
    %98 = tpu.matmul %97, %13, %cst_36 {dimension_numbers = #tpu.dot_dimension_numbers<[1], [0], [0], [1], [0, 0, 1, 1], [], []>} : vector<8x128xbf16>, vector<128x512xbf16>, vector<8x512xf32> -> vector<8x512xf32>
    %99 = arith.addf %96, %98 : vector<8x512xf32>
    %100 = vector.extract_strided_slice %99 {offsets = [0, 0], sizes = [8, 384], strides = [1, 1]} : vector<8x512xf32> to vector<8x384xf32>
    %101 = arith.negf %100 : vector<8x384xf32>
    %102 = math.exp %101 : vector<8x384xf32>
    %cst_37 = arith.constant 1.000000e+00 : f32
    %103 = vector.broadcast %cst_37 : f32 to vector<8x384xf32>
    %104 = arith.addf %103, %102 : vector<8x384xf32>
    %105 = arith.divf %103, %104 : vector<8x384xf32>
    %106 = vector.extract_strided_slice %105 {offsets = [0, 0], sizes = [8, 128], strides = [1, 1]} : vector<8x384xf32> to vector<8x128xf32>
    %107 = vector.extract_strided_slice %105 {offsets = [0, 128], sizes = [8, 128], strides = [1, 1]} : vector<8x384xf32> to vector<8x128xf32>
    %108 = vector.extract_strided_slice %105 {offsets = [0, 256], sizes = [8, 128], strides = [1, 1]} : vector<8x384xf32> to vector<8x128xf32>
    %109 = vector.extract_strided_slice %99 {offsets = [0, 384], sizes = [8, 128], strides = [1, 1]} : vector<8x512xf32> to vector<8x128xf32>
    %110 = math.tanh %109 : vector<8x128xf32>
    %111 = arith.mulf %107, %88 : vector<8x128xf32>
    %112 = arith.mulf %106, %110 : vector<8x128xf32>
    %113 = arith.addf %111, %112 : vector<8x128xf32>
    %114 = math.tanh %113 : vector<8x128xf32>
    %115 = arith.mulf %108, %114 : vector<8x128xf32>
    %116 = arith.index_cast %94 : i32 to index
    %c0_38 = arith.constant 0 : index
    %117 = vector.load %arg13[%116, %c0_38] : memref<64x128xf32, #tpu.memory_space<vmem>>, vector<8x128xf32>
    tpu.vector_store %arg13[%116, %c0_38], %115 {strides = array<i32>} : memref<64x128xf32, #tpu.memory_space<vmem>>, vector<8x128xf32>,
    %c4_i32 = arith.constant 4 : i32
    %c8_i32_39 = arith.constant 8 : i32
    %118 = arith.muli %c4_i32, %c8_i32_39 : i32
    %119 = tpu.assume_multiple %118, 8 : i32
    %120 = arith.index_cast %119 : i32 to index
    %c0_40 = arith.constant 0 : index
    %121 = vector.load %arg12[%120, %c0_40] : memref<64x512xf32, #tpu.memory_space<vmem>>, vector<8x512xf32>
    %122 = arith.truncf %115 : vector<8x128xf32> to vector<8x128xbf16>
    %cst_41 = arith.constant dense<0.000000e+00> : vector<8x512xf32>
    %123 = tpu.matmul %122, %13, %cst_41 {dimension_numbers = #tpu.dot_dimension_numbers<[1], [0], [0], [1], [0, 0, 1, 1], [], []>} : vector<8x128xbf16>, vector<128x512xbf16>, vector<8x512xf32> -> vector<8x512xf32>
    %124 = arith.addf %121, %123 : vector<8x512xf32>
    %125 = vector.extract_strided_slice %124 {offsets = [0, 0], sizes = [8, 384], strides = [1, 1]} : vector<8x512xf32> to vector<8x384xf32>
    %126 = arith.negf %125 : vector<8x384xf32>
    %127 = math.exp %126 : vector<8x384xf32>
    %cst_42 = arith.constant 1.000000e+00 : f32
    %128 = vector.broadcast %cst_42 : f32 to vector<8x384xf32>
    %129 = arith.addf %128, %127 : vector<8x384xf32>
    %130 = arith.divf %128, %129 : vector<8x384xf32>
    %131 = vector.extract_strided_slice %130 {offsets = [0, 0], sizes = [8, 128], strides = [1, 1]} : vector<8x384xf32> to vector<8x128xf32>
    %132 = vector.extract_strided_slice %130 {offsets = [0, 128], sizes = [8, 128], strides = [1, 1]} : vector<8x384xf32> to vector<8x128xf32>
    %133 = vector.extract_strided_slice %130 {offsets = [0, 256], sizes = [8, 128], strides = [1, 1]} : vector<8x384xf32> to vector<8x128xf32>
    %134 = vector.extract_strided_slice %124 {offsets = [0, 384], sizes = [8, 128], strides = [1, 1]} : vector<8x512xf32> to vector<8x128xf32>
    %135 = math.tanh %134 : vector<8x128xf32>
    %136 = arith.mulf %132, %113 : vector<8x128xf32>
    %137 = arith.mulf %131, %135 : vector<8x128xf32>
    %138 = arith.addf %136, %137 : vector<8x128xf32>
    %139 = math.tanh %138 : vector<8x128xf32>
    %140 = arith.mulf %133, %139 : vector<8x128xf32>
    %141 = arith.index_cast %119 : i32 to index
    %c0_43 = arith.constant 0 : index
    %142 = vector.load %arg13[%141, %c0_43] : memref<64x128xf32, #tpu.memory_space<vmem>>, vector<8x128xf32>
    tpu.vector_store %arg13[%141, %c0_43], %140 {strides = array<i32>} : memref<64x128xf32, #tpu.memory_space<vmem>>, vector<8x128xf32>,
    %c5_i32 = arith.constant 5 : i32
    %c8_i32_44 = arith.constant 8 : i32
    %143 = arith.muli %c5_i32, %c8_i32_44 : i32
    %144 = tpu.assume_multiple %143, 8 : i32
    %145 = arith.index_cast %144 : i32 to index
    %c0_45 = arith.constant 0 : index
    %146 = vector.load %arg12[%145, %c0_45] : memref<64x512xf32, #tpu.memory_space<vmem>>, vector<8x512xf32>
    %147 = arith.truncf %140 : vector<8x128xf32> to vector<8x128xbf16>
    %cst_46 = arith.constant dense<0.000000e+00> : vector<8x512xf32>
    %148 = tpu.matmul %147, %13, %cst_46 {dimension_numbers = #tpu.dot_dimension_numbers<[1], [0], [0], [1], [0, 0, 1, 1], [], []>} : vector<8x128xbf16>, vector<128x512xbf16>, vector<8x512xf32> -> vector<8x512xf32>
    %149 = arith.addf %146, %148 : vector<8x512xf32>
    %150 = vector.extract_strided_slice %149 {offsets = [0, 0], sizes = [8, 384], strides = [1, 1]} : vector<8x512xf32> to vector<8x384xf32>
    %151 = arith.negf %150 : vector<8x384xf32>
    %152 = math.exp %151 : vector<8x384xf32>
    %cst_47 = arith.constant 1.000000e+00 : f32
    %153 = vector.broadcast %cst_47 : f32 to vector<8x384xf32>
    %154 = arith.addf %153, %152 : vector<8x384xf32>
    %155 = arith.divf %153, %154 : vector<8x384xf32>
    %156 = vector.extract_strided_slice %155 {offsets = [0, 0], sizes = [8, 128], strides = [1, 1]} : vector<8x384xf32> to vector<8x128xf32>
    %157 = vector.extract_strided_slice %155 {offsets = [0, 128], sizes = [8, 128], strides = [1, 1]} : vector<8x384xf32> to vector<8x128xf32>
    %158 = vector.extract_strided_slice %155 {offsets = [0, 256], sizes = [8, 128], strides = [1, 1]} : vector<8x384xf32> to vector<8x128xf32>
    %159 = vector.extract_strided_slice %149 {offsets = [0, 384], sizes = [8, 128], strides = [1, 1]} : vector<8x512xf32> to vector<8x128xf32>
    %160 = math.tanh %159 : vector<8x128xf32>
    %161 = arith.mulf %157, %138 : vector<8x128xf32>
    %162 = arith.mulf %156, %160 : vector<8x128xf32>
    %163 = arith.addf %161, %162 : vector<8x128xf32>
    %164 = math.tanh %163 : vector<8x128xf32>
    %165 = arith.mulf %158, %164 : vector<8x128xf32>
    %166 = arith.index_cast %144 : i32 to index
    %c0_48 = arith.constant 0 : index
    %167 = vector.load %arg13[%166, %c0_48] : memref<64x128xf32, #tpu.memory_space<vmem>>, vector<8x128xf32>
    tpu.vector_store %arg13[%166, %c0_48], %165 {strides = array<i32>} : memref<64x128xf32, #tpu.memory_space<vmem>>, vector<8x128xf32>,
    %c6_i32 = arith.constant 6 : i32
    %c8_i32_49 = arith.constant 8 : i32
    %168 = arith.muli %c6_i32, %c8_i32_49 : i32
    %169 = tpu.assume_multiple %168, 8 : i32
    %170 = arith.index_cast %169 : i32 to index
    %c0_50 = arith.constant 0 : index
    %171 = vector.load %arg12[%170, %c0_50] : memref<64x512xf32, #tpu.memory_space<vmem>>, vector<8x512xf32>
    %172 = arith.truncf %165 : vector<8x128xf32> to vector<8x128xbf16>
    %cst_51 = arith.constant dense<0.000000e+00> : vector<8x512xf32>
    %173 = tpu.matmul %172, %13, %cst_51 {dimension_numbers = #tpu.dot_dimension_numbers<[1], [0], [0], [1], [0, 0, 1, 1], [], []>} : vector<8x128xbf16>, vector<128x512xbf16>, vector<8x512xf32> -> vector<8x512xf32>
    %174 = arith.addf %171, %173 : vector<8x512xf32>
    %175 = vector.extract_strided_slice %174 {offsets = [0, 0], sizes = [8, 384], strides = [1, 1]} : vector<8x512xf32> to vector<8x384xf32>
    %176 = arith.negf %175 : vector<8x384xf32>
    %177 = math.exp %176 : vector<8x384xf32>
    %cst_52 = arith.constant 1.000000e+00 : f32
    %178 = vector.broadcast %cst_52 : f32 to vector<8x384xf32>
    %179 = arith.addf %178, %177 : vector<8x384xf32>
    %180 = arith.divf %178, %179 : vector<8x384xf32>
    %181 = vector.extract_strided_slice %180 {offsets = [0, 0], sizes = [8, 128], strides = [1, 1]} : vector<8x384xf32> to vector<8x128xf32>
    %182 = vector.extract_strided_slice %180 {offsets = [0, 128], sizes = [8, 128], strides = [1, 1]} : vector<8x384xf32> to vector<8x128xf32>
    %183 = vector.extract_strided_slice %180 {offsets = [0, 256], sizes = [8, 128], strides = [1, 1]} : vector<8x384xf32> to vector<8x128xf32>
    %184 = vector.extract_strided_slice %174 {offsets = [0, 384], sizes = [8, 128], strides = [1, 1]} : vector<8x512xf32> to vector<8x128xf32>
    %185 = math.tanh %184 : vector<8x128xf32>
    %186 = arith.mulf %182, %163 : vector<8x128xf32>
    %187 = arith.mulf %181, %185 : vector<8x128xf32>
    %188 = arith.addf %186, %187 : vector<8x128xf32>
    %189 = math.tanh %188 : vector<8x128xf32>
    %190 = arith.mulf %183, %189 : vector<8x128xf32>
    %191 = arith.index_cast %169 : i32 to index
    %c0_53 = arith.constant 0 : index
    %192 = vector.load %arg13[%191, %c0_53] : memref<64x128xf32, #tpu.memory_space<vmem>>, vector<8x128xf32>
    tpu.vector_store %arg13[%191, %c0_53], %190 {strides = array<i32>} : memref<64x128xf32, #tpu.memory_space<vmem>>, vector<8x128xf32>,
    %c7_i32 = arith.constant 7 : i32
    %c8_i32_54 = arith.constant 8 : i32
    %193 = arith.muli %c7_i32, %c8_i32_54 : i32
    %194 = tpu.assume_multiple %193, 8 : i32
    %195 = arith.index_cast %194 : i32 to index
    %c0_55 = arith.constant 0 : index
    %196 = vector.load %arg12[%195, %c0_55] : memref<64x512xf32, #tpu.memory_space<vmem>>, vector<8x512xf32>
    %197 = arith.truncf %190 : vector<8x128xf32> to vector<8x128xbf16>
    %cst_56 = arith.constant dense<0.000000e+00> : vector<8x512xf32>
    %198 = tpu.matmul %197, %13, %cst_56 {dimension_numbers = #tpu.dot_dimension_numbers<[1], [0], [0], [1], [0, 0, 1, 1], [], []>} : vector<8x128xbf16>, vector<128x512xbf16>, vector<8x512xf32> -> vector<8x512xf32>
    %199 = arith.addf %196, %198 : vector<8x512xf32>
    %200 = vector.extract_strided_slice %199 {offsets = [0, 0], sizes = [8, 384], strides = [1, 1]} : vector<8x512xf32> to vector<8x384xf32>
    %201 = arith.negf %200 : vector<8x384xf32>
    %202 = math.exp %201 : vector<8x384xf32>
    %cst_57 = arith.constant 1.000000e+00 : f32
    %203 = vector.broadcast %cst_57 : f32 to vector<8x384xf32>
    %204 = arith.addf %203, %202 : vector<8x384xf32>
    %205 = arith.divf %203, %204 : vector<8x384xf32>
    %206 = vector.extract_strided_slice %205 {offsets = [0, 0], sizes = [8, 128], strides = [1, 1]} : vector<8x384xf32> to vector<8x128xf32>
    %207 = vector.extract_strided_slice %205 {offsets = [0, 128], sizes = [8, 128], strides = [1, 1]} : vector<8x384xf32> to vector<8x128xf32>
    %208 = vector.extract_strided_slice %205 {offsets = [0, 256], sizes = [8, 128], strides = [1, 1]} : vector<8x384xf32> to vector<8x128xf32>
    %209 = vector.extract_strided_slice %199 {offsets = [0, 384], sizes = [8, 128], strides = [1, 1]} : vector<8x512xf32> to vector<8x128xf32>
    %210 = math.tanh %209 : vector<8x128xf32>
    %211 = arith.mulf %207, %188 : vector<8x128xf32>
    %212 = arith.mulf %206, %210 : vector<8x128xf32>
    %213 = arith.addf %211, %212 : vector<8x128xf32>
    %214 = math.tanh %213 : vector<8x128xf32>
    %215 = arith.mulf %208, %214 : vector<8x128xf32>
    %216 = arith.index_cast %194 : i32 to index
    %c0_58 = arith.constant 0 : index
    %217 = vector.load %arg13[%216, %c0_58] : memref<64x128xf32, #tpu.memory_space<vmem>>, vector<8x128xf32>
    tpu.vector_store %arg13[%216, %c0_58], %215 {strides = array<i32>} : memref<64x128xf32, #tpu.memory_space<vmem>>, vector<8x128xf32>,
    %c8_i32_59 = arith.constant 8 : i32
    %c0_60 = arith.constant 0 : index
    %c0_61 = arith.constant 0 : index
    %c0_62 = arith.constant 0 : index
    %218 = vector.load %arg14[%c0_60, %c0_61, %c0_62] : memref<2x8x128xf32, #tpu.memory_space<vmem>>, vector<1x8x128xf32>
    %219 = vector.shape_cast %218 : vector<1x8x128xf32> to vector<8x128xf32>
    %220 = vector.shape_cast %215 : vector<8x128xf32> to vector<1x8x128xf32>
    tpu.vector_store %arg14[%c0_60, %c0_61, %c0_62], %220 {strides = array<i32>} : memref<2x8x128xf32, #tpu.memory_space<vmem>>, vector<1x8x128xf32>,
    %c0_63 = arith.constant 0 : index
    %c0_64 = arith.constant 0 : index
    %c0_65 = arith.constant 0 : index
    %221 = vector.load %arg15[%c0_63, %c0_64, %c0_65] : memref<2x8x128xf32, #tpu.memory_space<vmem>>, vector<1x8x128xf32>
    %222 = vector.shape_cast %221 : vector<1x8x128xf32> to vector<8x128xf32>
    %223 = vector.shape_cast %213 : vector<8x128xf32> to vector<1x8x128xf32>
    tpu.vector_store %arg15[%c0_63, %c0_64, %c0_65], %223 {strides = array<i32>} : memref<2x8x128xf32, #tpu.memory_space<vmem>>, vector<1x8x128xf32>,
    %c0_66 = arith.constant 0 : index
    %c0_67 = arith.constant 0 : index
    %224 = vector.load %arg13[%c0_66, %c0_67] : memref<64x128xf32, #tpu.memory_space<vmem>>, vector<64x128xf32>
    %225 = arith.truncf %224 : vector<64x128xf32> to vector<64x128xbf16>
    %c0_68 = arith.constant 0 : index
    %c0_69 = arith.constant 0 : index
    %c0_70 = arith.constant 0 : index
    %226 = vector.load %arg4[%c0_68, %c0_69, %c0_70] : memref<1x128x512xbf16, #tpu.memory_space<vmem>>, vector<1x128x512xbf16>
    %227 = vector.shape_cast %226 : vector<1x128x512xbf16> to vector<128x512xbf16>
    %cst_71 = arith.constant dense<0.000000e+00> : vector<64x512xf32>
    %228 = tpu.matmul %225, %227, %cst_71 {dimension_numbers = #tpu.dot_dimension_numbers<[1], [0], [0], [1], [0, 0, 1, 1], [], []>} : vector<64x128xbf16>, vector<128x512xbf16>, vector<64x512xf32> -> vector<64x512xf32>
    %c1 = arith.constant 1 : index
    %c0_72 = arith.constant 0 : index
    %c0_73 = arith.constant 0 : index
    %229 = vector.load %arg6[%c1, %c0_72, %c0_73] : memref<2x1x512xf32, #tpu.memory_space<vmem>>, vector<1x1x512xf32>
    %230 = vector.shape_cast %229 : vector<1x1x512xf32> to vector<1x512xf32>
    %231 = vector.broadcast %230 : vector<1x512xf32> to vector<64x512xf32>
    %232 = arith.addf %228, %231 : vector<64x512xf32>
    %c0_74 = arith.constant 0 : index
    %c0_75 = arith.constant 0 : index
    %233 = vector.load %arg12[%c0_74, %c0_75] : memref<64x512xf32, #tpu.memory_space<vmem>>, vector<64x512xf32>
    tpu.vector_store %arg12[%c0_74, %c0_75], %232 {strides = array<i32>} : memref<64x512xf32, #tpu.memory_space<vmem>>, vector<64x512xf32>,
    %c1_76 = arith.constant 1 : index
    %c0_77 = arith.constant 0 : index
    %c0_78 = arith.constant 0 : index
    %234 = vector.load %arg5[%c1_76, %c0_77, %c0_78] : memref<2x128x512xbf16, #tpu.memory_space<vmem>>, vector<1x128x512xbf16>
    %235 = vector.shape_cast %234 : vector<1x128x512xbf16> to vector<128x512xbf16>
    %c1_79 = arith.constant 1 : index
    %c0_80 = arith.constant 0 : index
    %c0_81 = arith.constant 0 : index
    %236 = vector.load %arg14[%c1_79, %c0_80, %c0_81] : memref<2x8x128xf32, #tpu.memory_space<vmem>>, vector<1x8x128xf32>
    %237 = vector.shape_cast %236 : vector<1x8x128xf32> to vector<8x128xf32>
    %c1_82 = arith.constant 1 : index
    %c0_83 = arith.constant 0 : index
    %c0_84 = arith.constant 0 : index
    %238 = vector.load %arg15[%c1_82, %c0_83, %c0_84] : memref<2x8x128xf32, #tpu.memory_space<vmem>>, vector<1x8x128xf32>
    %239 = vector.shape_cast %238 : vector<1x8x128xf32> to vector<8x128xf32>
    %c0_i32_85 = arith.constant 0 : i32
    %c8_i32_86 = arith.constant 8 : i32
    %240 = arith.muli %c0_i32_85, %c8_i32_86 : i32
    %241 = tpu.assume_multiple %240, 8 : i32
    %242 = arith.index_cast %241 : i32 to index
    %c0_87 = arith.constant 0 : index
    %243 = vector.load %arg12[%242, %c0_87] : memref<64x512xf32, #tpu.memory_space<vmem>>, vector<8x512xf32>
    %244 = arith.truncf %237 : vector<8x128xf32> to vector<8x128xbf16>
    %cst_88 = arith.constant dense<0.000000e+00> : vector<8x512xf32>
    %245 = tpu.matmul %244, %235, %cst_88 {dimension_numbers = #tpu.dot_dimension_numbers<[1], [0], [0], [1], [0, 0, 1, 1], [], []>} : vector<8x128xbf16>, vector<128x512xbf16>, vector<8x512xf32> -> vector<8x512xf32>
    %246 = arith.addf %243, %245 : vector<8x512xf32>
    %247 = vector.extract_strided_slice %246 {offsets = [0, 0], sizes = [8, 384], strides = [1, 1]} : vector<8x512xf32> to vector<8x384xf32>
    %248 = arith.negf %247 : vector<8x384xf32>
    %249 = math.exp %248 : vector<8x384xf32>
    %cst_89 = arith.constant 1.000000e+00 : f32
    %250 = vector.broadcast %cst_89 : f32 to vector<8x384xf32>
    %251 = arith.addf %250, %249 : vector<8x384xf32>
    %252 = arith.divf %250, %251 : vector<8x384xf32>
    %253 = vector.extract_strided_slice %252 {offsets = [0, 0], sizes = [8, 128], strides = [1, 1]} : vector<8x384xf32> to vector<8x128xf32>
    %254 = vector.extract_strided_slice %252 {offsets = [0, 128], sizes = [8, 128], strides = [1, 1]} : vector<8x384xf32> to vector<8x128xf32>
    %255 = vector.extract_strided_slice %252 {offsets = [0, 256], sizes = [8, 128], strides = [1, 1]} : vector<8x384xf32> to vector<8x128xf32>
    %256 = vector.extract_strided_slice %246 {offsets = [0, 384], sizes = [8, 128], strides = [1, 1]} : vector<8x512xf32> to vector<8x128xf32>
    %257 = math.tanh %256 : vector<8x128xf32>
    %258 = arith.mulf %254, %239 : vector<8x128xf32>
    %259 = arith.mulf %253, %257 : vector<8x128xf32>
    %260 = arith.addf %258, %259 : vector<8x128xf32>
    %261 = math.tanh %260 : vector<8x128xf32>
    %262 = arith.mulf %255, %261 : vector<8x128xf32>
    %c1_i32_90 = arith.constant 1 : i32
    %c8_i32_91 = arith.constant 8 : i32
    %263 = arith.muli %c1_i32_90, %c8_i32_91 : i32
    %264 = tpu.assume_multiple %263, 8 : i32
    %265 = arith.index_cast %264 : i32 to index
    %c0_92 = arith.constant 0 : index
    %266 = vector.load %arg12[%265, %c0_92] : memref<64x512xf32, #tpu.memory_space<vmem>>, vector<8x512xf32>
    %267 = arith.truncf %262 : vector<8x128xf32> to vector<8x128xbf16>
    %cst_93 = arith.constant dense<0.000000e+00> : vector<8x512xf32>
    %268 = tpu.matmul %267, %235, %cst_93 {dimension_numbers = #tpu.dot_dimension_numbers<[1], [0], [0], [1], [0, 0, 1, 1], [], []>} : vector<8x128xbf16>, vector<128x512xbf16>, vector<8x512xf32> -> vector<8x512xf32>
    %269 = arith.addf %266, %268 : vector<8x512xf32>
    %270 = vector.extract_strided_slice %269 {offsets = [0, 0], sizes = [8, 384], strides = [1, 1]} : vector<8x512xf32> to vector<8x384xf32>
    %271 = arith.negf %270 : vector<8x384xf32>
    %272 = math.exp %271 : vector<8x384xf32>
    %cst_94 = arith.constant 1.000000e+00 : f32
    %273 = vector.broadcast %cst_94 : f32 to vector<8x384xf32>
    %274 = arith.addf %273, %272 : vector<8x384xf32>
    %275 = arith.divf %273, %274 : vector<8x384xf32>
    %276 = vector.extract_strided_slice %275 {offsets = [0, 0], sizes = [8, 128], strides = [1, 1]} : vector<8x384xf32> to vector<8x128xf32>
    %277 = vector.extract_strided_slice %275 {offsets = [0, 128], sizes = [8, 128], strides = [1, 1]} : vector<8x384xf32> to vector<8x128xf32>
    %278 = vector.extract_strided_slice %275 {offsets = [0, 256], sizes = [8, 128], strides = [1, 1]} : vector<8x384xf32> to vector<8x128xf32>
    %279 = vector.extract_strided_slice %269 {offsets = [0, 384], sizes = [8, 128], strides = [1, 1]} : vector<8x512xf32> to vector<8x128xf32>
    %280 = math.tanh %279 : vector<8x128xf32>
    %281 = arith.mulf %277, %260 : vector<8x128xf32>
    %282 = arith.mulf %276, %280 : vector<8x128xf32>
    %283 = arith.addf %281, %282 : vector<8x128xf32>
    %284 = math.tanh %283 : vector<8x128xf32>
    %285 = arith.mulf %278, %284 : vector<8x128xf32>
    %c2_i32_95 = arith.constant 2 : i32
    %c8_i32_96 = arith.constant 8 : i32
    %286 = arith.muli %c2_i32_95, %c8_i32_96 : i32
    %287 = tpu.assume_multiple %286, 8 : i32
    %288 = arith.index_cast %287 : i32 to index
    %c0_97 = arith.constant 0 : index
    %289 = vector.load %arg12[%288, %c0_97] : memref<64x512xf32, #tpu.memory_space<vmem>>, vector<8x512xf32>
    %290 = arith.truncf %285 : vector<8x128xf32> to vector<8x128xbf16>
    %cst_98 = arith.constant dense<0.000000e+00> : vector<8x512xf32>
    %291 = tpu.matmul %290, %235, %cst_98 {dimension_numbers = #tpu.dot_dimension_numbers<[1], [0], [0], [1], [0, 0, 1, 1], [], []>} : vector<8x128xbf16>, vector<128x512xbf16>, vector<8x512xf32> -> vector<8x512xf32>
    %292 = arith.addf %289, %291 : vector<8x512xf32>
    %293 = vector.extract_strided_slice %292 {offsets = [0, 0], sizes = [8, 384], strides = [1, 1]} : vector<8x512xf32> to vector<8x384xf32>
    %294 = arith.negf %293 : vector<8x384xf32>
    %295 = math.exp %294 : vector<8x384xf32>
    %cst_99 = arith.constant 1.000000e+00 : f32
    %296 = vector.broadcast %cst_99 : f32 to vector<8x384xf32>
    %297 = arith.addf %296, %295 : vector<8x384xf32>
    %298 = arith.divf %296, %297 : vector<8x384xf32>
    %299 = vector.extract_strided_slice %298 {offsets = [0, 0], sizes = [8, 128], strides = [1, 1]} : vector<8x384xf32> to vector<8x128xf32>
    %300 = vector.extract_strided_slice %298 {offsets = [0, 128], sizes = [8, 128], strides = [1, 1]} : vector<8x384xf32> to vector<8x128xf32>
    %301 = vector.extract_strided_slice %298 {offsets = [0, 256], sizes = [8, 128], strides = [1, 1]} : vector<8x384xf32> to vector<8x128xf32>
    %302 = vector.extract_strided_slice %292 {offsets = [0, 384], sizes = [8, 128], strides = [1, 1]} : vector<8x512xf32> to vector<8x128xf32>
    %303 = math.tanh %302 : vector<8x128xf32>
    %304 = arith.mulf %300, %283 : vector<8x128xf32>
    %305 = arith.mulf %299, %303 : vector<8x128xf32>
    %306 = arith.addf %304, %305 : vector<8x128xf32>
    %307 = math.tanh %306 : vector<8x128xf32>
    %308 = arith.mulf %301, %307 : vector<8x128xf32>
    %c3_i32_100 = arith.constant 3 : i32
    %c8_i32_101 = arith.constant 8 : i32
    %309 = arith.muli %c3_i32_100, %c8_i32_101 : i32
    %310 = tpu.assume_multiple %309, 8 : i32
    %311 = arith.index_cast %310 : i32 to index
    %c0_102 = arith.constant 0 : index
    %312 = vector.load %arg12[%311, %c0_102] : memref<64x512xf32, #tpu.memory_space<vmem>>, vector<8x512xf32>
    %313 = arith.truncf %308 : vector<8x128xf32> to vector<8x128xbf16>
    %cst_103 = arith.constant dense<0.000000e+00> : vector<8x512xf32>
    %314 = tpu.matmul %313, %235, %cst_103 {dimension_numbers = #tpu.dot_dimension_numbers<[1], [0], [0], [1], [0, 0, 1, 1], [], []>} : vector<8x128xbf16>, vector<128x512xbf16>, vector<8x512xf32> -> vector<8x512xf32>
    %315 = arith.addf %312, %314 : vector<8x512xf32>
    %316 = vector.extract_strided_slice %315 {offsets = [0, 0], sizes = [8, 384], strides = [1, 1]} : vector<8x512xf32> to vector<8x384xf32>
    %317 = arith.negf %316 : vector<8x384xf32>
    %318 = math.exp %317 : vector<8x384xf32>
    %cst_104 = arith.constant 1.000000e+00 : f32
    %319 = vector.broadcast %cst_104 : f32 to vector<8x384xf32>
    %320 = arith.addf %319, %318 : vector<8x384xf32>
    %321 = arith.divf %319, %320 : vector<8x384xf32>
    %322 = vector.extract_strided_slice %321 {offsets = [0, 0], sizes = [8, 128], strides = [1, 1]} : vector<8x384xf32> to vector<8x128xf32>
    %323 = vector.extract_strided_slice %321 {offsets = [0, 128], sizes = [8, 128], strides = [1, 1]} : vector<8x384xf32> to vector<8x128xf32>
    %324 = vector.extract_strided_slice %321 {offsets = [0, 256], sizes = [8, 128], strides = [1, 1]} : vector<8x384xf32> to vector<8x128xf32>
    %325 = vector.extract_strided_slice %315 {offsets = [0, 384], sizes = [8, 128], strides = [1, 1]} : vector<8x512xf32> to vector<8x128xf32>
    %326 = math.tanh %325 : vector<8x128xf32>
    %327 = arith.mulf %323, %306 : vector<8x128xf32>
    %328 = arith.mulf %322, %326 : vector<8x128xf32>
    %329 = arith.addf %327, %328 : vector<8x128xf32>
    %330 = math.tanh %329 : vector<8x128xf32>
    %331 = arith.mulf %324, %330 : vector<8x128xf32>
    %c4_i32_105 = arith.constant 4 : i32
    %c8_i32_106 = arith.constant 8 : i32
    %332 = arith.muli %c4_i32_105, %c8_i32_106 : i32
    %333 = tpu.assume_multiple %332, 8 : i32
    %334 = arith.index_cast %333 : i32 to index
    %c0_107 = arith.constant 0 : index
    %335 = vector.load %arg12[%334, %c0_107] : memref<64x512xf32, #tpu.memory_space<vmem>>, vector<8x512xf32>
    %336 = arith.truncf %331 : vector<8x128xf32> to vector<8x128xbf16>
    %cst_108 = arith.constant dense<0.000000e+00> : vector<8x512xf32>
    %337 = tpu.matmul %336, %235, %cst_108 {dimension_numbers = #tpu.dot_dimension_numbers<[1], [0], [0], [1], [0, 0, 1, 1], [], []>} : vector<8x128xbf16>, vector<128x512xbf16>, vector<8x512xf32> -> vector<8x512xf32>
    %338 = arith.addf %335, %337 : vector<8x512xf32>
    %339 = vector.extract_strided_slice %338 {offsets = [0, 0], sizes = [8, 384], strides = [1, 1]} : vector<8x512xf32> to vector<8x384xf32>
    %340 = arith.negf %339 : vector<8x384xf32>
    %341 = math.exp %340 : vector<8x384xf32>
    %cst_109 = arith.constant 1.000000e+00 : f32
    %342 = vector.broadcast %cst_109 : f32 to vector<8x384xf32>
    %343 = arith.addf %342, %341 : vector<8x384xf32>
    %344 = arith.divf %342, %343 : vector<8x384xf32>
    %345 = vector.extract_strided_slice %344 {offsets = [0, 0], sizes = [8, 128], strides = [1, 1]} : vector<8x384xf32> to vector<8x128xf32>
    %346 = vector.extract_strided_slice %344 {offsets = [0, 128], sizes = [8, 128], strides = [1, 1]} : vector<8x384xf32> to vector<8x128xf32>
    %347 = vector.extract_strided_slice %344 {offsets = [0, 256], sizes = [8, 128], strides = [1, 1]} : vector<8x384xf32> to vector<8x128xf32>
    %348 = vector.extract_strided_slice %338 {offsets = [0, 384], sizes = [8, 128], strides = [1, 1]} : vector<8x512xf32> to vector<8x128xf32>
    %349 = math.tanh %348 : vector<8x128xf32>
    %350 = arith.mulf %346, %329 : vector<8x128xf32>
    %351 = arith.mulf %345, %349 : vector<8x128xf32>
    %352 = arith.addf %350, %351 : vector<8x128xf32>
    %353 = math.tanh %352 : vector<8x128xf32>
    %354 = arith.mulf %347, %353 : vector<8x128xf32>
    %c5_i32_110 = arith.constant 5 : i32
    %c8_i32_111 = arith.constant 8 : i32
    %355 = arith.muli %c5_i32_110, %c8_i32_111 : i32
    %356 = tpu.assume_multiple %355, 8 : i32
    %357 = arith.index_cast %356 : i32 to index
    %c0_112 = arith.constant 0 : index
    %358 = vector.load %arg12[%357, %c0_112] : memref<64x512xf32, #tpu.memory_space<vmem>>, vector<8x512xf32>
    %359 = arith.truncf %354 : vector<8x128xf32> to vector<8x128xbf16>
    %cst_113 = arith.constant dense<0.000000e+00> : vector<8x512xf32>
    %360 = tpu.matmul %359, %235, %cst_113 {dimension_numbers = #tpu.dot_dimension_numbers<[1], [0], [0], [1], [0, 0, 1, 1], [], []>} : vector<8x128xbf16>, vector<128x512xbf16>, vector<8x512xf32> -> vector<8x512xf32>
    %361 = arith.addf %358, %360 : vector<8x512xf32>
    %362 = vector.extract_strided_slice %361 {offsets = [0, 0], sizes = [8, 384], strides = [1, 1]} : vector<8x512xf32> to vector<8x384xf32>
    %363 = arith.negf %362 : vector<8x384xf32>
    %364 = math.exp %363 : vector<8x384xf32>
    %cst_114 = arith.constant 1.000000e+00 : f32
    %365 = vector.broadcast %cst_114 : f32 to vector<8x384xf32>
    %366 = arith.addf %365, %364 : vector<8x384xf32>
    %367 = arith.divf %365, %366 : vector<8x384xf32>
    %368 = vector.extract_strided_slice %367 {offsets = [0, 0], sizes = [8, 128], strides = [1, 1]} : vector<8x384xf32> to vector<8x128xf32>
    %369 = vector.extract_strided_slice %367 {offsets = [0, 128], sizes = [8, 128], strides = [1, 1]} : vector<8x384xf32> to vector<8x128xf32>
    %370 = vector.extract_strided_slice %367 {offsets = [0, 256], sizes = [8, 128], strides = [1, 1]} : vector<8x384xf32> to vector<8x128xf32>
    %371 = vector.extract_strided_slice %361 {offsets = [0, 384], sizes = [8, 128], strides = [1, 1]} : vector<8x512xf32> to vector<8x128xf32>
    %372 = math.tanh %371 : vector<8x128xf32>
    %373 = arith.mulf %369, %352 : vector<8x128xf32>
    %374 = arith.mulf %368, %372 : vector<8x128xf32>
    %375 = arith.addf %373, %374 : vector<8x128xf32>
    %376 = math.tanh %375 : vector<8x128xf32>
    %377 = arith.mulf %370, %376 : vector<8x128xf32>
    %c6_i32_115 = arith.constant 6 : i32
    %c8_i32_116 = arith.constant 8 : i32
    %378 = arith.muli %c6_i32_115, %c8_i32_116 : i32
    %379 = tpu.assume_multiple %378, 8 : i32
    %380 = arith.index_cast %379 : i32 to index
    %c0_117 = arith.constant 0 : index
    %381 = vector.load %arg12[%380, %c0_117] : memref<64x512xf32, #tpu.memory_space<vmem>>, vector<8x512xf32>
    %382 = arith.truncf %377 : vector<8x128xf32> to vector<8x128xbf16>
    %cst_118 = arith.constant dense<0.000000e+00> : vector<8x512xf32>
    %383 = tpu.matmul %382, %235, %cst_118 {dimension_numbers = #tpu.dot_dimension_numbers<[1], [0], [0], [1], [0, 0, 1, 1], [], []>} : vector<8x128xbf16>, vector<128x512xbf16>, vector<8x512xf32> -> vector<8x512xf32>
    %384 = arith.addf %381, %383 : vector<8x512xf32>
    %385 = vector.extract_strided_slice %384 {offsets = [0, 0], sizes = [8, 384], strides = [1, 1]} : vector<8x512xf32> to vector<8x384xf32>
    %386 = arith.negf %385 : vector<8x384xf32>
    %387 = math.exp %386 : vector<8x384xf32>
    %cst_119 = arith.constant 1.000000e+00 : f32
    %388 = vector.broadcast %cst_119 : f32 to vector<8x384xf32>
    %389 = arith.addf %388, %387 : vector<8x384xf32>
    %390 = arith.divf %388, %389 : vector<8x384xf32>
    %391 = vector.extract_strided_slice %390 {offsets = [0, 0], sizes = [8, 128], strides = [1, 1]} : vector<8x384xf32> to vector<8x128xf32>
    %392 = vector.extract_strided_slice %390 {offsets = [0, 128], sizes = [8, 128], strides = [1, 1]} : vector<8x384xf32> to vector<8x128xf32>
    %393 = vector.extract_strided_slice %390 {offsets = [0, 256], sizes = [8, 128], strides = [1, 1]} : vector<8x384xf32> to vector<8x128xf32>
    %394 = vector.extract_strided_slice %384 {offsets = [0, 384], sizes = [8, 128], strides = [1, 1]} : vector<8x512xf32> to vector<8x128xf32>
    %395 = math.tanh %394 : vector<8x128xf32>
    %396 = arith.mulf %392, %375 : vector<8x128xf32>
    %397 = arith.mulf %391, %395 : vector<8x128xf32>
    %398 = arith.addf %396, %397 : vector<8x128xf32>
    %399 = math.tanh %398 : vector<8x128xf32>
    %400 = arith.mulf %393, %399 : vector<8x128xf32>
    %c7_i32_120 = arith.constant 7 : i32
    %c8_i32_121 = arith.constant 8 : i32
    %401 = arith.muli %c7_i32_120, %c8_i32_121 : i32
    %402 = tpu.assume_multiple %401, 8 : i32
    %403 = arith.index_cast %402 : i32 to index
    %c0_122 = arith.constant 0 : index
    %404 = vector.load %arg12[%403, %c0_122] : memref<64x512xf32, #tpu.memory_space<vmem>>, vector<8x512xf32>
    %405 = arith.truncf %400 : vector<8x128xf32> to vector<8x128xbf16>
    %cst_123 = arith.constant dense<0.000000e+00> : vector<8x512xf32>
    %406 = tpu.matmul %405, %235, %cst_123 {dimension_numbers = #tpu.dot_dimension_numbers<[1], [0], [0], [1], [0, 0, 1, 1], [], []>} : vector<8x128xbf16>, vector<128x512xbf16>, vector<8x512xf32> -> vector<8x512xf32>
    %407 = arith.addf %404, %406 : vector<8x512xf32>
    %408 = vector.extract_strided_slice %407 {offsets = [0, 0], sizes = [8, 384], strides = [1, 1]} : vector<8x512xf32> to vector<8x384xf32>
    %409 = arith.negf %408 : vector<8x384xf32>
    %410 = math.exp %409 : vector<8x384xf32>
    %cst_124 = arith.constant 1.000000e+00 : f32
    %411 = vector.broadcast %cst_124 : f32 to vector<8x384xf32>
    %412 = arith.addf %411, %410 : vector<8x384xf32>
    %413 = arith.divf %411, %412 : vector<8x384xf32>
    %414 = vector.extract_strided_slice %413 {offsets = [0, 0], sizes = [8, 128], strides = [1, 1]} : vector<8x384xf32> to vector<8x128xf32>
    %415 = vector.extract_strided_slice %413 {offsets = [0, 128], sizes = [8, 128], strides = [1, 1]} : vector<8x384xf32> to vector<8x128xf32>
    %416 = vector.extract_strided_slice %413 {offsets = [0, 256], sizes = [8, 128], strides = [1, 1]} : vector<8x384xf32> to vector<8x128xf32>
    %417 = vector.extract_strided_slice %407 {offsets = [0, 384], sizes = [8, 128], strides = [1, 1]} : vector<8x512xf32> to vector<8x128xf32>
    %418 = math.tanh %417 : vector<8x128xf32>
    %419 = arith.mulf %415, %398 : vector<8x128xf32>
    %420 = arith.mulf %414, %418 : vector<8x128xf32>
    %421 = arith.addf %419, %420 : vector<8x128xf32>
    %422 = math.tanh %421 : vector<8x128xf32>
    %423 = arith.mulf %416, %422 : vector<8x128xf32>
    %c8_i32_125 = arith.constant 8 : i32
    %c1_126 = arith.constant 1 : index
    %c0_127 = arith.constant 0 : index
    %c0_128 = arith.constant 0 : index
    %424 = vector.load %arg14[%c1_126, %c0_127, %c0_128] : memref<2x8x128xf32, #tpu.memory_space<vmem>>, vector<1x8x128xf32>
    %425 = vector.shape_cast %424 : vector<1x8x128xf32> to vector<8x128xf32>
    %426 = vector.shape_cast %423 : vector<8x128xf32> to vector<1x8x128xf32>
    tpu.vector_store %arg14[%c1_126, %c0_127, %c0_128], %426 {strides = array<i32>} : memref<2x8x128xf32, #tpu.memory_space<vmem>>, vector<1x8x128xf32>,
    %c1_129 = arith.constant 1 : index
    %c0_130 = arith.constant 0 : index
    %c0_131 = arith.constant 0 : index
    %427 = vector.load %arg15[%c1_129, %c0_130, %c0_131] : memref<2x8x128xf32, #tpu.memory_space<vmem>>, vector<1x8x128xf32>
    %428 = vector.shape_cast %427 : vector<1x8x128xf32> to vector<8x128xf32>
    %429 = vector.shape_cast %421 : vector<8x128xf32> to vector<1x8x128xf32>
    tpu.vector_store %arg15[%c1_129, %c0_130, %c0_131], %429 {strides = array<i32>} : memref<2x8x128xf32, #tpu.memory_space<vmem>>, vector<1x8x128xf32>,
    %c0_i32_132 = arith.constant 0 : i32
    %430 = arith.cmpi eq, %arg1, %c0_i32_132 : i32
    %431 = arith.extui %430 : i1 to i32
    %c0_i32_133 = arith.constant 0 : i32
    %432 = arith.cmpi ne, %431, %c0_i32_133 : i32
    scf.if %432 {
      %433 = arith.truncf %423 : vector<8x128xf32> to vector<8x128xbf16>
      %c0_134 = arith.constant 0 : index
      %c0_135 = arith.constant 0 : index
      %434 = vector.load %arg7[%c0_134, %c0_135] : memref<128x128xbf16, #tpu.memory_space<vmem>>, vector<128x128xbf16>
      %cst_136 = arith.constant dense<0.000000e+00> : vector<8x128xf32>
      %435 = tpu.matmul %433, %434, %cst_136 {dimension_numbers = #tpu.dot_dimension_numbers<[1], [0], [0], [1], [0, 0, 1, 1], [], []>} : vector<8x128xbf16>, vector<128x128xbf16>, vector<8x128xf32> -> vector<8x128xf32>
      %c0_137 = arith.constant 0 : index
      %c0_138 = arith.constant 0 : index
      %436 = vector.load %arg8[%c0_137, %c0_138] : memref<1x128xf32, #tpu.memory_space<vmem>>, vector<1x128xf32>
      %437 = vector.broadcast %436 : vector<1x128xf32> to vector<8x128xf32>
      %438 = arith.addf %435, %437 : vector<8x128xf32>
      %cst_139 = arith.constant 0.000000e+00 : f32
      %439 = vector.broadcast %cst_139 : f32 to vector<8x128xf32>
      %440 = arith.maximumf %438, %439 : vector<8x128xf32>
      %441 = arith.truncf %440 : vector<8x128xf32> to vector<8x128xbf16>
      %c0_140 = arith.constant 0 : index
      %c0_141 = arith.constant 0 : index
      %442 = vector.load %arg9[%c0_140, %c0_141] : memref<128x128xbf16, #tpu.memory_space<vmem>>, vector<128x128xbf16>
      %cst_142 = arith.constant dense<0.000000e+00> : vector<8x128xf32>
      %443 = tpu.matmul %441, %442, %cst_142 {dimension_numbers = #tpu.dot_dimension_numbers<[1], [0], [0], [1], [0, 0, 1, 1], [], []>} : vector<8x128xbf16>, vector<128x128xbf16>, vector<8x128xf32> -> vector<8x128xf32>
      %c0_143 = arith.constant 0 : index
      %c0_144 = arith.constant 0 : index
      %444 = vector.load %arg10[%c0_143, %c0_144] : memref<1x128xf32, #tpu.memory_space<vmem>>, vector<1x128xf32>
      %445 = vector.broadcast %444 : vector<1x128xf32> to vector<8x128xf32>
      %446 = arith.addf %443, %445 : vector<8x128xf32>
      %c0_145 = arith.constant 0 : index
      %c0_146 = arith.constant 0 : index
      %447 = vector.load %arg11[%c0_145, %c0_146] : memref<8x128xf32, #tpu.memory_space<vmem>>, vector<8x128xf32>
      tpu.vector_store %arg11[%c0_145, %c0_146], %446 {strides = array<i32>} : memref<8x128xf32, #tpu.memory_space<vmem>>, vector<8x128xf32>,
    } else {
    }
    return
  }
  func.func @transform_0(%arg0: i32, %arg1: i32) -> (i32, i32, i32) {
    %c0_i32 = arith.constant 0 : i32
    %c0_i32_0 = arith.constant 0 : i32
    return %arg1, %arg0, %c0_i32 : i32, i32, i32
  }
  func.func @transform_1(%arg0: i32, %arg1: i32) -> (i32, i32) {
    %c0_i32 = arith.constant 0 : i32
    %c0_i32_0 = arith.constant 0 : i32
    %c0_i32_1 = arith.constant 0 : i32
    return %c0_i32, %c0_i32_0 : i32, i32
  }
  func.func @transform_2(%arg0: i32, %arg1: i32) -> (i32, i32, i32) {
    %c0_i32 = arith.constant 0 : i32
    %c0_i32_0 = arith.constant 0 : i32
    %c0_i32_1 = arith.constant 0 : i32
    %c0_i32_2 = arith.constant 0 : i32
    return %c0_i32, %c0_i32_0, %c0_i32_1 : i32, i32, i32
  }
  func.func @transform_3(%arg0: i32, %arg1: i32) -> (i32, i32, i32) {
    %c0_i32 = arith.constant 0 : i32
    %c0_i32_0 = arith.constant 0 : i32
    %c0_i32_1 = arith.constant 0 : i32
    %c0_i32_2 = arith.constant 0 : i32
    return %c0_i32, %c0_i32_0, %c0_i32_1 : i32, i32, i32
  }
  func.func @transform_4(%arg0: i32, %arg1: i32) -> (i32, i32, i32) {
    %c0_i32 = arith.constant 0 : i32
    %c0_i32_0 = arith.constant 0 : i32
    %c0_i32_1 = arith.constant 0 : i32
    %c0_i32_2 = arith.constant 0 : i32
    return %c0_i32, %c0_i32_0, %c0_i32_1 : i32, i32, i32
  }
  func.func @transform_5(%arg0: i32, %arg1: i32) -> (i32, i32) {
    %c0_i32 = arith.constant 0 : i32
    %c0_i32_0 = arith.constant 0 : i32
    %c0_i32_1 = arith.constant 0 : i32
    return %c0_i32, %c0_i32_0 : i32, i32
  }
  func.func @transform_6(%arg0: i32, %arg1: i32) -> (i32, i32) {
    %c0_i32 = arith.constant 0 : i32
    %c0_i32_0 = arith.constant 0 : i32
    %c0_i32_1 = arith.constant 0 : i32
    return %c0_i32, %c0_i32_0 : i32, i32
  }
  func.func @transform_7(%arg0: i32, %arg1: i32) -> (i32, i32) {
    %c0_i32 = arith.constant 0 : i32
    %c0_i32_0 = arith.constant 0 : i32
    %c0_i32_1 = arith.constant 0 : i32
    return %c0_i32, %c0_i32_0 : i32, i32
  }
  func.func @transform_8(%arg0: i32, %arg1: i32) -> (i32, i32) {
    %c0_i32 = arith.constant 0 : i32
    %c0_i32_0 = arith.constant 0 : i32
    %c0_i32_1 = arith.constant 0 : i32
    return %c0_i32, %c0_i32_0 : i32, i32
  }
  func.func @transform_9(%arg0: i32, %arg1: i32) -> (i32, i32) {
    %c0_i32 = arith.constant 0 : i32
    %c0_i32_0 = arith.constant 0 : i32
    return %arg0, %c0_i32 : i32, i32
  }
}

</mosaic_0001>

<llo_original>
// kernel: lstm_model_forward.1
$region0: #{lstm_model_forward.1}
  #allocation0 [shape = 'u32[]', space=smem, size = 0x4, offset = 0x4, fixed_abs, tag = 'smem constant byte address 0x4 - core index']
  #allocation1 [shape = 'u32[144,128]{1,0:T(1,128)}', space=vmem, size = 0x12000, scoped, tag = 'internal scratch']
  #allocation2 [shape = 'f32[64,512]{1,0:T(8,128)}', space=vmem, size = 0x20000, scoped, tag = 'scratch operand']
  #allocation3 [shape = 'f32[64,128]{1,0:T(8,128)}', space=vmem, size = 0x8000, scoped, tag = 'scratch operand']
  #allocation4 [shape = 'f32[2,8,128]{2,1,0:T(8,128)}', space=vmem, size = 0x2000, scoped, tag = 'scratch operand']
  #allocation5 [shape = 'f32[2,8,128]{2,1,0:T(8,128)}', space=vmem, size = 0x2000, scoped, tag = 'scratch operand']
  %s0 = inlined_call_operand.vmem [shape: bf16[8,8,128], index: 0, kind: input, shape index: {}]
  %s1 = inlined_call_operand.vmem [shape: bf16[128,512], index: 1, kind: input, shape index: {}]
  %s2 = inlined_call_operand.hbm [shape: bf16[1,128,512], index: 2, kind: input, shape index: {}]
  %s3 = inlined_call_operand.hbm [shape: bf16[2,128,512], index: 3, kind: input, shape index: {}]
  %s4 = inlined_call_operand.vmem [shape: f32[2,1,512], index: 4, kind: input, shape index: {}]
  %s5 = inlined_call_operand.vmem [shape: bf16[128,128], index: 5, kind: input, shape index: {}]
  %s6 = inlined_call_operand.vmem [shape: f32[1,128], index: 6, kind: input, shape index: {}]
  %s7 = inlined_call_operand.vmem [shape: bf16[128,128], index: 7, kind: input, shape index: {}]
  %s8 = inlined_call_operand.vmem [shape: f32[1,128], index: 8, kind: input, shape index: {}]
  %s9 = inlined_call_operand.vmem [shape: f32[8,128], index: 9, kind: output, shape index: {}]
  %s10 = sld [smem:[#allocation0]]
  $region62: #{lstm_model_forward.1} parent=0
    _
  %s12 = ssub.s32 1, %s10
  %s13 = scalar_select 0, %s12, %s10
  $region1: #{lstm_model_forward.1} parent=0
    #allocation6 [shape = 'u8[131072]{0}', space=vmem, size = 0x20000, scoped, tag = 'input window, operand 2, single buffered']
    #allocation7 [shape = 's32[1]{0}', space=sflag, size = 0x4, scoped, tag = 'scoped memory for lstm_model_forward.1']
    #allocation8 [shape = 'u8[262144]{0}', space=vmem, size = 0x40000, scoped, tag = 'input window, operand 3, single buffered']
    #allocation9 [shape = 's32[1]{0}', space=sflag, size = 0x4, scoped, tag = 'scoped memory for lstm_model_forward.1']
    %14 = vsyncpa [#allocation7], 0
    %15 = vsyncpa [#allocation9], 0
    // Predicated region
    $region2: #{lstm_model_forward.1} parent=1 // pred_check
      _
    $region3: #{lstm_model_forward.1} parent=1 // pred_check_branch
      %17 = sbr.rel (0) target = $region5
    $region4: #{lstm_model_forward.1} parent=1 // pred_region
      _
    $region5: #{lstm_model_forward.1} parent=1 // pred_fallthru
      _
    // Predicated region
    $region6: #{lstm_model_forward.1} parent=1 // pred_check
      _
    $region7: #{lstm_model_forward.1} parent=1 // pred_check_branch
      %19 = sbr.rel (0) target = $region9
    $region8: #{lstm_model_forward.1} parent=1 // pred_region
      _
    $region9: #{lstm_model_forward.1} parent=1 // pred_fallthru
      _
    // Predicated region
    $region10: #{lstm_model_forward.1} parent=1 // pred_check
      _
    $region11: #{lstm_model_forward.1} parent=1 // pred_check_branch
      %21 = sbr.rel (0) target = $region13
    $region12: #{lstm_model_forward.1} parent=1 // pred_region
      %s23 = ssub.s32 4096, 4096
      %24 = vsyncadd [#allocation7], %s23
      %s25 = sshll.u32 [#allocation6], 4
      %s26 = int_to_ptr.vmem [resolvable:$true] %s25
      %31 = dma.hbm_to_vmem [thread:$0]  %s2, 4096, %s26, [#allocation7], 256, 256, 16
    $region13: #{lstm_model_forward.1} parent=1 // pred_fallthru
      _
    // Predicated region
    $region14: #{lstm_model_forward.1} parent=1 // pred_check
      _
    $region15: #{lstm_model_forward.1} parent=1 // pred_check_branch
      %33 = sbr.rel (0) target = $region17
    $region16: #{lstm_model_forward.1} parent=1 // pred_region
      %s35 = ssub.s32 8192, 8192
      %36 = vsyncadd [#allocation9], %s35
      %s37 = sshll.u32 [#allocation8], 4
      %s38 = int_to_ptr.vmem [resolvable:$true] %s37
      %43 = dma.hbm_to_vmem [thread:$0]  %s3, 8192, %s38, [#allocation9], 256, 256, 16
    $region17: #{lstm_model_forward.1} parent=1 // pred_fallthru
      _
    // Predicated region
    $region18: #{lstm_model_forward.1} parent=1 // pred_check
      _
    $region19: #{lstm_model_forward.1} parent=1 // pred_check_branch
      %45 = sbr.rel (0) target = $region21
    $region20: #{lstm_model_forward.1} parent=1 // pred_region
      _
    $region21: #{lstm_model_forward.1} parent=1 // pred_fallthru
      _
    // Predicated region
    $region22: #{lstm_model_forward.1} parent=1 // pred_check
      _
    $region23: #{lstm_model_forward.1} parent=1 // pred_check_branch
      %47 = sbr.rel (0) target = $region25
    $region24: #{lstm_model_forward.1} parent=1 // pred_region
      _
    $region25: #{lstm_model_forward.1} parent=1 // pred_fallthru
      _
    // Predicated region
    $region26: #{lstm_model_forward.1} parent=1 // pred_check
      _
    $region27: #{lstm_model_forward.1} parent=1 // pred_check_branch
      %49 = sbr.rel (0) target = $region29
    $region28: #{lstm_model_forward.1} parent=1 // pred_region
      _
    $region29: #{lstm_model_forward.1} parent=1 // pred_fallthru
      _
    // Predicated region
    $region30: #{lstm_model_forward.1} parent=1 // pred_check
      _
    $region31: #{lstm_model_forward.1} parent=1 // pred_check_branch
      %51 = sbr.rel (0) target = $region33
    $region32: #{lstm_model_forward.1} parent=1 // pred_region
      _
    $region33: #{lstm_model_forward.1} parent=1 // pred_fallthru
      _
    // Predicated region
    $region34: #{lstm_model_forward.1} parent=1 // pred_check
      _
    $region35: #{lstm_model_forward.1} parent=1 // pred_check_branch
      %53 = sbr.rel (0) target = $region37
    $region36: #{lstm_model_forward.1} parent=1 // pred_region
      _
    $region37: #{lstm_model_forward.1} parent=1 // pred_fallthru
      _
    // Predicated region
    $region38: #{lstm_model_forward.1} parent=1 // pred_check
      _
    $region39: #{lstm_model_forward.1} parent=1 // pred_check_branch
      %55 = sbr.rel (0) target = $region41
    $region40: #{lstm_model_forward.1} parent=1 // pred_region
      %56 = dma.done [#allocation7], 4096
    $region41: #{lstm_model_forward.1} parent=1 // pred_fallthru
      _
    // Predicated region
    $region42: #{lstm_model_forward.1} parent=1 // pred_check
      _
    $region43: #{lstm_model_forward.1} parent=1 // pred_check_branch
      %58 = sbr.rel (0) target = $region45
    $region44: #{lstm_model_forward.1} parent=1 // pred_region
      %59 = dma.done [#allocation9], 8192
    $region45: #{lstm_model_forward.1} parent=1 // pred_fallthru
      _
    %p61 = scmp.eq.s32.totalorder 0, 0
    // Predicated region
    $region46: #{lstm_model_forward.1} parent=1 // pred_check
      %p62 = pneg %p61
    $region47: #{lstm_model_forward.1} parent=1 // pred_check_branch
      %64 = sbr.rel (%p62) target = $region49
    $region48: #{lstm_model_forward.1} parent=1 // pred_region
      %65 = vst [vmem:[#allocation4] sm:$0xff] 0.0
      %66 = vst [vmem:[#allocation4 + $0x8] sm:$0xff] 0.0
      %67 = vst [vmem:[#allocation5] sm:$0xff] 0.0
      %68 = vst [vmem:[#allocation5 + $0x8] sm:$0xff] 0.0
    $region49: #{lstm_model_forward.1} parent=1 // pred_fallthru
      _
    %v69 = vld [vmem:[%s0] sm:$0xf]
    %v70 = vld [vmem:[%s0 + $0x4] sm:$0xf]
    %v71 = vld [vmem:[%s0 + $0x8] sm:$0xf]
    %v72 = vld [vmem:[%s0 + $0xc] sm:$0xf]
    %v73 = vld [vmem:[%s0 + $0x10] sm:$0xf]
    %v74 = vld [vmem:[%s0 + $0x14] sm:$0xf]
    %v75 = vld [vmem:[%s0 + $0x18] sm:$0xf]
    %v76 = vld [vmem:[%s0 + $0x1c] sm:$0xf]
    %v77 = vld [vmem:[%s1] sm:$0xff]
    %v78 = vld [vmem:[%s1 + $0x8] sm:$0xff]
    %v79 = vld [vmem:[%s1 + $0x10] sm:$0xff]
    %v80 = vld [vmem:[%s1 + $0x18] sm:$0xff]
    %v81 = vld [vmem:[%s1 + $0x20] sm:$0xff]
    %v82 = vld [vmem:[%s1 + $0x28] sm:$0xff]
    %v83 = vld [vmem:[%s1 + $0x30] sm:$0xff]
    %v84 = vld [vmem:[%s1 + $0x38] sm:$0xff]
    %v85 = vld [vmem:[%s1 + $0x40] sm:$0xff]
    %v86 = vld [vmem:[%s1 + $0x48] sm:$0xff]
    %v87 = vld [vmem:[%s1 + $0x50] sm:$0xff]
    %v88 = vld [vmem:[%s1 + $0x58] sm:$0xff]
    %v89 = vld [vmem:[%s1 + $0x60] sm:$0xff]
    %v90 = vld [vmem:[%s1 + $0x68] sm:$0xff]
    %v91 = vld [vmem:[%s1 + $0x70] sm:$0xff]
    %v92 = vld [vmem:[%s1 + $0x78] sm:$0xff]
    %v93 = vld [vmem:[%s1 + $0x80] sm:$0xff]
    %v94 = vld [vmem:[%s1 + $0x88] sm:$0xff]
    %v95 = vld [vmem:[%s1 + $0x90] sm:$0xff]
    %v96 = vld [vmem:[%s1 + $0x98] sm:$0xff]
    %v97 = vld [vmem:[%s1 + $0xa0] sm:$0xff]
    %v98 = vld [vmem:[%s1 + $0xa8] sm:$0xff]
    %v99 = vld [vmem:[%s1 + $0xb0] sm:$0xff]
    %v100 = vld [vmem:[%s1 + $0xb8] sm:$0xff]
    %v101 = vld [vmem:[%s1 + $0xc0] sm:$0xff]
    %v102 = vld [vmem:[%s1 + $0xc8] sm:$0xff]
    %v103 = vld [vmem:[%s1 + $0xd0] sm:$0xff]
    %v104 = vld [vmem:[%s1 + $0xd8] sm:$0xff]
    %v105 = vld [vmem:[%s1 + $0xe0] sm:$0xff]
    %v106 = vld [vmem:[%s1 + $0xe8] sm:$0xff]
    %v107 = vld [vmem:[%s1 + $0xf0] sm:$0xff]
    %v108 = vld [vmem:[%s1 + $0xf8] sm:$0xff]
    %v109 = vld [vmem:[%s4] sm:$0xf]
    %v111 = vlaneseq
    %v112 = vshrl.u32 %v111, 7
    %v113 = vsub.s32 0, %v112
    %v114 = vrot.slane %v109, %v113
    %v115 = vlaneseq
    %v116 = vshrl.u32 %v115, 7
    %v117 = vsub.s32 1, %v116
    %v118 = vrot.slane %v109, %v117
    %v119 = vlaneseq
    %v120 = vshrl.u32 %v119, 7
    %v121 = vsub.s32 2, %v120
    %v122 = vrot.slane %v109, %v121
    %v123 = vlaneseq
    %v124 = vshrl.u32 %v123, 7
    %v125 = vsub.s32 3, %v124
    %v126 = vrot.slane %v109, %v125
    %v139 = vunpack.c.l.b16 %v69
    %v140 = vunpack.c.l.b16 %v70
    %v141 = vunpack.c.l.b16 %v71
    %v142 = vunpack.c.l.b16 %v72
    %v143 = vunpack.c.l.b16 %v73
    %v144 = vunpack.c.l.b16 %v74
    %v145 = vunpack.c.l.b16 %v75
    %v146 = vunpack.c.l.b16 %v76
    %v147 = vpack.c.b16 %v140, %v139
    %v148 = vpack.c.b16 %v142, %v141
    %v149 = vpack.c.b16 %v144, %v143
    %v150 = vpack.c.b16 %v146, %v145
    %v187 = vunpack.c.l.b16 %v77
    %v188 = vunpack.c.h.b16 %v77
    %v189 = vunpack.c.l.b16 %v78
    %v190 = vunpack.c.h.b16 %v78
    %v191 = vunpack.c.l.b16 %v79
    %v192 = vunpack.c.h.b16 %v79
    %v193 = vunpack.c.l.b16 %v80
    %v194 = vunpack.c.h.b16 %v80
    %v195 = vunpack.c.l.b16 %v81
    %v196 = vunpack.c.h.b16 %v81
    %v197 = vunpack.c.l.b16 %v82
    %v198 = vunpack.c.h.b16 %v82
    %v199 = vunpack.c.l.b16 %v83
    %v200 = vunpack.c.h.b16 %v83
    %v201 = vunpack.c.l.b16 %v84
    %v202 = vunpack.c.h.b16 %v84
    %v203 = vunpack.c.l.b16 %v85
    %v204 = vunpack.c.h.b16 %v85
    %v205 = vunpack.c.l.b16 %v86
    %v206 = vunpack.c.h.b16 %v86
    %v207 = vunpack.c.l.b16 %v87
    %v208 = vunpack.c.h.b16 %v87
    %v209 = vunpack.c.l.b16 %v88
    %v210 = vunpack.c.h.b16 %v88
    %v211 = vunpack.c.l.b16 %v89
    %v212 = vunpack.c.h.b16 %v89
    %v213 = vunpack.c.l.b16 %v90
    %v214 = vunpack.c.h.b16 %v90
    %v215 = vunpack.c.l.b16 %v91
    %v216 = vunpack.c.h.b16 %v91
    %v217 = vunpack.c.l.b16 %v92
    %v218 = vunpack.c.h.b16 %v92
    %v219 = vunpack.c.l.b16 %v93
    %v220 = vunpack.c.h.b16 %v93
    %v221 = vunpack.c.l.b16 %v94
    %v222 = vunpack.c.h.b16 %v94
    %v223 = vunpack.c.l.b16 %v95
    %v224 = vunpack.c.h.b16 %v95
    %v225 = vunpack.c.l.b16 %v96
    %v226 = vunpack.c.h.b16 %v96
    %v227 = vunpack.c.l.b16 %v97
    %v228 = vunpack.c.h.b16 %v97
    %v229 = vunpack.c.l.b16 %v98
    %v230 = vunpack.c.h.b16 %v98
    %v231 = vunpack.c.l.b16 %v99
    %v232 = vunpack.c.h.b16 %v99
    %v233 = vunpack.c.l.b16 %v100
    %v234 = vunpack.c.h.b16 %v100
    %v235 = vunpack.c.l.b16 %v101
    %v236 = vunpack.c.h.b16 %v101
    %v237 = vunpack.c.l.b16 %v102
    %v238 = vunpack.c.h.b16 %v102
    %v239 = vunpack.c.l.b16 %v103
    %v240 = vunpack.c.h.b16 %v103
    %v241 = vunpack.c.l.b16 %v104
    %v242 = vunpack.c.h.b16 %v104
    %v243 = vunpack.c.l.b16 %v105
    %v244 = vunpack.c.h.b16 %v105
    %v245 = vunpack.c.l.b16 %v106
    %v246 = vunpack.c.h.b16 %v106
    %v247 = vunpack.c.l.b16 %v107
    %v248 = vunpack.c.h.b16 %v107
    %v249 = vunpack.c.l.b16 %v108
    %v250 = vunpack.c.h.b16 %v108
    %v251 = vpack.c.b16 %v191, %v187
    %v252 = vpack.c.b16 %v192, %v188
    %v253 = vpack.c.b16 %v193, %v189
    %v254 = vpack.c.b16 %v194, %v190
    %v255 = vpack.c.b16 %v199, %v195
    %v256 = vpack.c.b16 %v200, %v196
    %v257 = vpack.c.b16 %v201, %v197
    %v258 = vpack.c.b16 %v202, %v198
    %v259 = vpack.c.b16 %v207, %v203
    %v260 = vpack.c.b16 %v208, %v204
    %v261 = vpack.c.b16 %v209, %v205
    %v262 = vpack.c.b16 %v210, %v206
    %v263 = vpack.c.b16 %v215, %v211
    %v264 = vpack.c.b16 %v216, %v212
    %v265 = vpack.c.b16 %v217, %v213
    %v266 = vpack.c.b16 %v218, %v214
    %v267 = vpack.c.b16 %v223, %v219
    %v268 = vpack.c.b16 %v224, %v220
    %v269 = vpack.c.b16 %v225, %v221
    %v270 = vpack.c.b16 %v226, %v222
    %v271 = vpack.c.b16 %v231, %v227
    %v272 = vpack.c.b16 %v232, %v228
    %v273 = vpack.c.b16 %v233, %v229
    %v274 = vpack.c.b16 %v234, %v230
    %v275 = vpack.c.b16 %v239, %v235
    %v276 = vpack.c.b16 %v240, %v236
    %v277 = vpack.c.b16 %v241, %v237
    %v278 = vpack.c.b16 %v242, %v238
    %v279 = vpack.c.b16 %v247, %v243
    %v280 = vpack.c.b16 %v248, %v244
    %v281 = vpack.c.b16 %v249, %v245
    %v282 = vpack.c.b16 %v250, %v246
    %315 = vmatprep.subr.bf16.mxu0 %v252
    %316 = vmatpush1.bf16.msra.mxu0 %v251
    %317 = vmatprep.subr.bf16.mxu0 %v256
    %318 = vmatpush1.bf16.msra.mxu0 %v255
    %319 = vmatprep.subr.bf16.mxu0 %v260
    %320 = vmatpush1.bf16.msra.mxu0 %v259
    %321 = vmatprep.subr.bf16.mxu0 %v264
    %322 = vmatpush1.bf16.msra.mxu0 %v263
    %323 = vmatprep.subr.bf16.mxu0 %v268
    %324 = vmatpush1.bf16.msra.mxu0 %v267
    %325 = vmatprep.subr.bf16.mxu0 %v272
    %326 = vmatpush1.bf16.msra.mxu0 %v271
    %327 = vmatprep.subr.bf16.mxu0 %v276
    %328 = vmatpush1.bf16.msra.mxu0 %v275
    %329 = vmatprep.subr.bf16.mxu0 %v280
    %330 = vmatpush1.bf16.msra.mxu0 %v279
    %331 = vmatprep.subr.bf16.mxu0 0
    %332 = vmatpush1.bf16.msra.mxu0 0
    %333 = vmatprep.subr.bf16.mxu0 0
    %334 = vmatpush1.bf16.msra.mxu0 0
    %335 = vmatprep.subr.bf16.mxu0 0
    %336 = vmatpush1.bf16.msra.mxu0 0
    %337 = vmatprep.subr.bf16.mxu0 0
    %338 = vmatpush1.bf16.msra.mxu0 0
    %339 = vmatprep.subr.bf16.mxu0 0
    %340 = vmatpush1.bf16.msra.mxu0 0
    %341 = vmatprep.subr.bf16.mxu0 0
    %342 = vmatpush1.bf16.msra.mxu0 0
    %343 = vmatprep.subr.bf16.mxu0 0
    %344 = vmatpush1.bf16.msra.mxu0 0
    %345 = vmatprep.subr.bf16.mxu0 0
    %346 = vmatpush1.bf16.msra.mxu0 0
    %347 = vmatprep.mubr.bf16.mxu0 0
    %348 = vmatmul.mubr.bf16.gmra.mrb[0].mxu0 %v147
    %v349 = vpop.f32.mrb[0].mxu0
    %v350 = vadd.f32 %v114, %v349
    %v351 = vpop.f32.mrb[0].mxu0
    %v352 = vadd.f32 %v118, %v351
    %v353 = vpop.f32.mrb[0].mxu0
    %v354 = vadd.f32 %v114, %v353
    %v355 = vpop.f32.mrb[0].mxu0
    %v356 = vadd.f32 %v118, %v355
    %357 = vmatprep.mubr.bf16.mxu0 0
    %358 = vmatmul.mubr.bf16.gmra.mrb[0].mxu0 %v148
    %v359 = vpop.f32.mrb[0].mxu0
    %v360 = vadd.f32 %v114, %v359
    %v361 = vpop.f32.mrb[0].mxu0
    %v362 = vadd.f32 %v118, %v361
    %v363 = vpop.f32.mrb[0].mxu0
    %v364 = vadd.f32 %v114, %v363
    %v365 = vpop.f32.mrb[0].mxu0
    %v366 = vadd.f32 %v118, %v365
    %367 = vmatprep.mubr.bf16.mxu0 0
    %368 = vmatmul.mubr.bf16.gmra.mrb[0].mxu0 %v149
    %v369 = vpop.f32.mrb[0].mxu0
    %v370 = vadd.f32 %v114, %v369
    %v371 = vpop.f32.mrb[0].mxu0
    %v372 = vadd.f32 %v118, %v371
    %v373 = vpop.f32.mrb[0].mxu0
    %v374 = vadd.f32 %v114, %v373
    %v375 = vpop.f32.mrb[0].mxu0
    %v376 = vadd.f32 %v118, %v375
    %377 = vmatprep.mubr.bf16.mxu0 0
    %378 = vmatmul.mubr.bf16.gmra.mrb[0].mxu0 %v150
    %v379 = vpop.f32.mrb[0].mxu0
    %v380 = vadd.f32 %v114, %v379
    %v381 = vpop.f32.mrb[0].mxu0
    %v382 = vadd.f32 %v118, %v381
    %v383 = vpop.f32.mrb[0].mxu0
    %v384 = vadd.f32 %v114, %v383
    %v385 = vpop.f32.mrb[0].mxu0
    %v386 = vadd.f32 %v118, %v385
    %387 = vdwg.mxu0
    %388 = vmatprep.subr.bf16.mxu0 %v254
    %389 = vmatpush1.bf16.msra.mxu0 %v253
    %390 = vmatprep.subr.bf16.mxu0 %v258
    %391 = vmatpush1.bf16.msra.mxu0 %v257
    %392 = vmatprep.subr.bf16.mxu0 %v262
    %393 = vmatpush1.bf16.msra.mxu0 %v261
    %394 = vmatprep.subr.bf16.mxu0 %v266
    %395 = vmatpush1.bf16.msra.mxu0 %v265
    %396 = vmatprep.subr.bf16.mxu0 %v270
    %397 = vmatpush1.bf16.msra.mxu0 %v269
    %398 = vmatprep.subr.bf16.mxu0 %v274
    %399 = vmatpush1.bf16.msra.mxu0 %v273
    %400 = vmatprep.subr.bf16.mxu0 %v278
    %401 = vmatpush1.bf16.msra.mxu0 %v277
    %402 = vmatprep.subr.bf16.mxu0 %v282
    %403 = vmatpush1.bf16.msra.mxu0 %v281
    %404 = vmatprep.subr.bf16.mxu0 0
    %405 = vmatpush1.bf16.msra.mxu0 0
    %406 = vmatprep.subr.bf16.mxu0 0
    %407 = vmatpush1.bf16.msra.mxu0 0
    %408 = vmatprep.subr.bf16.mxu0 0
    %409 = vmatpush1.bf16.msra.mxu0 0
    %410 = vmatprep.subr.bf16.mxu0 0
    %411 = vmatpush1.bf16.msra.mxu0 0
    %412 = vmatprep.subr.bf16.mxu0 0
    %413 = vmatpush1.bf16.msra.mxu0 0
    %414 = vmatprep.subr.bf16.mxu0 0
    %415 = vmatpush1.bf16.msra.mxu0 0
    %416 = vmatprep.subr.bf16.mxu0 0
    %417 = vmatpush1.bf16.msra.mxu0 0
    %418 = vmatprep.subr.bf16.mxu0 0
    %419 = vmatpush1.bf16.msra.mxu0 0
    %420 = vmatprep.mubr.bf16.mxu0 0
    %421 = vmatmul.mubr.bf16.gmra.mrb[0].mxu0 %v147
    %v422 = vpop.f32.mrb[0].mxu0
    %v423 = vadd.f32 %v122, %v422
    %v424 = vpop.f32.mrb[0].mxu0
    %v425 = vadd.f32 %v126, %v424
    %v426 = vpop.f32.mrb[0].mxu0
    %v427 = vadd.f32 %v122, %v426
    %v428 = vpop.f32.mrb[0].mxu0
    %v429 = vadd.f32 %v126, %v428
    %430 = vmatprep.mubr.bf16.mxu0 0
    %431 = vmatmul.mubr.bf16.gmra.mrb[0].mxu0 %v148
    %v432 = vpop.f32.mrb[0].mxu0
    %v433 = vadd.f32 %v122, %v432
    %v434 = vpop.f32.mrb[0].mxu0
    %v435 = vadd.f32 %v126, %v434
    %v436 = vpop.f32.mrb[0].mxu0
    %v437 = vadd.f32 %v122, %v436
    %v438 = vpop.f32.mrb[0].mxu0
    %v439 = vadd.f32 %v126, %v438
    %440 = vmatprep.mubr.bf16.mxu0 0
    %441 = vmatmul.mubr.bf16.gmra.mrb[0].mxu0 %v149
    %v442 = vpop.f32.mrb[0].mxu0
    %v443 = vadd.f32 %v122, %v442
    %v444 = vpop.f32.mrb[0].mxu0
    %v445 = vadd.f32 %v126, %v444
    %v446 = vpop.f32.mrb[0].mxu0
    %v447 = vadd.f32 %v122, %v446
    %v448 = vpop.f32.mrb[0].mxu0
    %v449 = vadd.f32 %v126, %v448
    %450 = vmatprep.mubr.bf16.mxu0 0
    %451 = vmatmul.mubr.bf16.gmra.mrb[0].mxu0 %v150
    %v452 = vpop.f32.mrb[0].mxu0
    %v453 = vadd.f32 %v122, %v452
    %v454 = vpop.f32.mrb[0].mxu0
    %v455 = vadd.f32 %v126, %v454
    %v456 = vpop.f32.mrb[0].mxu0
    %v457 = vadd.f32 %v122, %v456
    %v458 = vpop.f32.mrb[0].mxu0
    %v459 = vadd.f32 %v126, %v458
    %460 = vdwg.mxu0
    %461 = vst [vmem:[#allocation2] sm:$0xff] %v350
    %462 = vst [vmem:[#allocation2 + $0x8] sm:$0xff] %v352
    %463 = vst [vmem:[#allocation2 + $0x10] sm:$0xff] %v423
    %464 = vst [vmem:[#allocation2 + $0x18] sm:$0xff] %v425
    %465 = vst [vmem:[#allocation2 + $0x20] sm:$0xff] %v354
    %466 = vst [vmem:[#allocation2 + $0x28] sm:$0xff] %v356
    %467 = vst [vmem:[#allocation2 + $0x30] sm:$0xff] %v427
    %468 = vst [vmem:[#allocation2 + $0x38] sm:$0xff] %v429
    %469 = vst [vmem:[#allocation2 + $0x40] sm:$0xff] %v360
    %470 = vst [vmem:[#allocation2 + $0x48] sm:$0xff] %v362
    %471 = vst [vmem:[#allocation2 + $0x50] sm:$0xff] %v433
    %472 = vst [vmem:[#allocation2 + $0x58] sm:$0xff] %v435
    %473 = vst [vmem:[#allocation2 + $0x60] sm:$0xff] %v364
    %474 = vst [vmem:[#allocation2 + $0x68] sm:$0xff] %v366
    %475 = vst [vmem:[#allocation2 + $0x70] sm:$0xff] %v437
    %476 = vst [vmem:[#allocation2 + $0x78] sm:$0xff] %v439
    %477 = vst [vmem:[#allocation2 + $0x80] sm:$0xff] %v370
    %478 = vst [vmem:[#allocation2 + $0x88] sm:$0xff] %v372
    %479 = vst [vmem:[#allocation2 + $0x90] sm:$0xff] %v443
    %480 = vst [vmem:[#allocation2 + $0x98] sm:$0xff] %v445
    %481 = vst [vmem:[#allocation2 + $0xa0] sm:$0xff] %v374
    %482 = vst [vmem:[#allocation2 + $0xa8] sm:$0xff] %v376
    %483 = vst [vmem:[#allocation2 + $0xb0] sm:$0xff] %v447
    %484 = vst [vmem:[#allocation2 + $0xb8] sm:$0xff] %v449
    %485 = vst [vmem:[#allocation2 + $0xc0] sm:$0xff] %v380
    %486 = vst [vmem:[#allocation2 + $0xc8] sm:$0xff] %v382
    %487 = vst [vmem:[#allocation2 + $0xd0] sm:$0xff] %v453
    %488 = vst [vmem:[#allocation2 + $0xd8] sm:$0xff] %v455
    %489 = vst [vmem:[#allocation2 + $0xe0] sm:$0xff] %v384
    %490 = vst [vmem:[#allocation2 + $0xe8] sm:$0xff] %v386
    %491 = vst [vmem:[#allocation2 + $0xf0] sm:$0xff] %v457
    %492 = vst [vmem:[#allocation2 + $0xf8] sm:$0xff] %v459
    %v493 = vld [vmem:[#allocation8] sm:$0xff]
    %v494 = vld [vmem:[#allocation8 + $0x8] sm:$0xff]
    %v495 = vld [vmem:[#allocation8 + $0x10] sm:$0xff]
    %v496 = vld [vmem:[#allocation8 + $0x18] sm:$0xff]
    %v497 = vld [vmem:[#allocation8 + $0x20] sm:$0xff]
    %v498 = vld [vmem:[#allocation8 + $0x28] sm:$0xff]
    %v499 = vld [vmem:[#allocation8 + $0x30] sm:$0xff]
    %v500 = vld [vmem:[#allocation8 + $0x38] sm:$0xff]
    %v501 = vld [vmem:[#allocation8 + $0x40] sm:$0xff]
    %v502 = vld [vmem:[#allocation8 + $0x48] sm:$0xff]
    %v503 = vld [vmem:[#allocation8 + $0x50] sm:$0xff]
    %v504 = vld [vmem:[#allocation8 + $0x58] sm:$0xff]
    %v505 = vld [vmem:[#allocation8 + $0x60] sm:$0xff]
    %v506 = vld [vmem:[#allocation8 + $0x68] sm:$0xff]
    %v507 = vld [vmem:[#allocation8 + $0x70] sm:$0xff]
    %v508 = vld [vmem:[#allocation8 + $0x78] sm:$0xff]
    %v509 = vld [vmem:[#allocation8 + $0x80] sm:$0xff]
    %v510 = vld [vmem:[#allocation8 + $0x88] sm:$0xff]
    %v511 = vld [vmem:[#allocation8 + $0x90] sm:$0xff]
    %v512 = vld [vmem:[#allocation8 + $0x98] sm:$0xff]
    %v513 = vld [vmem:[#allocation8 + $0xa0] sm:$0xff]
    %v514 = vld [vmem:[#allocation8 + $0xa8] sm:$0xff]
    %v515 = vld [vmem:[#allocation8 + $0xb0] sm:$0xff]
    %v516 = vld [vmem:[#allocation8 + $0xb8] sm:$0xff]
    %v517 = vld [vmem:[#allocation8 + $0xc0] sm:$0xff]
    %v518 = vld [vmem:[#allocation8 + $0xc8] sm:$0xff]
    %v519 = vld [vmem:[#allocation8 + $0xd0] sm:$0xff]
    %v520 = vld [vmem:[#allocation8 + $0xd8] sm:$0xff]
    %v521 = vld [vmem:[#allocation8 + $0xe0] sm:$0xff]
    %v522 = vld [vmem:[#allocation8 + $0xe8] sm:$0xff]
    %v523 = vld [vmem:[#allocation8 + $0xf0] sm:$0xff]
    %v524 = vld [vmem:[#allocation8 + $0xf8] sm:$0xff]
    %v525 = vld [vmem:[#allocation4] sm:$0xff]
    %v526 = vld [vmem:[#allocation5] sm:$0xff]
    %s527 = smul.u32 0, 4
    %s528 = smul.addr %s527, 8
    %s529 = scalar_lea.vmem [#allocation2], %s528
    %v530 = vld [vmem:[%s529] sm:$0xff]
    %v531 = vld [vmem:[%s529 + $0x8] sm:$0xff]
    %v532 = vld [vmem:[%s529 + $0x10] sm:$0xff]
    %v533 = vld [vmem:[%s529 + $0x18] sm:$0xff]
    %v534 = vpack.c.bf16 %v525, %v525
    %v567 = vunpack.c.l.b16 %v493
    %v568 = vunpack.c.h.b16 %v493
    %v569 = vunpack.c.l.b16 %v494
    %v570 = vunpack.c.h.b16 %v494
    %v571 = vunpack.c.l.b16 %v495
    %v572 = vunpack.c.h.b16 %v495
    %v573 = vunpack.c.l.b16 %v496
    %v574 = vunpack.c.h.b16 %v496
    %v575 = vunpack.c.l.b16 %v497
    %v576 = vunpack.c.h.b16 %v497
    %v577 = vunpack.c.l.b16 %v498
    %v578 = vunpack.c.h.b16 %v498
    %v579 = vunpack.c.l.b16 %v499
    %v580 = vunpack.c.h.b16 %v499
    %v581 = vunpack.c.l.b16 %v500
    %v582 = vunpack.c.h.b16 %v500
    %v583 = vunpack.c.l.b16 %v501
    %v584 = vunpack.c.h.b16 %v501
    %v585 = vunpack.c.l.b16 %v502
    %v586 = vunpack.c.h.b16 %v502
    %v587 = vunpack.c.l.b16 %v503
    %v588 = vunpack.c.h.b16 %v503
    %v589 = vunpack.c.l.b16 %v504
    %v590 = vunpack.c.h.b16 %v504
    %v591 = vunpack.c.l.b16 %v505
    %v592 = vunpack.c.h.b16 %v505
    %v593 = vunpack.c.l.b16 %v506
    %v594 = vunpack.c.h.b16 %v506
    %v595 = vunpack.c.l.b16 %v507
    %v596 = vunpack.c.h.b16 %v507
    %v597 = vunpack.c.l.b16 %v508
    %v598 = vunpack.c.h.b16 %v508
    %v599 = vunpack.c.l.b16 %v509
    %v600 = vunpack.c.h.b16 %v509
    %v601 = vunpack.c.l.b16 %v510
    %v602 = vunpack.c.h.b16 %v510
    %v603 = vunpack.c.l.b16 %v511
    %v604 = vunpack.c.h.b16 %v511
    %v605 = vunpack.c.l.b16 %v512
    %v606 = vunpack.c.h.b16 %v512
    %v607 = vunpack.c.l.b16 %v513
    %v608 = vunpack.c.h.b16 %v513
    %v609 = vunpack.c.l.b16 %v514
    %v610 = vunpack.c.h.b16 %v514
    %v611 = vunpack.c.l.b16 %v515
    %v612 = vunpack.c.h.b16 %v515
    %v613 = vunpack.c.l.b16 %v516
    %v614 = vunpack.c.h.b16 %v516
    %v615 = vunpack.c.l.b16 %v517
    %v616 = vunpack.c.h.b16 %v517
    %v617 = vunpack.c.l.b16 %v518
    %v618 = vunpack.c.h.b16 %v518
    %v619 = vunpack.c.l.b16 %v519
    %v620 = vunpack.c.h.b16 %v519
    %v621 = vunpack.c.l.b16 %v520
    %v622 = vunpack.c.h.b16 %v520
    %v623 = vunpack.c.l.b16 %v521
    %v624 = vunpack.c.h.b16 %v521
    %v625 = vunpack.c.l.b16 %v522
    %v626 = vunpack.c.h.b16 %v522
    %v627 = vunpack.c.l.b16 %v523
    %v628 = vunpack.c.h.b16 %v523
    %v629 = vunpack.c.l.b16 %v524
    %v630 = vunpack.c.h.b16 %v524
    %v631 = vpack.c.b16 %v571, %v567
    %v632 = vpack.c.b16 %v572, %v568
    %v633 = vpack.c.b16 %v573, %v569
    %v634 = vpack.c.b16 %v574, %v570
    %v635 = vpack.c.b16 %v579, %v575
    %v636 = vpack.c.b16 %v580, %v576
    %v637 = vpack.c.b16 %v581, %v577
    %v638 = vpack.c.b16 %v582, %v578
    %v639 = vpack.c.b16 %v587, %v583
    %v640 = vpack.c.b16 %v588, %v584
    %v641 = vpack.c.b16 %v589, %v585
    %v642 = vpack.c.b16 %v590, %v586
    %v643 = vpack.c.b16 %v595, %v591
    %v644 = vpack.c.b16 %v596, %v592
    %v645 = vpack.c.b16 %v597, %v593
    %v646 = vpack.c.b16 %v598, %v594
    %v647 = vpack.c.b16 %v603, %v599
    %v648 = vpack.c.b16 %v604, %v600
    %v649 = vpack.c.b16 %v605, %v601
    %v650 = vpack.c.b16 %v606, %v602
    %v651 = vpack.c.b16 %v611, %v607
    %v652 = vpack.c.b16 %v612, %v608
    %v653 = vpack.c.b16 %v613, %v609
    %v654 = vpack.c.b16 %v614, %v610
    %v655 = vpack.c.b16 %v619, %v615
    %v656 = vpack.c.b16 %v620, %v616
    %v657 = vpack.c.b16 %v621, %v617
    %v658 = vpack.c.b16 %v622, %v618
    %v659 = vpack.c.b16 %v627, %v623
    %v660 = vpack.c.b16 %v628, %v624
    %v661 = vpack.c.b16 %v629, %v625
    %v662 = vpack.c.b16 %v630, %v626
    %695 = vmatprep.subr.bf16.mxu0 %v632
    %696 = vmatpush1.bf16.msra.mxu0 %v631
    %697 = vmatprep.subr.bf16.mxu0 %v636
    %698 = vmatpush1.bf16.msra.mxu0 %v635
    %699 = vmatprep.subr.bf16.mxu0 %v640
    %700 = vmatpush1.bf16.msra.mxu0 %v639
    %701 = vmatprep.subr.bf16.mxu0 %v644
    %702 = vmatpush1.bf16.msra.mxu0 %v643
    %703 = vmatprep.subr.bf16.mxu0 %v648
    %704 = vmatpush1.bf16.msra.mxu0 %v647
    %705 = vmatprep.subr.bf16.mxu0 %v652
    %706 = vmatpush1.bf16.msra.mxu0 %v651
    %707 = vmatprep.subr.bf16.mxu0 %v656
    %708 = vmatpush1.bf16.msra.mxu0 %v655
    %709 = vmatprep.subr.bf16.mxu0 %v660
    %710 = vmatpush1.bf16.msra.mxu0 %v659
    %711 = vmatprep.subr.bf16.mxu0 0
    %712 = vmatpush1.bf16.msra.mxu0 0
    %713 = vmatprep.subr.bf16.mxu0 0
    %714 = vmatpush1.bf16.msra.mxu0 0
    %715 = vmatprep.subr.bf16.mxu0 0
    %716 = vmatpush1.bf16.msra.mxu0 0
    %717 = vmatprep.subr.bf16.mxu0 0
    %718 = vmatpush1.bf16.msra.mxu0 0
    %719 = vmatprep.subr.bf16.mxu0 0
    %720 = vmatpush1.bf16.msra.mxu0 0
    %721 = vmatprep.subr.bf16.mxu0 0
    %722 = vmatpush1.bf16.msra.mxu0 0
    %723 = vmatprep.subr.bf16.mxu0 0
    %724 = vmatpush1.bf16.msra.mxu0 0
    %725 = vmatprep.subr.bf16.mxu0 0
    %726 = vmatpush1.bf16.msra.mxu0 0
    %727 = vmatprep.mubr.bf16.mxu0 0
    %728 = vmatmul.mubr.bf16.gmra.mrb[0].mxu0 %v534
    %v729 = vpop.f32.mrb[0].mxu0
    %v730 = vadd.f32 0.0, %v729
    %v731 = vpop.f32.mrb[0].mxu0
    %v732 = vadd.f32 0.0, %v731
    %v733 = vpop.f32.mrb[0].mxu0
    %v734 = vpop.f32.mrb[0].mxu0
    %735 = vdwg.mxu0
    %736 = vmatprep.subr.bf16.mxu0 %v634
    %737 = vmatpush1.bf16.msra.mxu0 %v633
    %738 = vmatprep.subr.bf16.mxu0 %v638
    %739 = vmatpush1.bf16.msra.mxu0 %v637
    %740 = vmatprep.subr.bf16.mxu0 %v642
    %741 = vmatpush1.bf16.msra.mxu0 %v641
    %742 = vmatprep.subr.bf16.mxu0 %v646
    %743 = vmatpush1.bf16.msra.mxu0 %v645
    %744 = vmatprep.subr.bf16.mxu0 %v650
    %745 = vmatpush1.bf16.msra.mxu0 %v649
    %746 = vmatprep.subr.bf16.mxu0 %v654
    %747 = vmatpush1.bf16.msra.mxu0 %v653
    %748 = vmatprep.subr.bf16.mxu0 %v658
    %749 = vmatpush1.bf16.msra.mxu0 %v657
    %750 = vmatprep.subr.bf16.mxu0 %v662
    %751 = vmatpush1.bf16.msra.mxu0 %v661
    %752 = vmatprep.subr.bf16.mxu0 0
    %753 = vmatpush1.bf16.msra.mxu0 0
    %754 = vmatprep.subr.bf16.mxu0 0
    %755 = vmatpush1.bf16.msra.mxu0 0
    %756 = vmatprep.subr.bf16.mxu0 0
    %757 = vmatpush1.bf16.msra.mxu0 0
    %758 = vmatprep.subr.bf16.mxu0 0
    %759 = vmatpush1.bf16.msra.mxu0 0
    %760 = vmatprep.subr.bf16.mxu0 0
    %761 = vmatpush1.bf16.msra.mxu0 0
    %762 = vmatprep.subr.bf16.mxu0 0
    %763 = vmatpush1.bf16.msra.mxu0 0
    %764 = vmatprep.subr.bf16.mxu0 0
    %765 = vmatpush1.bf16.msra.mxu0 0
    %766 = vmatprep.subr.bf16.mxu0 0
    %767 = vmatpush1.bf16.msra.mxu0 0
    %768 = vmatprep.mubr.bf16.mxu0 0
    %769 = vmatmul.mubr.bf16.gmra.mrb[0].mxu0 %v534
    %v770 = vpop.f32.mrb[0].mxu0
    %v771 = vadd.f32 0.0, %v770
    %v772 = vpop.f32.mrb[0].mxu0
    %v773 = vadd.f32 0.0, %v772
    %v774 = vpop.f32.mrb[0].mxu0
    %v775 = vpop.f32.mrb[0].mxu0
    %776 = vdwg.mxu0
    %v777 = vadd.f32 %v530, %v730
    %v778 = vadd.f32 %v531, %v732
    %v779 = vadd.f32 %v532, %v771
    %v780 = vadd.f32 %v533, %v773
    %v781 = vxor.u32 %v777, 2147483648
    %v782 = vxor.u32 %v778, 2147483648
    %v783 = vxor.u32 %v779, 2147483648
    %v784 = vmul.f32 %v781, 1.442695
    %v785 = vpow.pop %v784
    %v786 = vmul.f32 %v782, 1.442695
    %v787 = vpow.pop %v786
    %v788 = vmul.f32 %v783, 1.442695
    %v789 = vpow.pop %v788
    %v790 = vadd.f32 %v785, 1.0
    %v791 = vadd.f32 %v787, 1.0
    %v792 = vadd.f32 %v789, 1.0
    %v793 = vrcp.pop %v790
    %v794 = vmul.f32 1.0, %v793
    %v795 = vrcp.pop %v791
    %v796 = vmul.f32 1.0, %v795
    %v797 = vrcp.pop %v792
    %v798 = vmul.f32 1.0, %v797
    %v799 = vtanh.pop %v780
    %v800 = vmul.f32 %v796, %v526
    %v801 = vmul.f32 %v794, %v799
    %v802 = vadd.f32 %v800, %v801
    %v803 = vtanh.pop %v802
    %v804 = vmul.f32 %v798, %v803
    %805 = vst [vmem:[#allocation3] sm:$0xff] %v804
    %s806 = smul.u32 1, 4
    %s807 = smul.addr %s806, 8
    %s808 = scalar_lea.vmem [#allocation2], %s807
    %v809 = vld [vmem:[%s808] sm:$0xff]
    %v810 = vld [vmem:[%s808 + $0x8] sm:$0xff]
    %v811 = vld [vmem:[%s808 + $0x10] sm:$0xff]
    %v812 = vld [vmem:[%s808 + $0x18] sm:$0xff]
    %v813 = vpack.c.bf16 %v804, %v804
    %814 = vmatprep.subr.bf16.mxu0 %v632
    %815 = vmatpush1.bf16.msra.mxu0 %v631
    %816 = vmatprep.subr.bf16.mxu0 %v636
    %817 = vmatpush1.bf16.msra.mxu0 %v635
    %818 = vmatprep.subr.bf16.mxu0 %v640
    %819 = vmatpush1.bf16.msra.mxu0 %v639
    %820 = vmatprep.subr.bf16.mxu0 %v644
    %821 = vmatpush1.bf16.msra.mxu0 %v643
    %822 = vmatprep.subr.bf16.mxu0 %v648
    %823 = vmatpush1.bf16.msra.mxu0 %v647
    %824 = vmatprep.subr.bf16.mxu0 %v652
    %825 = vmatpush1.bf16.msra.mxu0 %v651
    %826 = vmatprep.subr.bf16.mxu0 %v656
    %827 = vmatpush1.bf16.msra.mxu0 %v655
    %828 = vmatprep.subr.bf16.mxu0 %v660
    %829 = vmatpush1.bf16.msra.mxu0 %v659
    %830 = vmatprep.subr.bf16.mxu0 0
    %831 = vmatpush1.bf16.msra.mxu0 0
    %832 = vmatprep.subr.bf16.mxu0 0
    %833 = vmatpush1.bf16.msra.mxu0 0
    %834 = vmatprep.subr.bf16.mxu0 0
    %835 = vmatpush1.bf16.msra.mxu0 0
    %836 = vmatprep.subr.bf16.mxu0 0
    %837 = vmatpush1.bf16.msra.mxu0 0
    %838 = vmatprep.subr.bf16.mxu0 0
    %839 = vmatpush1.bf16.msra.mxu0 0
    %840 = vmatprep.subr.bf16.mxu0 0
    %841 = vmatpush1.bf16.msra.mxu0 0
    %842 = vmatprep.subr.bf16.mxu0 0
    %843 = vmatpush1.bf16.msra.mxu0 0
    %844 = vmatprep.subr.bf16.mxu0 0
    %845 = vmatpush1.bf16.msra.mxu0 0
    %846 = vmatprep.mubr.bf16.mxu0 0
    %847 = vmatmul.mubr.bf16.gmra.mrb[0].mxu0 %v813
    %v848 = vpop.f32.mrb[0].mxu0
    %v849 = vadd.f32 0.0, %v848
    %v850 = vpop.f32.mrb[0].mxu0
    %v851 = vadd.f32 0.0, %v850
    %v852 = vpop.f32.mrb[0].mxu0
    %v853 = vpop.f32.mrb[0].mxu0
    %854 = vdwg.mxu0
    %855 = vmatprep.subr.bf16.mxu0 %v634
    %856 = vmatpush1.bf16.msra.mxu0 %v633
    %857 = vmatprep.subr.bf16.mxu0 %v638
    %858 = vmatpush1.bf16.msra.mxu0 %v637
    %859 = vmatprep.subr.bf16.mxu0 %v642
    %860 = vmatpush1.bf16.msra.mxu0 %v641
    %861 = vmatprep.subr.bf16.mxu0 %v646
    %862 = vmatpush1.bf16.msra.mxu0 %v645
    %863 = vmatprep.subr.bf16.mxu0 %v650
    %864 = vmatpush1.bf16.msra.mxu0 %v649
    %865 = vmatprep.subr.bf16.mxu0 %v654
    %866 = vmatpush1.bf16.msra.mxu0 %v653
    %867 = vmatprep.subr.bf16.mxu0 %v658
    %868 = vmatpush1.bf16.msra.mxu0 %v657
    %869 = vmatprep.subr.bf16.mxu0 %v662
    %870 = vmatpush1.bf16.msra.mxu0 %v661
    %871 = vmatprep.subr.bf16.mxu0 0
    %872 = vmatpush1.bf16.msra.mxu0 0
    %873 = vmatprep.subr.bf16.mxu0 0
    %874 = vmatpush1.bf16.msra.mxu0 0
    %875 = vmatprep.subr.bf16.mxu0 0
    %876 = vmatpush1.bf16.msra.mxu0 0
    %877 = vmatprep.subr.bf16.mxu0 0
    %878 = vmatpush1.bf16.msra.mxu0 0
    %879 = vmatprep.subr.bf16.mxu0 0
    %880 = vmatpush1.bf16.msra.mxu0 0
    %881 = vmatprep.subr.bf16.mxu0 0
    %882 = vmatpush1.bf16.msra.mxu0 0
    %883 = vmatprep.subr.bf16.mxu0 0
    %884 = vmatpush1.bf16.msra.mxu0 0
    %885 = vmatprep.subr.bf16.mxu0 0
    %886 = vmatpush1.bf16.msra.mxu0 0
    %887 = vmatprep.mubr.bf16.mxu0 0
    %888 = vmatmul.mubr.bf16.gmra.mrb[0].mxu0 %v813
    %v889 = vpop.f32.mrb[0].mxu0
    %v890 = vadd.f32 0.0, %v889
    %v891 = vpop.f32.mrb[0].mxu0
    %v892 = vadd.f32 0.0, %v891
    %v893 = vpop.f32.mrb[0].mxu0
    %v894 = vpop.f32.mrb[0].mxu0
    %895 = vdwg.mxu0
    %v896 = vadd.f32 %v809, %v849
    %v897 = vadd.f32 %v810, %v851
    %v898 = vadd.f32 %v811, %v890
    %v899 = vadd.f32 %v812, %v892
    %v900 = vxor.u32 %v896, 2147483648
    %v901 = vxor.u32 %v897, 2147483648
    %v902 = vxor.u32 %v898, 2147483648
    %v903 = vmul.f32 %v900, 1.442695
    %v904 = vpow.pop %v903
    %v905 = vmul.f32 %v901, 1.442695
    %v906 = vpow.pop %v905
    %v907 = vmul.f32 %v902, 1.442695
    %v908 = vpow.pop %v907
    %v909 = vadd.f32 %v904, 1.0
    %v910 = vadd.f32 %v906, 1.0
    %v911 = vadd.f32 %v908, 1.0
    %v912 = vrcp.pop %v909
    %v913 = vmul.f32 1.0, %v912
    %v914 = vrcp.pop %v910
    %v915 = vmul.f32 1.0, %v914
    %v916 = vrcp.pop %v911
    %v917 = vmul.f32 1.0, %v916
    %v918 = vtanh.pop %v899
    %v919 = vmul.f32 %v915, %v802
    %v920 = vmul.f32 %v913, %v918
    %v921 = vadd.f32 %v919, %v920
    %v922 = vtanh.pop %v921
    %v923 = vmul.f32 %v917, %v922
    %s924 = scalar_lea.vmem [#allocation3], 8
    %925 = vst [vmem:[%s924] sm:$0xff] %v923
    %s926 = smul.u32 2, 4
    %s927 = smul.addr %s926, 8
    %s928 = scalar_lea.vmem [#allocation2], %s927
    %v929 = vld [vmem:[%s928] sm:$0xff]
    %v930 = vld [vmem:[%s928 + $0x8] sm:$0xff]
    %v931 = vld [vmem:[%s928 + $0x10] sm:$0xff]
    %v932 = vld [vmem:[%s928 + $0x18] sm:$0xff]
    %v933 = vpack.c.bf16 %v923, %v923
    %934 = vmatprep.subr.bf16.mxu0 %v632
    %935 = vmatpush1.bf16.msra.mxu0 %v631
    %936 = vmatprep.subr.bf16.mxu0 %v636
    %937 = vmatpush1.bf16.msra.mxu0 %v635
    %938 = vmatprep.subr.bf16.mxu0 %v640
    %939 = vmatpush1.bf16.msra.mxu0 %v639
    %940 = vmatprep.subr.bf16.mxu0 %v644
    %941 = vmatpush1.bf16.msra.mxu0 %v643
    %942 = vmatprep.subr.bf16.mxu0 %v648
    %943 = vmatpush1.bf16.msra.mxu0 %v647
    %944 = vmatprep.subr.bf16.mxu0 %v652
    %945 = vmatpush1.bf16.msra.mxu0 %v651
    %946 = vmatprep.subr.bf16.mxu0 %v656
    %947 = vmatpush1.bf16.msra.mxu0 %v655
    %948 = vmatprep.subr.bf16.mxu0 %v660
    %949 = vmatpush1.bf16.msra.mxu0 %v659
    %950 = vmatprep.subr.bf16.mxu0 0
    %951 = vmatpush1.bf16.msra.mxu0 0
    %952 = vmatprep.subr.bf16.mxu0 0
    %953 = vmatpush1.bf16.msra.mxu0 0
    %954 = vmatprep.subr.bf16.mxu0 0
    %955 = vmatpush1.bf16.msra.mxu0 0
    %956 = vmatprep.subr.bf16.mxu0 0
    %957 = vmatpush1.bf16.msra.mxu0 0
    %958 = vmatprep.subr.bf16.mxu0 0
    %959 = vmatpush1.bf16.msra.mxu0 0
    %960 = vmatprep.subr.bf16.mxu0 0
    %961 = vmatpush1.bf16.msra.mxu0 0
    %962 = vmatprep.subr.bf16.mxu0 0
    %963 = vmatpush1.bf16.msra.mxu0 0
    %964 = vmatprep.subr.bf16.mxu0 0
    %965 = vmatpush1.bf16.msra.mxu0 0
    %966 = vmatprep.mubr.bf16.mxu0 0
    %967 = vmatmul.mubr.bf16.gmra.mrb[0].mxu0 %v933
    %v968 = vpop.f32.mrb[0].mxu0
    %v969 = vadd.f32 0.0, %v968
    %v970 = vpop.f32.mrb[0].mxu0
    %v971 = vadd.f32 0.0, %v970
    %v972 = vpop.f32.mrb[0].mxu0
    %v973 = vpop.f32.mrb[0].mxu0
    %974 = vdwg.mxu0
    %975 = vmatprep.subr.bf16.mxu0 %v634
    %976 = vmatpush1.bf16.msra.mxu0 %v633
    %977 = vmatprep.subr.bf16.mxu0 %v638
    %978 = vmatpush1.bf16.msra.mxu0 %v637
    %979 = vmatprep.subr.bf16.mxu0 %v642
    %980 = vmatpush1.bf16.msra.mxu0 %v641
    %981 = vmatprep.subr.bf16.mxu0 %v646
    %982 = vmatpush1.bf16.msra.mxu0 %v645
    %983 = vmatprep.subr.bf16.mxu0 %v650
    %984 = vmatpush1.bf16.msra.mxu0 %v649
    %985 = vmatprep.subr.bf16.mxu0 %v654
    %986 = vmatpush1.bf16.msra.mxu0 %v653
    %987 = vmatprep.subr.bf16.mxu0 %v658
    %988 = vmatpush1.bf16.msra.mxu0 %v657
    %989 = vmatprep.subr.bf16.mxu0 %v662
    %990 = vmatpush1.bf16.msra.mxu0 %v661
    %991 = vmatprep.subr.bf16.mxu0 0
    %992 = vmatpush1.bf16.msra.mxu0 0
    %993 = vmatprep.subr.bf16.mxu0 0
    %994 = vmatpush1.bf16.msra.mxu0 0
    %995 = vmatprep.subr.bf16.mxu0 0
    %996 = vmatpush1.bf16.msra.mxu0 0
    %997 = vmatprep.subr.bf16.mxu0 0
    %998 = vmatpush1.bf16.msra.mxu0 0
    %999 = vmatprep.subr.bf16.mxu0 0
    %1000 = vmatpush1.bf16.msra.mxu0 0
    %1001 = vmatprep.subr.bf16.mxu0 0
    %1002 = vmatpush1.bf16.msra.mxu0 0
    %1003 = vmatprep.subr.bf16.mxu0 0
    %1004 = vmatpush1.bf16.msra.mxu0 0
    %1005 = vmatprep.subr.bf16.mxu0 0
    %1006 = vmatpush1.bf16.msra.mxu0 0
    %1007 = vmatprep.mubr.bf16.mxu0 0
    %1008 = vmatmul.mubr.bf16.gmra.mrb[0].mxu0 %v933
    %v1009 = vpop.f32.mrb[0].mxu0
    %v1010 = vadd.f32 0.0, %v1009
    %v1011 = vpop.f32.mrb[0].mxu0
    %v1012 = vadd.f32 0.0, %v1011
    %v1013 = vpop.f32.mrb[0].mxu0
    %v1014 = vpop.f32.mrb[0].mxu0
    %1015 = vdwg.mxu0
    %v1016 = vadd.f32 %v929, %v969
    %v1017 = vadd.f32 %v930, %v971
    %v1018 = vadd.f32 %v931, %v1010
    %v1019 = vadd.f32 %v932, %v1012
    %v1020 = vxor.u32 %v1016, 2147483648
    %v1021 = vxor.u32 %v1017, 2147483648
    %v1022 = vxor.u32 %v1018, 2147483648
    %v1023 = vmul.f32 %v1020, 1.442695
    %v1024 = vpow.pop %v1023
    %v1025 = vmul.f32 %v1021, 1.442695
    %v1026 = vpow.pop %v1025
    %v1027 = vmul.f32 %v1022, 1.442695
    %v1028 = vpow.pop %v1027
    %v1029 = vadd.f32 %v1024, 1.0
    %v1030 = vadd.f32 %v1026, 1.0
    %v1031 = vadd.f32 %v1028, 1.0
    %v1032 = vrcp.pop %v1029
    %v1033 = vmul.f32 1.0, %v1032
    %v1034 = vrcp.pop %v1030
    %v1035 = vmul.f32 1.0, %v1034
    %v1036 = vrcp.pop %v1031
    %v1037 = vmul.f32 1.0, %v1036
    %v1038 = vtanh.pop %v1019
    %v1039 = vmul.f32 %v1035, %v921
    %v1040 = vmul.f32 %v1033, %v1038
    %v1041 = vadd.f32 %v1039, %v1040
    %v1042 = vtanh.pop %v1041
    %v1043 = vmul.f32 %v1037, %v1042
    %s1044 = scalar_lea.vmem [#allocation3], 16
    %1045 = vst [vmem:[%s1044] sm:$0xff] %v1043
    %s1046 = smul.u32 3, 4
    %s1047 = smul.addr %s1046, 8
    %s1048 = scalar_lea.vmem [#allocation2], %s1047
    %v1049 = vld [vmem:[%s1048] sm:$0xff]
    %v1050 = vld [vmem:[%s1048 + $0x8] sm:$0xff]
    %v1051 = vld [vmem:[%s1048 + $0x10] sm:$0xff]
    %v1052 = vld [vmem:[%s1048 + $0x18] sm:$0xff]
    %v1053 = vpack.c.bf16 %v1043, %v1043
    %1054 = vmatprep.subr.bf16.mxu0 %v632
    %1055 = vmatpush1.bf16.msra.mxu0 %v631
    %1056 = vmatprep.subr.bf16.mxu0 %v636
    %1057 = vmatpush1.bf16.msra.mxu0 %v635
    %1058 = vmatprep.subr.bf16.mxu0 %v640
    %1059 = vmatpush1.bf16.msra.mxu0 %v639
    %1060 = vmatprep.subr.bf16.mxu0 %v644
    %1061 = vmatpush1.bf16.msra.mxu0 %v643
    %1062 = vmatprep.subr.bf16.mxu0 %v648
    %1063 = vmatpush1.bf16.msra.mxu0 %v647
    %1064 = vmatprep.subr.bf16.mxu0 %v652
    %1065 = vmatpush1.bf16.msra.mxu0 %v651
    %1066 = vmatprep.subr.bf16.mxu0 %v656
    %1067 = vmatpush1.bf16.msra.mxu0 %v655
    %1068 = vmatprep.subr.bf16.mxu0 %v660
    %1069 = vmatpush1.bf16.msra.mxu0 %v659
    %1070 = vmatprep.subr.bf16.mxu0 0
    %1071 = vmatpush1.bf16.msra.mxu0 0
    %1072 = vmatprep.subr.bf16.mxu0 0
    %1073 = vmatpush1.bf16.msra.mxu0 0
    %1074 = vmatprep.subr.bf16.mxu0 0
    %1075 = vmatpush1.bf16.msra.mxu0 0
    %1076 = vmatprep.subr.bf16.mxu0 0
    %1077 = vmatpush1.bf16.msra.mxu0 0
    %1078 = vmatprep.subr.bf16.mxu0 0
    %1079 = vmatpush1.bf16.msra.mxu0 0
    %1080 = vmatprep.subr.bf16.mxu0 0
    %1081 = vmatpush1.bf16.msra.mxu0 0
    %1082 = vmatprep.subr.bf16.mxu0 0
    %1083 = vmatpush1.bf16.msra.mxu0 0
    %1084 = vmatprep.subr.bf16.mxu0 0
    %1085 = vmatpush1.bf16.msra.mxu0 0
    %1086 = vmatprep.mubr.bf16.mxu0 0
    %1087 = vmatmul.mubr.bf16.gmra.mrb[0].mxu0 %v1053
    %v1088 = vpop.f32.mrb[0].mxu0
    %v1089 = vadd.f32 0.0, %v1088
    %v1090 = vpop.f32.mrb[0].mxu0
    %v1091 = vadd.f32 0.0, %v1090
    %v1092 = vpop.f32.mrb[0].mxu0
    %v1093 = vpop.f32.mrb[0].mxu0
    %1094 = vdwg.mxu0
    %1095 = vmatprep.subr.bf16.mxu0 %v634
    %1096 = vmatpush1.bf16.msra.mxu0 %v633
    %1097 = vmatprep.subr.bf16.mxu0 %v638
    %1098 = vmatpush1.bf16.msra.mxu0 %v637
    %1099 = vmatprep.subr.bf16.mxu0 %v642
    %1100 = vmatpush1.bf16.msra.mxu0 %v641
    %1101 = vmatprep.subr.bf16.mxu0 %v646
    %1102 = vmatpush1.bf16.msra.mxu0 %v645
    %1103 = vmatprep.subr.bf16.mxu0 %v650
    %1104 = vmatpush1.bf16.msra.mxu0 %v649
    %1105 = vmatprep.subr.bf16.mxu0 %v654
    %1106 = vmatpush1.bf16.msra.mxu0 %v653
    %1107 = vmatprep.subr.bf16.mxu0 %v658
    %1108 = vmatpush1.bf16.msra.mxu0 %v657
    %1109 = vmatprep.subr.bf16.mxu0 %v662
    %1110 = vmatpush1.bf16.msra.mxu0 %v661
    %1111 = vmatprep.subr.bf16.mxu0 0
    %1112 = vmatpush1.bf16.msra.mxu0 0
    %1113 = vmatprep.subr.bf16.mxu0 0
    %1114 = vmatpush1.bf16.msra.mxu0 0
    %1115 = vmatprep.subr.bf16.mxu0 0
    %1116 = vmatpush1.bf16.msra.mxu0 0
    %1117 = vmatprep.subr.bf16.mxu0 0
    %1118 = vmatpush1.bf16.msra.mxu0 0
    %1119 = vmatprep.subr.bf16.mxu0 0
    %1120 = vmatpush1.bf16.msra.mxu0 0
    %1121 = vmatprep.subr.bf16.mxu0 0
    %1122 = vmatpush1.bf16.msra.mxu0 0
    %1123 = vmatprep.subr.bf16.mxu0 0
    %1124 = vmatpush1.bf16.msra.mxu0 0
    %1125 = vmatprep.subr.bf16.mxu0 0
    %1126 = vmatpush1.bf16.msra.mxu0 0
    %1127 = vmatprep.mubr.bf16.mxu0 0
    %1128 = vmatmul.mubr.bf16.gmra.mrb[0].mxu0 %v1053
    %v1129 = vpop.f32.mrb[0].mxu0
    %v1130 = vadd.f32 0.0, %v1129
    %v1131 = vpop.f32.mrb[0].mxu0
    %v1132 = vadd.f32 0.0, %v1131
    %v1133 = vpop.f32.mrb[0].mxu0
    %v1134 = vpop.f32.mrb[0].mxu0
    %1135 = vdwg.mxu0
    %v1136 = vadd.f32 %v1049, %v1089
    %v1137 = vadd.f32 %v1050, %v1091
    %v1138 = vadd.f32 %v1051, %v1130
    %v1139 = vadd.f32 %v1052, %v1132
    %v1140 = vxor.u32 %v1136, 2147483648
    %v1141 = vxor.u32 %v1137, 2147483648
    %v1142 = vxor.u32 %v1138, 2147483648
    %v1143 = vmul.f32 %v1140, 1.442695
    %v1144 = vpow.pop %v1143
    %v1145 = vmul.f32 %v1141, 1.442695
    %v1146 = vpow.pop %v1145
    %v1147 = vmul.f32 %v1142, 1.442695
    %v1148 = vpow.pop %v1147
    %v1149 = vadd.f32 %v1144, 1.0
    %v1150 = vadd.f32 %v1146, 1.0
    %v1151 = vadd.f32 %v1148, 1.0
    %v1152 = vrcp.pop %v1149
    %v1153 = vmul.f32 1.0, %v1152
    %v1154 = vrcp.pop %v1150
    %v1155 = vmul.f32 1.0, %v1154
    %v1156 = vrcp.pop %v1151
    %v1157 = vmul.f32 1.0, %v1156
    %v1158 = vtanh.pop %v1139
    %v1159 = vmul.f32 %v1155, %v1041
    %v1160 = vmul.f32 %v1153, %v1158
    %v1161 = vadd.f32 %v1159, %v1160
    %v1162 = vtanh.pop %v1161
    %v1163 = vmul.f32 %v1157, %v1162
    %s1164 = scalar_lea.vmem [#allocation3], 24
    %1165 = vst [vmem:[%s1164] sm:$0xff] %v1163
    %s1166 = smul.u32 4, 4
    %s1167 = smul.addr %s1166, 8
    %s1168 = scalar_lea.vmem [#allocation2], %s1167
    %v1169 = vld [vmem:[%s1168] sm:$0xff]
    %v1170 = vld [vmem:[%s1168 + $0x8] sm:$0xff]
    %v1171 = vld [vmem:[%s1168 + $0x10] sm:$0xff]
    %v1172 = vld [vmem:[%s1168 + $0x18] sm:$0xff]
    %v1173 = vpack.c.bf16 %v1163, %v1163
    %1174 = vmatprep.subr.bf16.mxu0 %v632
    %1175 = vmatpush1.bf16.msra.mxu0 %v631
    %1176 = vmatprep.subr.bf16.mxu0 %v636
    %1177 = vmatpush1.bf16.msra.mxu0 %v635
    %1178 = vmatprep.subr.bf16.mxu0 %v640
    %1179 = vmatpush1.bf16.msra.mxu0 %v639
    %1180 = vmatprep.subr.bf16.mxu0 %v644
    %1181 = vmatpush1.bf16.msra.mxu0 %v643
    %1182 = vmatprep.subr.bf16.mxu0 %v648
    %1183 = vmatpush1.bf16.msra.mxu0 %v647
    %1184 = vmatprep.subr.bf16.mxu0 %v652
    %1185 = vmatpush1.bf16.msra.mxu0 %v651
    %1186 = vmatprep.subr.bf16.mxu0 %v656
    %1187 = vmatpush1.bf16.msra.mxu0 %v655
    %1188 = vmatprep.subr.bf16.mxu0 %v660
    %1189 = vmatpush1.bf16.msra.mxu0 %v659
    %1190 = vmatprep.subr.bf16.mxu0 0
    %1191 = vmatpush1.bf16.msra.mxu0 0
    %1192 = vmatprep.subr.bf16.mxu0 0
    %1193 = vmatpush1.bf16.msra.mxu0 0
    %1194 = vmatprep.subr.bf16.mxu0 0
    %1195 = vmatpush1.bf16.msra.mxu0 0
    %1196 = vmatprep.subr.bf16.mxu0 0
    %1197 = vmatpush1.bf16.msra.mxu0 0
    %1198 = vmatprep.subr.bf16.mxu0 0
    %1199 = vmatpush1.bf16.msra.mxu0 0
    %1200 = vmatprep.subr.bf16.mxu0 0
    %1201 = vmatpush1.bf16.msra.mxu0 0
    %1202 = vmatprep.subr.bf16.mxu0 0
    %1203 = vmatpush1.bf16.msra.mxu0 0
    %1204 = vmatprep.subr.bf16.mxu0 0
    %1205 = vmatpush1.bf16.msra.mxu0 0
    %1206 = vmatprep.mubr.bf16.mxu0 0
    %1207 = vmatmul.mubr.bf16.gmra.mrb[0].mxu0 %v1173
    %v1208 = vpop.f32.mrb[0].mxu0
    %v1209 = vadd.f32 0.0, %v1208
    %v1210 = vpop.f32.mrb[0].mxu0
    %v1211 = vadd.f32 0.0, %v1210
    %v1212 = vpop.f32.mrb[0].mxu0
    %v1213 = vpop.f32.mrb[0].mxu0
    %1214 = vdwg.mxu0
    %1215 = vmatprep.subr.bf16.mxu0 %v634
    %1216 = vmatpush1.bf16.msra.mxu0 %v633
    %1217 = vmatprep.subr.bf16.mxu0 %v638
    %1218 = vmatpush1.bf16.msra.mxu0 %v637
    %1219 = vmatprep.subr.bf16.mxu0 %v642
    %1220 = vmatpush1.bf16.msra.mxu0 %v641
    %1221 = vmatprep.subr.bf16.mxu0 %v646
    %1222 = vmatpush1.bf16.msra.mxu0 %v645
    %1223 = vmatprep.subr.bf16.mxu0 %v650
    %1224 = vmatpush1.bf16.msra.mxu0 %v649
    %1225 = vmatprep.subr.bf16.mxu0 %v654
    %1226 = vmatpush1.bf16.msra.mxu0 %v653
    %1227 = vmatprep.subr.bf16.mxu0 %v658
    %1228 = vmatpush1.bf16.msra.mxu0 %v657
    %1229 = vmatprep.subr.bf16.mxu0 %v662
    %1230 = vmatpush1.bf16.msra.mxu0 %v661
    %1231 = vmatprep.subr.bf16.mxu0 0
    %1232 = vmatpush1.bf16.msra.mxu0 0
    %1233 = vmatprep.subr.bf16.mxu0 0
    %1234 = vmatpush1.bf16.msra.mxu0 0
    %1235 = vmatprep.subr.bf16.mxu0 0
    %1236 = vmatpush1.bf16.msra.mxu0 0
    %1237 = vmatprep.subr.bf16.mxu0 0
    %1238 = vmatpush1.bf16.msra.mxu0 0
    %1239 = vmatprep.subr.bf16.mxu0 0
    %1240 = vmatpush1.bf16.msra.mxu0 0
    %1241 = vmatprep.subr.bf16.mxu0 0
    %1242 = vmatpush1.bf16.msra.mxu0 0
    %1243 = vmatprep.subr.bf16.mxu0 0
    %1244 = vmatpush1.bf16.msra.mxu0 0
    %1245 = vmatprep.subr.bf16.mxu0 0
    %1246 = vmatpush1.bf16.msra.mxu0 0
    %1247 = vmatprep.mubr.bf16.mxu0 0
    %1248 = vmatmul.mubr.bf16.gmra.mrb[0].mxu0 %v1173
    %v1249 = vpop.f32.mrb[0].mxu0
    %v1250 = vadd.f32 0.0, %v1249
    %v1251 = vpop.f32.mrb[0].mxu0
    %v1252 = vadd.f32 0.0, %v1251
    %v1253 = vpop.f32.mrb[0].mxu0
    %v1254 = vpop.f32.mrb[0].mxu0
    %1255 = vdwg.mxu0
    %v1256 = vadd.f32 %v1169, %v1209
    %v1257 = vadd.f32 %v1170, %v1211
    %v1258 = vadd.f32 %v1171, %v1250
    %v1259 = vadd.f32 %v1172, %v1252
    %v1260 = vxor.u32 %v1256, 2147483648
    %v1261 = vxor.u32 %v1257, 2147483648
    %v1262 = vxor.u32 %v1258, 2147483648
    %v1263 = vmul.f32 %v1260, 1.442695
    %v1264 = vpow.pop %v1263
    %v1265 = vmul.f32 %v1261, 1.442695
    %v1266 = vpow.pop %v1265
    %v1267 = vmul.f32 %v1262, 1.442695
    %v1268 = vpow.pop %v1267
    %v1269 = vadd.f32 %v1264, 1.0
    %v1270 = vadd.f32 %v1266, 1.0
    %v1271 = vadd.f32 %v1268, 1.0
    %v1272 = vrcp.pop %v1269
    %v1273 = vmul.f32 1.0, %v1272
    %v1274 = vrcp.pop %v1270
    %v1275 = vmul.f32 1.0, %v1274
    %v1276 = vrcp.pop %v1271
    %v1277 = vmul.f32 1.0, %v1276
    %v1278 = vtanh.pop %v1259
    %v1279 = vmul.f32 %v1275, %v1161
    %v1280 = vmul.f32 %v1273, %v1278
    %v1281 = vadd.f32 %v1279, %v1280
    %v1282 = vtanh.pop %v1281
    %v1283 = vmul.f32 %v1277, %v1282
    %s1284 = scalar_lea.vmem [#allocation3], 32
    %1285 = vst [vmem:[%s1284] sm:$0xff] %v1283
    %s1286 = smul.u32 5, 4
    %s1287 = smul.addr %s1286, 8
    %s1288 = scalar_lea.vmem [#allocation2], %s1287
    %v1289 = vld [vmem:[%s1288] sm:$0xff]
    %v1290 = vld [vmem:[%s1288 + $0x8] sm:$0xff]
    %v1291 = vld [vmem:[%s1288 + $0x10] sm:$0xff]
    %v1292 = vld [vmem:[%s1288 + $0x18] sm:$0xff]
    %v1293 = vpack.c.bf16 %v1283, %v1283
    %1294 = vmatprep.subr.bf16.mxu0 %v632
    %1295 = vmatpush1.bf16.msra.mxu0 %v631
    %1296 = vmatprep.subr.bf16.mxu0 %v636
    %1297 = vmatpush1.bf16.msra.mxu0 %v635
    %1298 = vmatprep.subr.bf16.mxu0 %v640
    %1299 = vmatpush1.bf16.msra.mxu0 %v639
    %1300 = vmatprep.subr.bf16.mxu0 %v644
    %1301 = vmatpush1.bf16.msra.mxu0 %v643
    %1302 = vmatprep.subr.bf16.mxu0 %v648
    %1303 = vmatpush1.bf16.msra.mxu0 %v647
    %1304 = vmatprep.subr.bf16.mxu0 %v652
    %1305 = vmatpush1.bf16.msra.mxu0 %v651
    %1306 = vmatprep.subr.bf16.mxu0 %v656
    %1307 = vmatpush1.bf16.msra.mxu0 %v655
    %1308 = vmatprep.subr.bf16.mxu0 %v660
    %1309 = vmatpush1.bf16.msra.mxu0 %v659
    %1310 = vmatprep.subr.bf16.mxu0 0
    %1311 = vmatpush1.bf16.msra.mxu0 0
    %1312 = vmatprep.subr.bf16.mxu0 0
    %1313 = vmatpush1.bf16.msra.mxu0 0
    %1314 = vmatprep.subr.bf16.mxu0 0
    %1315 = vmatpush1.bf16.msra.mxu0 0
    %1316 = vmatprep.subr.bf16.mxu0 0
    %1317 = vmatpush1.bf16.msra.mxu0 0
    %1318 = vmatprep.subr.bf16.mxu0 0
    %1319 = vmatpush1.bf16.msra.mxu0 0
    %1320 = vmatprep.subr.bf16.mxu0 0
    %1321 = vmatpush1.bf16.msra.mxu0 0
    %1322 = vmatprep.subr.bf16.mxu0 0
    %1323 = vmatpush1.bf16.msra.mxu0 0
    %1324 = vmatprep.subr.bf16.mxu0 0
    %1325 = vmatpush1.bf16.msra.mxu0 0
    %1326 = vmatprep.mubr.bf16.mxu0 0
    %1327 = vmatmul.mubr.bf16.gmra.mrb[0].mxu0 %v1293
    %v1328 = vpop.f32.mrb[0].mxu0
    %v1329 = vadd.f32 0.0, %v1328
    %v1330 = vpop.f32.mrb[0].mxu0
    %v1331 = vadd.f32 0.0, %v1330
    %v1332 = vpop.f32.mrb[0].mxu0
    %v1333 = vpop.f32.mrb[0].mxu0
    %1334 = vdwg.mxu0
    %1335 = vmatprep.subr.bf16.mxu0 %v634
    %1336 = vmatpush1.bf16.msra.mxu0 %v633
    %1337 = vmatprep.subr.bf16.mxu0 %v638
    %1338 = vmatpush1.bf16.msra.mxu0 %v637
    %1339 = vmatprep.subr.bf16.mxu0 %v642
    %1340 = vmatpush1.bf16.msra.mxu0 %v641
    %1341 = vmatprep.subr.bf16.mxu0 %v646
    %1342 = vmatpush1.bf16.msra.mxu0 %v645
    %1343 = vmatprep.subr.bf16.mxu0 %v650
    %1344 = vmatpush1.bf16.msra.mxu0 %v649
    %1345 = vmatprep.subr.bf16.mxu0 %v654
    %1346 = vmatpush1.bf16.msra.mxu0 %v653
    %1347 = vmatprep.subr.bf16.mxu0 %v658
    %1348 = vmatpush1.bf16.msra.mxu0 %v657
    %1349 = vmatprep.subr.bf16.mxu0 %v662
    %1350 = vmatpush1.bf16.msra.mxu0 %v661
    %1351 = vmatprep.subr.bf16.mxu0 0
    %1352 = vmatpush1.bf16.msra.mxu0 0
    %1353 = vmatprep.subr.bf16.mxu0 0
    %1354 = vmatpush1.bf16.msra.mxu0 0
    %1355 = vmatprep.subr.bf16.mxu0 0
    %1356 = vmatpush1.bf16.msra.mxu0 0
    %1357 = vmatprep.subr.bf16.mxu0 0
    %1358 = vmatpush1.bf16.msra.mxu0 0
    %1359 = vmatprep.subr.bf16.mxu0 0
    %1360 = vmatpush1.bf16.msra.mxu0 0
    %1361 = vmatprep.subr.bf16.mxu0 0
    %1362 = vmatpush1.bf16.msra.mxu0 0
    %1363 = vmatprep.subr.bf16.mxu0 0
    %1364 = vmatpush1.bf16.msra.mxu0 0
    %1365 = vmatprep.subr.bf16.mxu0 0
    %1366 = vmatpush1.bf16.msra.mxu0 0
    %1367 = vmatprep.mubr.bf16.mxu0 0
    %1368 = vmatmul.mubr.bf16.gmra.mrb[0].mxu0 %v1293
    %v1369 = vpop.f32.mrb[0].mxu0
    %v1370 = vadd.f32 0.0, %v1369
    %v1371 = vpop.f32.mrb[0].mxu0
    %v1372 = vadd.f32 0.0, %v1371
    %v1373 = vpop.f32.mrb[0].mxu0
    %v1374 = vpop.f32.mrb[0].mxu0
    %1375 = vdwg.mxu0
    %v1376 = vadd.f32 %v1289, %v1329
    %v1377 = vadd.f32 %v1290, %v1331
    %v1378 = vadd.f32 %v1291, %v1370
    %v1379 = vadd.f32 %v1292, %v1372
    %v1380 = vxor.u32 %v1376, 2147483648
    %v1381 = vxor.u32 %v1377, 2147483648
    %v1382 = vxor.u32 %v1378, 2147483648
    %v1383 = vmul.f32 %v1380, 1.442695
    %v1384 = vpow.pop %v1383
    %v1385 = vmul.f32 %v1381, 1.442695
    %v1386 = vpow.pop %v1385
    %v1387 = vmul.f32 %v1382, 1.442695
    %v1388 = vpow.pop %v1387
    %v1389 = vadd.f32 %v1384, 1.0
    %v1390 = vadd.f32 %v1386, 1.0
    %v1391 = vadd.f32 %v1388, 1.0
    %v1392 = vrcp.pop %v1389
    %v1393 = vmul.f32 1.0, %v1392
    %v1394 = vrcp.pop %v1390
    %v1395 = vmul.f32 1.0, %v1394
    %v1396 = vrcp.pop %v1391
    %v1397 = vmul.f32 1.0, %v1396
    %v1398 = vtanh.pop %v1379
    %v1399 = vmul.f32 %v1395, %v1281
    %v1400 = vmul.f32 %v1393, %v1398
    %v1401 = vadd.f32 %v1399, %v1400
    %v1402 = vtanh.pop %v1401
    %v1403 = vmul.f32 %v1397, %v1402
    %s1404 = scalar_lea.vmem [#allocation3], 40
    %1405 = vst [vmem:[%s1404] sm:$0xff] %v1403
    %s1406 = smul.u32 6, 4
    %s1407 = smul.addr %s1406, 8
    %s1408 = scalar_lea.vmem [#allocation2], %s1407
    %v1409 = vld [vmem:[%s1408] sm:$0xff]
    %v1410 = vld [vmem:[%s1408 + $0x8] sm:$0xff]
    %v1411 = vld [vmem:[%s1408 + $0x10] sm:$0xff]
    %v1412 = vld [vmem:[%s1408 + $0x18] sm:$0xff]
    %v1413 = vpack.c.bf16 %v1403, %v1403
    %1414 = vmatprep.subr.bf16.mxu0 %v632
    %1415 = vmatpush1.bf16.msra.mxu0 %v631
    %1416 = vmatprep.subr.bf16.mxu0 %v636
    %1417 = vmatpush1.bf16.msra.mxu0 %v635
    %1418 = vmatprep.subr.bf16.mxu0 %v640
    %1419 = vmatpush1.bf16.msra.mxu0 %v639
    %1420 = vmatprep.subr.bf16.mxu0 %v644
    %1421 = vmatpush1.bf16.msra.mxu0 %v643
    %1422 = vmatprep.subr.bf16.mxu0 %v648
    %1423 = vmatpush1.bf16.msra.mxu0 %v647
    %1424 = vmatprep.subr.bf16.mxu0 %v652
    %1425 = vmatpush1.bf16.msra.mxu0 %v651
    %1426 = vmatprep.subr.bf16.mxu0 %v656
    %1427 = vmatpush1.bf16.msra.mxu0 %v655
    %1428 = vmatprep.subr.bf16.mxu0 %v660
    %1429 = vmatpush1.bf16.msra.mxu0 %v659
    %1430 = vmatprep.subr.bf16.mxu0 0
    %1431 = vmatpush1.bf16.msra.mxu0 0
    %1432 = vmatprep.subr.bf16.mxu0 0
    %1433 = vmatpush1.bf16.msra.mxu0 0
    %1434 = vmatprep.subr.bf16.mxu0 0
    %1435 = vmatpush1.bf16.msra.mxu0 0
    %1436 = vmatprep.subr.bf16.mxu0 0
    %1437 = vmatpush1.bf16.msra.mxu0 0
    %1438 = vmatprep.subr.bf16.mxu0 0
    %1439 = vmatpush1.bf16.msra.mxu0 0
    %1440 = vmatprep.subr.bf16.mxu0 0
    %1441 = vmatpush1.bf16.msra.mxu0 0
    %1442 = vmatprep.subr.bf16.mxu0 0
    %1443 = vmatpush1.bf16.msra.mxu0 0
    %1444 = vmatprep.subr.bf16.mxu0 0
    %1445 = vmatpush1.bf16.msra.mxu0 0
    %1446 = vmatprep.mubr.bf16.mxu0 0
    %1447 = vmatmul.mubr.bf16.gmra.mrb[0].mxu0 %v1413
    %v1448 = vpop.f32.mrb[0].mxu0
    %v1449 = vadd.f32 0.0, %v1448
    %v1450 = vpop.f32.mrb[0].mxu0
    %v1451 = vadd.f32 0.0, %v1450
    %v1452 = vpop.f32.mrb[0].mxu0
    %v1453 = vpop.f32.mrb[0].mxu0
    %1454 = vdwg.mxu0
    %1455 = vmatprep.subr.bf16.mxu0 %v634
    %1456 = vmatpush1.bf16.msra.mxu0 %v633
    %1457 = vmatprep.subr.bf16.mxu0 %v638
    %1458 = vmatpush1.bf16.msra.mxu0 %v637
    %1459 = vmatprep.subr.bf16.mxu0 %v642
    %1460 = vmatpush1.bf16.msra.mxu0 %v641
    %1461 = vmatprep.subr.bf16.mxu0 %v646
    %1462 = vmatpush1.bf16.msra.mxu0 %v645
    %1463 = vmatprep.subr.bf16.mxu0 %v650
    %1464 = vmatpush1.bf16.msra.mxu0 %v649
    %1465 = vmatprep.subr.bf16.mxu0 %v654
    %1466 = vmatpush1.bf16.msra.mxu0 %v653
    %1467 = vmatprep.subr.bf16.mxu0 %v658
    %1468 = vmatpush1.bf16.msra.mxu0 %v657
    %1469 = vmatprep.subr.bf16.mxu0 %v662
    %1470 = vmatpush1.bf16.msra.mxu0 %v661
    %1471 = vmatprep.subr.bf16.mxu0 0
    %1472 = vmatpush1.bf16.msra.mxu0 0
    %1473 = vmatprep.subr.bf16.mxu0 0
    %1474 = vmatpush1.bf16.msra.mxu0 0
    %1475 = vmatprep.subr.bf16.mxu0 0
    %1476 = vmatpush1.bf16.msra.mxu0 0
    %1477 = vmatprep.subr.bf16.mxu0 0
    %1478 = vmatpush1.bf16.msra.mxu0 0
    %1479 = vmatprep.subr.bf16.mxu0 0
    %1480 = vmatpush1.bf16.msra.mxu0 0
    %1481 = vmatprep.subr.bf16.mxu0 0
    %1482 = vmatpush1.bf16.msra.mxu0 0
    %1483 = vmatprep.subr.bf16.mxu0 0
    %1484 = vmatpush1.bf16.msra.mxu0 0
    %1485 = vmatprep.subr.bf16.mxu0 0
    %1486 = vmatpush1.bf16.msra.mxu0 0
    %1487 = vmatprep.mubr.bf16.mxu0 0
    %1488 = vmatmul.mubr.bf16.gmra.mrb[0].mxu0 %v1413
    %v1489 = vpop.f32.mrb[0].mxu0
    %v1490 = vadd.f32 0.0, %v1489
    %v1491 = vpop.f32.mrb[0].mxu0
    %v1492 = vadd.f32 0.0, %v1491
    %v1493 = vpop.f32.mrb[0].mxu0
    %v1494 = vpop.f32.mrb[0].mxu0
    %1495 = vdwg.mxu0
    %v1496 = vadd.f32 %v1409, %v1449
    %v1497 = vadd.f32 %v1410, %v1451
    %v1498 = vadd.f32 %v1411, %v1490
    %v1499 = vadd.f32 %v1412, %v1492
    %v1500 = vxor.u32 %v1496, 2147483648
    %v1501 = vxor.u32 %v1497, 2147483648
    %v1502 = vxor.u32 %v1498, 2147483648
    %v1503 = vmul.f32 %v1500, 1.442695
    %v1504 = vpow.pop %v1503
    %v1505 = vmul.f32 %v1501, 1.442695
    %v1506 = vpow.pop %v1505
    %v1507 = vmul.f32 %v1502, 1.442695
    %v1508 = vpow.pop %v1507
    %v1509 = vadd.f32 %v1504, 1.0
    %v1510 = vadd.f32 %v1506, 1.0
    %v1511 = vadd.f32 %v1508, 1.0
    %v1512 = vrcp.pop %v1509
    %v1513 = vmul.f32 1.0, %v1512
    %v1514 = vrcp.pop %v1510
    %v1515 = vmul.f32 1.0, %v1514
    %v1516 = vrcp.pop %v1511
    %v1517 = vmul.f32 1.0, %v1516
    %v1518 = vtanh.pop %v1499
    %v1519 = vmul.f32 %v1515, %v1401
    %v1520 = vmul.f32 %v1513, %v1518
    %v1521 = vadd.f32 %v1519, %v1520
    %v1522 = vtanh.pop %v1521
    %v1523 = vmul.f32 %v1517, %v1522
    %s1524 = scalar_lea.vmem [#allocation3], 48
    %1525 = vst [vmem:[%s1524] sm:$0xff] %v1523
    %s1526 = smul.u32 7, 4
    %s1527 = smul.addr %s1526, 8
    %s1528 = scalar_lea.vmem [#allocation2], %s1527
    %v1529 = vld [vmem:[%s1528] sm:$0xff]
    %v1530 = vld [vmem:[%s1528 + $0x8] sm:$0xff]
    %v1531 = vld [vmem:[%s1528 + $0x10] sm:$0xff]
    %v1532 = vld [vmem:[%s1528 + $0x18] sm:$0xff]
    %v1533 = vpack.c.bf16 %v1523, %v1523
    %1534 = vmatprep.subr.bf16.mxu0 %v632
    %1535 = vmatpush1.bf16.msra.mxu0 %v631
    %1536 = vmatprep.subr.bf16.mxu0 %v636
    %1537 = vmatpush1.bf16.msra.mxu0 %v635
    %1538 = vmatprep.subr.bf16.mxu0 %v640
    %1539 = vmatpush1.bf16.msra.mxu0 %v639
    %1540 = vmatprep.subr.bf16.mxu0 %v644
    %1541 = vmatpush1.bf16.msra.mxu0 %v643
    %1542 = vmatprep.subr.bf16.mxu0 %v648
    %1543 = vmatpush1.bf16.msra.mxu0 %v647
    %1544 = vmatprep.subr.bf16.mxu0 %v652
    %1545 = vmatpush1.bf16.msra.mxu0 %v651
    %1546 = vmatprep.subr.bf16.mxu0 %v656
    %1547 = vmatpush1.bf16.msra.mxu0 %v655
    %1548 = vmatprep.subr.bf16.mxu0 %v660
    %1549 = vmatpush1.bf16.msra.mxu0 %v659
    %1550 = vmatprep.subr.bf16.mxu0 0
    %1551 = vmatpush1.bf16.msra.mxu0 0
    %1552 = vmatprep.subr.bf16.mxu0 0
    %1553 = vmatpush1.bf16.msra.mxu0 0
    %1554 = vmatprep.subr.bf16.mxu0 0
    %1555 = vmatpush1.bf16.msra.mxu0 0
    %1556 = vmatprep.subr.bf16.mxu0 0
    %1557 = vmatpush1.bf16.msra.mxu0 0
    %1558 = vmatprep.subr.bf16.mxu0 0
    %1559 = vmatpush1.bf16.msra.mxu0 0
    %1560 = vmatprep.subr.bf16.mxu0 0
    %1561 = vmatpush1.bf16.msra.mxu0 0
    %1562 = vmatprep.subr.bf16.mxu0 0
    %1563 = vmatpush1.bf16.msra.mxu0 0
    %1564 = vmatprep.subr.bf16.mxu0 0
    %1565 = vmatpush1.bf16.msra.mxu0 0
    %1566 = vmatprep.mubr.bf16.mxu0 0
    %1567 = vmatmul.mubr.bf16.gmra.mrb[0].mxu0 %v1533
    %v1568 = vpop.f32.mrb[0].mxu0
    %v1569 = vadd.f32 0.0, %v1568
    %v1570 = vpop.f32.mrb[0].mxu0
    %v1571 = vadd.f32 0.0, %v1570
    %v1572 = vpop.f32.mrb[0].mxu0
    %v1573 = vpop.f32.mrb[0].mxu0
    %1574 = vdwg.mxu0
    %1575 = vmatprep.subr.bf16.mxu0 %v634
    %1576 = vmatpush1.bf16.msra.mxu0 %v633
    %1577 = vmatprep.subr.bf16.mxu0 %v638
    %1578 = vmatpush1.bf16.msra.mxu0 %v637
    %1579 = vmatprep.subr.bf16.mxu0 %v642
    %1580 = vmatpush1.bf16.msra.mxu0 %v641
    %1581 = vmatprep.subr.bf16.mxu0 %v646
    %1582 = vmatpush1.bf16.msra.mxu0 %v645
    %1583 = vmatprep.subr.bf16.mxu0 %v650
    %1584 = vmatpush1.bf16.msra.mxu0 %v649
    %1585 = vmatprep.subr.bf16.mxu0 %v654
    %1586 = vmatpush1.bf16.msra.mxu0 %v653
    %1587 = vmatprep.subr.bf16.mxu0 %v658
    %1588 = vmatpush1.bf16.msra.mxu0 %v657
    %1589 = vmatprep.subr.bf16.mxu0 %v662
    %1590 = vmatpush1.bf16.msra.mxu0 %v661
    %1591 = vmatprep.subr.bf16.mxu0 0
    %1592 = vmatpush1.bf16.msra.mxu0 0
    %1593 = vmatprep.subr.bf16.mxu0 0
    %1594 = vmatpush1.bf16.msra.mxu0 0
    %1595 = vmatprep.subr.bf16.mxu0 0
    %1596 = vmatpush1.bf16.msra.mxu0 0
    %1597 = vmatprep.subr.bf16.mxu0 0
    %1598 = vmatpush1.bf16.msra.mxu0 0
    %1599 = vmatprep.subr.bf16.mxu0 0
    %1600 = vmatpush1.bf16.msra.mxu0 0
    %1601 = vmatprep.subr.bf16.mxu0 0
    %1602 = vmatpush1.bf16.msra.mxu0 0
    %1603 = vmatprep.subr.bf16.mxu0 0
    %1604 = vmatpush1.bf16.msra.mxu0 0
    %1605 = vmatprep.subr.bf16.mxu0 0
    %1606 = vmatpush1.bf16.msra.mxu0 0
    %1607 = vmatprep.mubr.bf16.mxu0 0
    %1608 = vmatmul.mubr.bf16.gmra.mrb[0].mxu0 %v1533
    %v1609 = vpop.f32.mrb[0].mxu0
    %v1610 = vadd.f32 0.0, %v1609
    %v1611 = vpop.f32.mrb[0].mxu0
    %v1612 = vadd.f32 0.0, %v1611
    %v1613 = vpop.f32.mrb[0].mxu0
    %v1614 = vpop.f32.mrb[0].mxu0
    %1615 = vdwg.mxu0
    %v1616 = vadd.f32 %v1529, %v1569
    %v1617 = vadd.f32 %v1530, %v1571
    %v1618 = vadd.f32 %v1531, %v1610
    %v1619 = vadd.f32 %v1532, %v1612
    %v1620 = vxor.u32 %v1616, 2147483648
    %v1621 = vxor.u32 %v1617, 2147483648
    %v1622 = vxor.u32 %v1618, 2147483648
    %v1623 = vmul.f32 %v1620, 1.442695
    %v1624 = vpow.pop %v1623
    %v1625 = vmul.f32 %v1621, 1.442695
    %v1626 = vpow.pop %v1625
    %v1627 = vmul.f32 %v1622, 1.442695
    %v1628 = vpow.pop %v1627
    %v1629 = vadd.f32 %v1624, 1.0
    %v1630 = vadd.f32 %v1626, 1.0
    %v1631 = vadd.f32 %v1628, 1.0
    %v1632 = vrcp.pop %v1629
    %v1633 = vmul.f32 1.0, %v1632
    %v1634 = vrcp.pop %v1630
    %v1635 = vmul.f32 1.0, %v1634
    %v1636 = vrcp.pop %v1631
    %v1637 = vmul.f32 1.0, %v1636
    %v1638 = vtanh.pop %v1619
    %v1639 = vmul.f32 %v1635, %v1521
    %v1640 = vmul.f32 %v1633, %v1638
    %v1641 = vadd.f32 %v1639, %v1640
    %v1642 = vtanh.pop %v1641
    %v1643 = vmul.f32 %v1637, %v1642
    %s1644 = scalar_lea.vmem [#allocation3], 56
    %1645 = vst [vmem:[%s1644] sm:$0xff] %v1643
    %1646 = vst [vmem:[#allocation4] sm:$0xff] %v1643
    %1647 = vst [vmem:[#allocation5] sm:$0xff] %v1641
    %v1648 = vld [vmem:[#allocation3] sm:$0xff]
    %v1649 = vld [vmem:[#allocation3 + $0x8] sm:$0xff]
    %v1650 = vld [vmem:[#allocation3 + $0x10] sm:$0xff]
    %v1651 = vld [vmem:[#allocation3 + $0x18] sm:$0xff]
    %v1652 = vld [vmem:[#allocation3 + $0x20] sm:$0xff]
    %v1653 = vld [vmem:[#allocation3 + $0x28] sm:$0xff]
    %v1654 = vld [vmem:[#allocation3 + $0x30] sm:$0xff]
    %v1655 = vld [vmem:[#allocation3 + $0x38] sm:$0xff]
    %v1656 = vpack.c.bf16 %v1649, %v1648
    %v1657 = vpack.c.bf16 %v1651, %v1650
    %v1658 = vpack.c.bf16 %v1653, %v1652
    %v1659 = vpack.c.bf16 %v1655, %v1654
    %v1660 = vld [vmem:[#allocation6] sm:$0xff]
    %v1661 = vld [vmem:[#allocation6 + $0x8] sm:$0xff]
    %v1662 = vld [vmem:[#allocation6 + $0x10] sm:$0xff]
    %v1663 = vld [vmem:[#allocation6 + $0x18] sm:$0xff]
    %v1664 = vld [vmem:[#allocation6 + $0x20] sm:$0xff]
    %v1665 = vld [vmem:[#allocation6 + $0x28] sm:$0xff]
    %v1666 = vld [vmem:[#allocation6 + $0x30] sm:$0xff]
    %v1667 = vld [vmem:[#allocation6 + $0x38] sm:$0xff]
    %v1668 = vld [vmem:[#allocation6 + $0x40] sm:$0xff]
    %v1669 = vld [vmem:[#allocation6 + $0x48] sm:$0xff]
    %v1670 = vld [vmem:[#allocation6 + $0x50] sm:$0xff]
    %v1671 = vld [vmem:[#allocation6 + $0x58] sm:$0xff]
    %v1672 = vld [vmem:[#allocation6 + $0x60] sm:$0xff]
    %v1673 = vld [vmem:[#allocation6 + $0x68] sm:$0xff]
    %v1674 = vld [vmem:[#allocation6 + $0x70] sm:$0xff]
    %v1675 = vld [vmem:[#allocation6 + $0x78] sm:$0xff]
    %v1676 = vld [vmem:[#allocation6 + $0x80] sm:$0xff]
    %v1677 = vld [vmem:[#allocation6 + $0x88] sm:$0xff]
    %v1678 = vld [vmem:[#allocation6 + $0x90] sm:$0xff]
    %v1679 = vld [vmem:[#allocation6 + $0x98] sm:$0xff]
    %v1680 = vld [vmem:[#allocation6 + $0xa0] sm:$0xff]
    %v1681 = vld [vmem:[#allocation6 + $0xa8] sm:$0xff]
    %v1682 = vld [vmem:[#allocation6 + $0xb0] sm:$0xff]
    %v1683 = vld [vmem:[#allocation6 + $0xb8] sm:$0xff]
    %v1684 = vld [vmem:[#allocation6 + $0xc0] sm:$0xff]
    %v1685 = vld [vmem:[#allocation6 + $0xc8] sm:$0xff]
    %v1686 = vld [vmem:[#allocation6 + $0xd0] sm:$0xff]
    %v1687 = vld [vmem:[#allocation6 + $0xd8] sm:$0xff]
    %v1688 = vld [vmem:[#allocation6 + $0xe0] sm:$0xff]
    %v1689 = vld [vmem:[#allocation6 + $0xe8] sm:$0xff]
    %v1690 = vld [vmem:[#allocation6 + $0xf0] sm:$0xff]
    %v1691 = vld [vmem:[#allocation6 + $0xf8] sm:$0xff]
    %s1692 = scalar_lea.vmem %s4, 4
    %v1693 = vld [vmem:[%s1692] sm:$0xf]
    %v1695 = vlaneseq
    %v1696 = vshrl.u32 %v1695, 7
    %v1697 = vsub.s32 0, %v1696
    %v1698 = vrot.slane %v1693, %v1697
    %v1699 = vlaneseq
    %v1700 = vshrl.u32 %v1699, 7
    %v1701 = vsub.s32 1, %v1700
    %v1702 = vrot.slane %v1693, %v1701
    %v1703 = vlaneseq
    %v1704 = vshrl.u32 %v1703, 7
    %v1705 = vsub.s32 2, %v1704
    %v1706 = vrot.slane %v1693, %v1705
    %v1707 = vlaneseq
    %v1708 = vshrl.u32 %v1707, 7
    %v1709 = vsub.s32 3, %v1708
    %v1710 = vrot.slane %v1693, %v1709
    %v1747 = vunpack.c.l.b16 %v1660
    %v1748 = vunpack.c.h.b16 %v1660
    %v1749 = vunpack.c.l.b16 %v1661
    %v1750 = vunpack.c.h.b16 %v1661
    %v1751 = vunpack.c.l.b16 %v1662
    %v1752 = vunpack.c.h.b16 %v1662
    %v1753 = vunpack.c.l.b16 %v1663
    %v1754 = vunpack.c.h.b16 %v1663
    %v1755 = vunpack.c.l.b16 %v1664
    %v1756 = vunpack.c.h.b16 %v1664
    %v1757 = vunpack.c.l.b16 %v1665
    %v1758 = vunpack.c.h.b16 %v1665
    %v1759 = vunpack.c.l.b16 %v1666
    %v1760 = vunpack.c.h.b16 %v1666
    %v1761 = vunpack.c.l.b16 %v1667
    %v1762 = vunpack.c.h.b16 %v1667
    %v1763 = vunpack.c.l.b16 %v1668
    %v1764 = vunpack.c.h.b16 %v1668
    %v1765 = vunpack.c.l.b16 %v1669
    %v1766 = vunpack.c.h.b16 %v1669
    %v1767 = vunpack.c.l.b16 %v1670
    %v1768 = vunpack.c.h.b16 %v1670
    %v1769 = vunpack.c.l.b16 %v1671
    %v1770 = vunpack.c.h.b16 %v1671
    %v1771 = vunpack.c.l.b16 %v1672
    %v1772 = vunpack.c.h.b16 %v1672
    %v1773 = vunpack.c.l.b16 %v1673
    %v1774 = vunpack.c.h.b16 %v1673
    %v1775 = vunpack.c.l.b16 %v1674
    %v1776 = vunpack.c.h.b16 %v1674
    %v1777 = vunpack.c.l.b16 %v1675
    %v1778 = vunpack.c.h.b16 %v1675
    %v1779 = vunpack.c.l.b16 %v1676
    %v1780 = vunpack.c.h.b16 %v1676
    %v1781 = vunpack.c.l.b16 %v1677
    %v1782 = vunpack.c.h.b16 %v1677
    %v1783 = vunpack.c.l.b16 %v1678
    %v1784 = vunpack.c.h.b16 %v1678
    %v1785 = vunpack.c.l.b16 %v1679
    %v1786 = vunpack.c.h.b16 %v1679
    %v1787 = vunpack.c.l.b16 %v1680
    %v1788 = vunpack.c.h.b16 %v1680
    %v1789 = vunpack.c.l.b16 %v1681
    %v1790 = vunpack.c.h.b16 %v1681
    %v1791 = vunpack.c.l.b16 %v1682
    %v1792 = vunpack.c.h.b16 %v1682
    %v1793 = vunpack.c.l.b16 %v1683
    %v1794 = vunpack.c.h.b16 %v1683
    %v1795 = vunpack.c.l.b16 %v1684
    %v1796 = vunpack.c.h.b16 %v1684
    %v1797 = vunpack.c.l.b16 %v1685
    %v1798 = vunpack.c.h.b16 %v1685
    %v1799 = vunpack.c.l.b16 %v1686
    %v1800 = vunpack.c.h.b16 %v1686
    %v1801 = vunpack.c.l.b16 %v1687
    %v1802 = vunpack.c.h.b16 %v1687
    %v1803 = vunpack.c.l.b16 %v1688
    %v1804 = vunpack.c.h.b16 %v1688
    %v1805 = vunpack.c.l.b16 %v1689
    %v1806 = vunpack.c.h.b16 %v1689
    %v1807 = vunpack.c.l.b16 %v1690
    %v1808 = vunpack.c.h.b16 %v1690
    %v1809 = vunpack.c.l.b16 %v1691
    %v1810 = vunpack.c.h.b16 %v1691
    %v1811 = vpack.c.b16 %v1751, %v1747
    %v1812 = vpack.c.b16 %v1752, %v1748
    %v1813 = vpack.c.b16 %v1753, %v1749
    %v1814 = vpack.c.b16 %v1754, %v1750
    %v1815 = vpack.c.b16 %v1759, %v1755
    %v1816 = vpack.c.b16 %v1760, %v1756
    %v1817 = vpack.c.b16 %v1761, %v1757
    %v1818 = vpack.c.b16 %v1762, %v1758
    %v1819 = vpack.c.b16 %v1767, %v1763
    %v1820 = vpack.c.b16 %v1768, %v1764
    %v1821 = vpack.c.b16 %v1769, %v1765
    %v1822 = vpack.c.b16 %v1770, %v1766
    %v1823 = vpack.c.b16 %v1775, %v1771
    %v1824 = vpack.c.b16 %v1776, %v1772
    %v1825 = vpack.c.b16 %v1777, %v1773
    %v1826 = vpack.c.b16 %v1778, %v1774
    %v1827 = vpack.c.b16 %v1783, %v1779
    %v1828 = vpack.c.b16 %v1784, %v1780
    %v1829 = vpack.c.b16 %v1785, %v1781
    %v1830 = vpack.c.b16 %v1786, %v1782
    %v1831 = vpack.c.b16 %v1791, %v1787
    %v1832 = vpack.c.b16 %v1792, %v1788
    %v1833 = vpack.c.b16 %v1793, %v1789
    %v1834 = vpack.c.b16 %v1794, %v1790
    %v1835 = vpack.c.b16 %v1799, %v1795
    %v1836 = vpack.c.b16 %v1800, %v1796
    %v1837 = vpack.c.b16 %v1801, %v1797
    %v1838 = vpack.c.b16 %v1802, %v1798
    %v1839 = vpack.c.b16 %v1807, %v1803
    %v1840 = vpack.c.b16 %v1808, %v1804
    %v1841 = vpack.c.b16 %v1809, %v1805
    %v1842 = vpack.c.b16 %v1810, %v1806
    %1875 = vmatprep.subr.bf16.mxu0 %v1812
    %1876 = vmatpush1.bf16.msra.mxu0 %v1811
    %1877 = vmatprep.subr.bf16.mxu0 %v1816
    %1878 = vmatpush1.bf16.msra.mxu0 %v1815
    %1879 = vmatprep.subr.bf16.mxu0 %v1820
    %1880 = vmatpush1.bf16.msra.mxu0 %v1819
    %1881 = vmatprep.subr.bf16.mxu0 %v1824
    %1882 = vmatpush1.bf16.msra.mxu0 %v1823
    %1883 = vmatprep.subr.bf16.mxu0 %v1828
    %1884 = vmatpush1.bf16.msra.mxu0 %v1827
    %1885 = vmatprep.subr.bf16.mxu0 %v1832
    %1886 = vmatpush1.bf16.msra.mxu0 %v1831
    %1887 = vmatprep.subr.bf16.mxu0 %v1836
    %1888 = vmatpush1.bf16.msra.mxu0 %v1835
    %1889 = vmatprep.subr.bf16.mxu0 %v1840
    %1890 = vmatpush1.bf16.msra.mxu0 %v1839
    %1891 = vmatprep.subr.bf16.mxu0 0
    %1892 = vmatpush1.bf16.msra.mxu0 0
    %1893 = vmatprep.subr.bf16.mxu0 0
    %1894 = vmatpush1.bf16.msra.mxu0 0
    %1895 = vmatprep.subr.bf16.mxu0 0
    %1896 = vmatpush1.bf16.msra.mxu0 0
    %1897 = vmatprep.subr.bf16.mxu0 0
    %1898 = vmatpush1.bf16.msra.mxu0 0
    %1899 = vmatprep.subr.bf16.mxu0 0
    %1900 = vmatpush1.bf16.msra.mxu0 0
    %1901 = vmatprep.subr.bf16.mxu0 0
    %1902 = vmatpush1.bf16.msra.mxu0 0
    %1903 = vmatprep.subr.bf16.mxu0 0
    %1904 = vmatpush1.bf16.msra.mxu0 0
    %1905 = vmatprep.subr.bf16.mxu0 0
    %1906 = vmatpush1.bf16.msra.mxu0 0
    %1907 = vmatprep.mubr.bf16.mxu0 0
    %1908 = vmatmul.mubr.bf16.gmra.mrb[0].mxu0 %v1656
    %v1909 = vpop.f32.mrb[0].mxu0
    %v1910 = vadd.f32 %v1698, %v1909
    %v1911 = vpop.f32.mrb[0].mxu0
    %v1912 = vadd.f32 %v1702, %v1911
    %v1913 = vpop.f32.mrb[0].mxu0
    %v1914 = vadd.f32 %v1698, %v1913
    %v1915 = vpop.f32.mrb[0].mxu0
    %v1916 = vadd.f32 %v1702, %v1915
    %1917 = vmatprep.mubr.bf16.mxu0 0
    %1918 = vmatmul.mubr.bf16.gmra.mrb[0].mxu0 %v1657
    %v1919 = vpop.f32.mrb[0].mxu0
    %v1920 = vadd.f32 %v1698, %v1919
    %v1921 = vpop.f32.mrb[0].mxu0
    %v1922 = vadd.f32 %v1702, %v1921
    %v1923 = vpop.f32.mrb[0].mxu0
    %v1924 = vadd.f32 %v1698, %v1923
    %v1925 = vpop.f32.mrb[0].mxu0
    %v1926 = vadd.f32 %v1702, %v1925
    %1927 = vmatprep.mubr.bf16.mxu0 0
    %1928 = vmatmul.mubr.bf16.gmra.mrb[0].mxu0 %v1658
    %v1929 = vpop.f32.mrb[0].mxu0
    %v1930 = vadd.f32 %v1698, %v1929
    %v1931 = vpop.f32.mrb[0].mxu0
    %v1932 = vadd.f32 %v1702, %v1931
    %v1933 = vpop.f32.mrb[0].mxu0
    %v1934 = vadd.f32 %v1698, %v1933
    %v1935 = vpop.f32.mrb[0].mxu0
    %v1936 = vadd.f32 %v1702, %v1935
    %1937 = vmatprep.mubr.bf16.mxu0 0
    %1938 = vmatmul.mubr.bf16.gmra.mrb[0].mxu0 %v1659
    %v1939 = vpop.f32.mrb[0].mxu0
    %v1940 = vadd.f32 %v1698, %v1939
    %v1941 = vpop.f32.mrb[0].mxu0
    %v1942 = vadd.f32 %v1702, %v1941
    %v1943 = vpop.f32.mrb[0].mxu0
    %v1944 = vadd.f32 %v1698, %v1943
    %v1945 = vpop.f32.mrb[0].mxu0
    %v1946 = vadd.f32 %v1702, %v1945
    %1947 = vdwg.mxu0
    %1948 = vmatprep.subr.bf16.mxu0 %v1814
    %1949 = vmatpush1.bf16.msra.mxu0 %v1813
    %1950 = vmatprep.subr.bf16.mxu0 %v1818
    %1951 = vmatpush1.bf16.msra.mxu0 %v1817
    %1952 = vmatprep.subr.bf16.mxu0 %v1822
    %1953 = vmatpush1.bf16.msra.mxu0 %v1821
    %1954 = vmatprep.subr.bf16.mxu0 %v1826
    %1955 = vmatpush1.bf16.msra.mxu0 %v1825
    %1956 = vmatprep.subr.bf16.mxu0 %v1830
    %1957 = vmatpush1.bf16.msra.mxu0 %v1829
    %1958 = vmatprep.subr.bf16.mxu0 %v1834
    %1959 = vmatpush1.bf16.msra.mxu0 %v1833
    %1960 = vmatprep.subr.bf16.mxu0 %v1838
    %1961 = vmatpush1.bf16.msra.mxu0 %v1837
    %1962 = vmatprep.subr.bf16.mxu0 %v1842
    %1963 = vmatpush1.bf16.msra.mxu0 %v1841
    %1964 = vmatprep.subr.bf16.mxu0 0
    %1965 = vmatpush1.bf16.msra.mxu0 0
    %1966 = vmatprep.subr.bf16.mxu0 0
    %1967 = vmatpush1.bf16.msra.mxu0 0
    %1968 = vmatprep.subr.bf16.mxu0 0
    %1969 = vmatpush1.bf16.msra.mxu0 0
    %1970 = vmatprep.subr.bf16.mxu0 0
    %1971 = vmatpush1.bf16.msra.mxu0 0
    %1972 = vmatprep.subr.bf16.mxu0 0
    %1973 = vmatpush1.bf16.msra.mxu0 0
    %1974 = vmatprep.subr.bf16.mxu0 0
    %1975 = vmatpush1.bf16.msra.mxu0 0
    %1976 = vmatprep.subr.bf16.mxu0 0
    %1977 = vmatpush1.bf16.msra.mxu0 0
    %1978 = vmatprep.subr.bf16.mxu0 0
    %1979 = vmatpush1.bf16.msra.mxu0 0
    %1980 = vmatprep.mubr.bf16.mxu0 0
    %1981 = vmatmul.mubr.bf16.gmra.mrb[0].mxu0 %v1656
    %v1982 = vpop.f32.mrb[0].mxu0
    %v1983 = vadd.f32 %v1706, %v1982
    %v1984 = vpop.f32.mrb[0].mxu0
    %v1985 = vadd.f32 %v1710, %v1984
    %v1986 = vpop.f32.mrb[0].mxu0
    %v1987 = vadd.f32 %v1706, %v1986
    %v1988 = vpop.f32.mrb[0].mxu0
    %v1989 = vadd.f32 %v1710, %v1988
    %1990 = vmatprep.mubr.bf16.mxu0 0
    %1991 = vmatmul.mubr.bf16.gmra.mrb[0].mxu0 %v1657
    %v1992 = vpop.f32.mrb[0].mxu0
    %v1993 = vadd.f32 %v1706, %v1992
    %v1994 = vpop.f32.mrb[0].mxu0
    %v1995 = vadd.f32 %v1710, %v1994
    %v1996 = vpop.f32.mrb[0].mxu0
    %v1997 = vadd.f32 %v1706, %v1996
    %v1998 = vpop.f32.mrb[0].mxu0
    %v1999 = vadd.f32 %v1710, %v1998
    %2000 = vmatprep.mubr.bf16.mxu0 0
    %2001 = vmatmul.mubr.bf16.gmra.mrb[0].mxu0 %v1658
    %v2002 = vpop.f32.mrb[0].mxu0
    %v2003 = vadd.f32 %v1706, %v2002
    %v2004 = vpop.f32.mrb[0].mxu0
    %v2005 = vadd.f32 %v1710, %v2004
    %v2006 = vpop.f32.mrb[0].mxu0
    %v2007 = vadd.f32 %v1706, %v2006
    %v2008 = vpop.f32.mrb[0].mxu0
    %v2009 = vadd.f32 %v1710, %v2008
    %2010 = vmatprep.mubr.bf16.mxu0 0
    %2011 = vmatmul.mubr.bf16.gmra.mrb[0].mxu0 %v1659
    %v2012 = vpop.f32.mrb[0].mxu0
    %v2013 = vadd.f32 %v1706, %v2012
    %v2014 = vpop.f32.mrb[0].mxu0
    %v2015 = vadd.f32 %v1710, %v2014
    %v2016 = vpop.f32.mrb[0].mxu0
    %v2017 = vadd.f32 %v1706, %v2016
    %v2018 = vpop.f32.mrb[0].mxu0
    %v2019 = vadd.f32 %v1710, %v2018
    %2020 = vdwg.mxu0
    %2021 = vst [vmem:[#allocation2] sm:$0xff] %v1910
    %2022 = vst [vmem:[#allocation2 + $0x8] sm:$0xff] %v1912
    %2023 = vst [vmem:[#allocation2 + $0x10] sm:$0xff] %v1983
    %2024 = vst [vmem:[#allocation2 + $0x18] sm:$0xff] %v1985
    %2025 = vst [vmem:[#allocation2 + $0x20] sm:$0xff] %v1914
    %2026 = vst [vmem:[#allocation2 + $0x28] sm:$0xff] %v1916
    %2027 = vst [vmem:[#allocation2 + $0x30] sm:$0xff] %v1987
    %2028 = vst [vmem:[#allocation2 + $0x38] sm:$0xff] %v1989
    %2029 = vst [vmem:[#allocation2 + $0x40] sm:$0xff] %v1920
    %2030 = vst [vmem:[#allocation2 + $0x48] sm:$0xff] %v1922
    %2031 = vst [vmem:[#allocation2 + $0x50] sm:$0xff] %v1993
    %2032 = vst [vmem:[#allocation2 + $0x58] sm:$0xff] %v1995
    %2033 = vst [vmem:[#allocation2 + $0x60] sm:$0xff] %v1924
    %2034 = vst [vmem:[#allocation2 + $0x68] sm:$0xff] %v1926
    %2035 = vst [vmem:[#allocation2 + $0x70] sm:$0xff] %v1997
    %2036 = vst [vmem:[#allocation2 + $0x78] sm:$0xff] %v1999
    %2037 = vst [vmem:[#allocation2 + $0x80] sm:$0xff] %v1930
    %2038 = vst [vmem:[#allocation2 + $0x88] sm:$0xff] %v1932
    %2039 = vst [vmem:[#allocation2 + $0x90] sm:$0xff] %v2003
    %2040 = vst [vmem:[#allocation2 + $0x98] sm:$0xff] %v2005
    %2041 = vst [vmem:[#allocation2 + $0xa0] sm:$0xff] %v1934
    %2042 = vst [vmem:[#allocation2 + $0xa8] sm:$0xff] %v1936
    %2043 = vst [vmem:[#allocation2 + $0xb0] sm:$0xff] %v2007
    %2044 = vst [vmem:[#allocation2 + $0xb8] sm:$0xff] %v2009
    %2045 = vst [vmem:[#allocation2 + $0xc0] sm:$0xff] %v1940
    %2046 = vst [vmem:[#allocation2 + $0xc8] sm:$0xff] %v1942
    %2047 = vst [vmem:[#allocation2 + $0xd0] sm:$0xff] %v2013
    %2048 = vst [vmem:[#allocation2 + $0xd8] sm:$0xff] %v2015
    %2049 = vst [vmem:[#allocation2 + $0xe0] sm:$0xff] %v1944
    %2050 = vst [vmem:[#allocation2 + $0xe8] sm:$0xff] %v1946
    %2051 = vst [vmem:[#allocation2 + $0xf0] sm:$0xff] %v2017
    %2052 = vst [vmem:[#allocation2 + $0xf8] sm:$0xff] %v2019
    %s2053 = scalar_lea.vmem [#allocation8], 256
    %v2054 = vld [vmem:[%s2053] sm:$0xff]
    %v2055 = vld [vmem:[%s2053 + $0x8] sm:$0xff]
    %v2056 = vld [vmem:[%s2053 + $0x10] sm:$0xff]
    %v2057 = vld [vmem:[%s2053 + $0x18] sm:$0xff]
    %v2058 = vld [vmem:[%s2053 + $0x20] sm:$0xff]
    %v2059 = vld [vmem:[%s2053 + $0x28] sm:$0xff]
    %v2060 = vld [vmem:[%s2053 + $0x30] sm:$0xff]
    %v2061 = vld [vmem:[%s2053 + $0x38] sm:$0xff]
    %v2062 = vld [vmem:[%s2053 + $0x40] sm:$0xff]
    %v2063 = vld [vmem:[%s2053 + $0x48] sm:$0xff]
    %v2064 = vld [vmem:[%s2053 + $0x50] sm:$0xff]
    %v2065 = vld [vmem:[%s2053 + $0x58] sm:$0xff]
    %v2066 = vld [vmem:[%s2053 + $0x60] sm:$0xff]
    %v2067 = vld [vmem:[%s2053 + $0x68] sm:$0xff]
    %v2068 = vld [vmem:[%s2053 + $0x70] sm:$0xff]
    %v2069 = vld [vmem:[%s2053 + $0x78] sm:$0xff]
    %v2070 = vld [vmem:[%s2053 + $0x80] sm:$0xff]
    %v2071 = vld [vmem:[%s2053 + $0x88] sm:$0xff]
    %v2072 = vld [vmem:[%s2053 + $0x90] sm:$0xff]
    %v2073 = vld [vmem:[%s2053 + $0x98] sm:$0xff]
    %v2074 = vld [vmem:[%s2053 + $0xa0] sm:$0xff]
    %v2075 = vld [vmem:[%s2053 + $0xa8] sm:$0xff]
    %v2076 = vld [vmem:[%s2053 + $0xb0] sm:$0xff]
    %v2077 = vld [vmem:[%s2053 + $0xb8] sm:$0xff]
    %v2078 = vld [vmem:[%s2053 + $0xc0] sm:$0xff]
    %v2079 = vld [vmem:[%s2053 + $0xc8] sm:$0xff]
    %v2080 = vld [vmem:[%s2053 + $0xd0] sm:$0xff]
    %v2081 = vld [vmem:[%s2053 + $0xd8] sm:$0xff]
    %v2082 = vld [vmem:[%s2053 + $0xe0] sm:$0xff]
    %v2083 = vld [vmem:[%s2053 + $0xe8] sm:$0xff]
    %v2084 = vld [vmem:[%s2053 + $0xf0] sm:$0xff]
    %v2085 = vld [vmem:[%s2053 + $0xf8] sm:$0xff]
    %s2086 = scalar_lea.vmem [#allocation4], 8
    %v2087 = vld [vmem:[%s2086] sm:$0xff]
    %s2088 = scalar_lea.vmem [#allocation5], 8
    %v2089 = vld [vmem:[%s2088] sm:$0xff]
    %v2090 = vld [vmem:[%s529] sm:$0xff]
    %v2091 = vld [vmem:[%s529 + $0x8] sm:$0xff]
    %v2092 = vld [vmem:[%s529 + $0x10] sm:$0xff]
    %v2093 = vld [vmem:[%s529 + $0x18] sm:$0xff]
    %v2094 = vpack.c.bf16 %v2087, %v2087
    %v2127 = vunpack.c.l.b16 %v2054
    %v2128 = vunpack.c.h.b16 %v2054
    %v2129 = vunpack.c.l.b16 %v2055
    %v2130 = vunpack.c.h.b16 %v2055
    %v2131 = vunpack.c.l.b16 %v2056
    %v2132 = vunpack.c.h.b16 %v2056
    %v2133 = vunpack.c.l.b16 %v2057
    %v2134 = vunpack.c.h.b16 %v2057
    %v2135 = vunpack.c.l.b16 %v2058
    %v2136 = vunpack.c.h.b16 %v2058
    %v2137 = vunpack.c.l.b16 %v2059
    %v2138 = vunpack.c.h.b16 %v2059
    %v2139 = vunpack.c.l.b16 %v2060
    %v2140 = vunpack.c.h.b16 %v2060
    %v2141 = vunpack.c.l.b16 %v2061
    %v2142 = vunpack.c.h.b16 %v2061
    %v2143 = vunpack.c.l.b16 %v2062
    %v2144 = vunpack.c.h.b16 %v2062
    %v2145 = vunpack.c.l.b16 %v2063
    %v2146 = vunpack.c.h.b16 %v2063
    %v2147 = vunpack.c.l.b16 %v2064
    %v2148 = vunpack.c.h.b16 %v2064
    %v2149 = vunpack.c.l.b16 %v2065
    %v2150 = vunpack.c.h.b16 %v2065
    %v2151 = vunpack.c.l.b16 %v2066
    %v2152 = vunpack.c.h.b16 %v2066
    %v2153 = vunpack.c.l.b16 %v2067
    %v2154 = vunpack.c.h.b16 %v2067
    %v2155 = vunpack.c.l.b16 %v2068
    %v2156 = vunpack.c.h.b16 %v2068
    %v2157 = vunpack.c.l.b16 %v2069
    %v2158 = vunpack.c.h.b16 %v2069
    %v2159 = vunpack.c.l.b16 %v2070
    %v2160 = vunpack.c.h.b16 %v2070
    %v2161 = vunpack.c.l.b16 %v2071
    %v2162 = vunpack.c.h.b16 %v2071
    %v2163 = vunpack.c.l.b16 %v2072
    %v2164 = vunpack.c.h.b16 %v2072
    %v2165 = vunpack.c.l.b16 %v2073
    %v2166 = vunpack.c.h.b16 %v2073
    %v2167 = vunpack.c.l.b16 %v2074
    %v2168 = vunpack.c.h.b16 %v2074
    %v2169 = vunpack.c.l.b16 %v2075
    %v2170 = vunpack.c.h.b16 %v2075
    %v2171 = vunpack.c.l.b16 %v2076
    %v2172 = vunpack.c.h.b16 %v2076
    %v2173 = vunpack.c.l.b16 %v2077
    %v2174 = vunpack.c.h.b16 %v2077
    %v2175 = vunpack.c.l.b16 %v2078
    %v2176 = vunpack.c.h.b16 %v2078
    %v2177 = vunpack.c.l.b16 %v2079
    %v2178 = vunpack.c.h.b16 %v2079
    %v2179 = vunpack.c.l.b16 %v2080
    %v2180 = vunpack.c.h.b16 %v2080
    %v2181 = vunpack.c.l.b16 %v2081
    %v2182 = vunpack.c.h.b16 %v2081
    %v2183 = vunpack.c.l.b16 %v2082
    %v2184 = vunpack.c.h.b16 %v2082
    %v2185 = vunpack.c.l.b16 %v2083
    %v2186 = vunpack.c.h.b16 %v2083
    %v2187 = vunpack.c.l.b16 %v2084
    %v2188 = vunpack.c.h.b16 %v2084
    %v2189 = vunpack.c.l.b16 %v2085
    %v2190 = vunpack.c.h.b16 %v2085
    %v2191 = vpack.c.b16 %v2131, %v2127
    %v2192 = vpack.c.b16 %v2132, %v2128
    %v2193 = vpack.c.b16 %v2133, %v2129
    %v2194 = vpack.c.b16 %v2134, %v2130
    %v2195 = vpack.c.b16 %v2139, %v2135
    %v2196 = vpack.c.b16 %v2140, %v2136
    %v2197 = vpack.c.b16 %v2141, %v2137
    %v2198 = vpack.c.b16 %v2142, %v2138
    %v2199 = vpack.c.b16 %v2147, %v2143
    %v2200 = vpack.c.b16 %v2148, %v2144
    %v2201 = vpack.c.b16 %v2149, %v2145
    %v2202 = vpack.c.b16 %v2150, %v2146
    %v2203 = vpack.c.b16 %v2155, %v2151
    %v2204 = vpack.c.b16 %v2156, %v2152
    %v2205 = vpack.c.b16 %v2157, %v2153
    %v2206 = vpack.c.b16 %v2158, %v2154
    %v2207 = vpack.c.b16 %v2163, %v2159
    %v2208 = vpack.c.b16 %v2164, %v2160
    %v2209 = vpack.c.b16 %v2165, %v2161
    %v2210 = vpack.c.b16 %v2166, %v2162
    %v2211 = vpack.c.b16 %v2171, %v2167
    %v2212 = vpack.c.b16 %v2172, %v2168
    %v2213 = vpack.c.b16 %v2173, %v2169
    %v2214 = vpack.c.b16 %v2174, %v2170
    %v2215 = vpack.c.b16 %v2179, %v2175
    %v2216 = vpack.c.b16 %v2180, %v2176
    %v2217 = vpack.c.b16 %v2181, %v2177
    %v2218 = vpack.c.b16 %v2182, %v2178
    %v2219 = vpack.c.b16 %v2187, %v2183
    %v2220 = vpack.c.b16 %v2188, %v2184
    %v2221 = vpack.c.b16 %v2189, %v2185
    %v2222 = vpack.c.b16 %v2190, %v2186
    %2255 = vmatprep.subr.bf16.mxu0 %v2192
    %2256 = vmatpush1.bf16.msra.mxu0 %v2191
    %2257 = vmatprep.subr.bf16.mxu0 %v2196
    %2258 = vmatpush1.bf16.msra.mxu0 %v2195
    %2259 = vmatprep.subr.bf16.mxu0 %v2200
    %2260 = vmatpush1.bf16.msra.mxu0 %v2199
    %2261 = vmatprep.subr.bf16.mxu0 %v2204
    %2262 = vmatpush1.bf16.msra.mxu0 %v2203
    %2263 = vmatprep.subr.bf16.mxu0 %v2208
    %2264 = vmatpush1.bf16.msra.mxu0 %v2207
    %2265 = vmatprep.subr.bf16.mxu0 %v2212
    %2266 = vmatpush1.bf16.msra.mxu0 %v2211
    %2267 = vmatprep.subr.bf16.mxu0 %v2216
    %2268 = vmatpush1.bf16.msra.mxu0 %v2215
    %2269 = vmatprep.subr.bf16.mxu0 %v2220
    %2270 = vmatpush1.bf16.msra.mxu0 %v2219
    %2271 = vmatprep.subr.bf16.mxu0 0
    %2272 = vmatpush1.bf16.msra.mxu0 0
    %2273 = vmatprep.subr.bf16.mxu0 0
    %2274 = vmatpush1.bf16.msra.mxu0 0
    %2275 = vmatprep.subr.bf16.mxu0 0
    %2276 = vmatpush1.bf16.msra.mxu0 0
    %2277 = vmatprep.subr.bf16.mxu0 0
    %2278 = vmatpush1.bf16.msra.mxu0 0
    %2279 = vmatprep.subr.bf16.mxu0 0
    %2280 = vmatpush1.bf16.msra.mxu0 0
    %2281 = vmatprep.subr.bf16.mxu0 0
    %2282 = vmatpush1.bf16.msra.mxu0 0
    %2283 = vmatprep.subr.bf16.mxu0 0
    %2284 = vmatpush1.bf16.msra.mxu0 0
    %2285 = vmatprep.subr.bf16.mxu0 0
    %2286 = vmatpush1.bf16.msra.mxu0 0
    %2287 = vmatprep.mubr.bf16.mxu0 0
    %2288 = vmatmul.mubr.bf16.gmra.mrb[0].mxu0 %v2094
    %v2289 = vpop.f32.mrb[0].mxu0
    %v2290 = vadd.f32 0.0, %v2289
    %v2291 = vpop.f32.mrb[0].mxu0
    %v2292 = vadd.f32 0.0, %v2291
    %v2293 = vpop.f32.mrb[0].mxu0
    %v2294 = vpop.f32.mrb[0].mxu0
    %2295 = vdwg.mxu0
    %2296 = vmatprep.subr.bf16.mxu0 %v2194
    %2297 = vmatpush1.bf16.msra.mxu0 %v2193
    %2298 = vmatprep.subr.bf16.mxu0 %v2198
    %2299 = vmatpush1.bf16.msra.mxu0 %v2197
    %2300 = vmatprep.subr.bf16.mxu0 %v2202
    %2301 = vmatpush1.bf16.msra.mxu0 %v2201
    %2302 = vmatprep.subr.bf16.mxu0 %v2206
    %2303 = vmatpush1.bf16.msra.mxu0 %v2205
    %2304 = vmatprep.subr.bf16.mxu0 %v2210
    %2305 = vmatpush1.bf16.msra.mxu0 %v2209
    %2306 = vmatprep.subr.bf16.mxu0 %v2214
    %2307 = vmatpush1.bf16.msra.mxu0 %v2213
    %2308 = vmatprep.subr.bf16.mxu0 %v2218
    %2309 = vmatpush1.bf16.msra.mxu0 %v2217
    %2310 = vmatprep.subr.bf16.mxu0 %v2222
    %2311 = vmatpush1.bf16.msra.mxu0 %v2221
    %2312 = vmatprep.subr.bf16.mxu0 0
    %2313 = vmatpush1.bf16.msra.mxu0 0
    %2314 = vmatprep.subr.bf16.mxu0 0
    %2315 = vmatpush1.bf16.msra.mxu0 0
    %2316 = vmatprep.subr.bf16.mxu0 0
    %2317 = vmatpush1.bf16.msra.mxu0 0
    %2318 = vmatprep.subr.bf16.mxu0 0
    %2319 = vmatpush1.bf16.msra.mxu0 0
    %2320 = vmatprep.subr.bf16.mxu0 0
    %2321 = vmatpush1.bf16.msra.mxu0 0
    %2322 = vmatprep.subr.bf16.mxu0 0
    %2323 = vmatpush1.bf16.msra.mxu0 0
    %2324 = vmatprep.subr.bf16.mxu0 0
    %2325 = vmatpush1.bf16.msra.mxu0 0
    %2326 = vmatprep.subr.bf16.mxu0 0
    %2327 = vmatpush1.bf16.msra.mxu0 0
    %2328 = vmatprep.mubr.bf16.mxu0 0
    %2329 = vmatmul.mubr.bf16.gmra.mrb[0].mxu0 %v2094
    %v2330 = vpop.f32.mrb[0].mxu0
    %v2331 = vadd.f32 0.0, %v2330
    %v2332 = vpop.f32.mrb[0].mxu0
    %v2333 = vadd.f32 0.0, %v2332
    %v2334 = vpop.f32.mrb[0].mxu0
    %v2335 = vpop.f32.mrb[0].mxu0
    %2336 = vdwg.mxu0
    %v2337 = vadd.f32 %v2090, %v2290
    %v2338 = vadd.f32 %v2091, %v2292
    %v2339 = vadd.f32 %v2092, %v2331
    %v2340 = vadd.f32 %v2093, %v2333
    %v2341 = vxor.u32 %v2337, 2147483648
    %v2342 = vxor.u32 %v2338, 2147483648
    %v2343 = vxor.u32 %v2339, 2147483648
    %v2344 = vmul.f32 %v2341, 1.442695
    %v2345 = vpow.pop %v2344
    %v2346 = vmul.f32 %v2342, 1.442695
    %v2347 = vpow.pop %v2346
    %v2348 = vmul.f32 %v2343, 1.442695
    %v2349 = vpow.pop %v2348
    %v2350 = vadd.f32 %v2345, 1.0
    %v2351 = vadd.f32 %v2347, 1.0
    %v2352 = vadd.f32 %v2349, 1.0
    %v2353 = vrcp.pop %v2350
    %v2354 = vmul.f32 1.0, %v2353
    %v2355 = vrcp.pop %v2351
    %v2356 = vmul.f32 1.0, %v2355
    %v2357 = vrcp.pop %v2352
    %v2358 = vmul.f32 1.0, %v2357
    %v2359 = vtanh.pop %v2340
    %v2360 = vmul.f32 %v2356, %v2089
    %v2361 = vmul.f32 %v2354, %v2359
    %v2362 = vadd.f32 %v2360, %v2361
    %v2363 = vtanh.pop %v2362
    %v2364 = vmul.f32 %v2358, %v2363
    %v2365 = vld [vmem:[%s808] sm:$0xff]
    %v2366 = vld [vmem:[%s808 + $0x8] sm:$0xff]
    %v2367 = vld [vmem:[%s808 + $0x10] sm:$0xff]
    %v2368 = vld [vmem:[%s808 + $0x18] sm:$0xff]
    %v2369 = vpack.c.bf16 %v2364, %v2364
    %2370 = vmatprep.subr.bf16.mxu0 %v2192
    %2371 = vmatpush1.bf16.msra.mxu0 %v2191
    %2372 = vmatprep.subr.bf16.mxu0 %v2196
    %2373 = vmatpush1.bf16.msra.mxu0 %v2195
    %2374 = vmatprep.subr.bf16.mxu0 %v2200
    %2375 = vmatpush1.bf16.msra.mxu0 %v2199
    %2376 = vmatprep.subr.bf16.mxu0 %v2204
    %2377 = vmatpush1.bf16.msra.mxu0 %v2203
    %2378 = vmatprep.subr.bf16.mxu0 %v2208
    %2379 = vmatpush1.bf16.msra.mxu0 %v2207
    %2380 = vmatprep.subr.bf16.mxu0 %v2212
    %2381 = vmatpush1.bf16.msra.mxu0 %v2211
    %2382 = vmatprep.subr.bf16.mxu0 %v2216
    %2383 = vmatpush1.bf16.msra.mxu0 %v2215
    %2384 = vmatprep.subr.bf16.mxu0 %v2220
    %2385 = vmatpush1.bf16.msra.mxu0 %v2219
    %2386 = vmatprep.subr.bf16.mxu0 0
    %2387 = vmatpush1.bf16.msra.mxu0 0
    %2388 = vmatprep.subr.bf16.mxu0 0
    %2389 = vmatpush1.bf16.msra.mxu0 0
    %2390 = vmatprep.subr.bf16.mxu0 0
    %2391 = vmatpush1.bf16.msra.mxu0 0
    %2392 = vmatprep.subr.bf16.mxu0 0
    %2393 = vmatpush1.bf16.msra.mxu0 0
    %2394 = vmatprep.subr.bf16.mxu0 0
    %2395 = vmatpush1.bf16.msra.mxu0 0
    %2396 = vmatprep.subr.bf16.mxu0 0
    %2397 = vmatpush1.bf16.msra.mxu0 0
    %2398 = vmatprep.subr.bf16.mxu0 0
    %2399 = vmatpush1.bf16.msra.mxu0 0
    %2400 = vmatprep.subr.bf16.mxu0 0
    %2401 = vmatpush1.bf16.msra.mxu0 0
    %2402 = vmatprep.mubr.bf16.mxu0 0
    %2403 = vmatmul.mubr.bf16.gmra.mrb[0].mxu0 %v2369
    %v2404 = vpop.f32.mrb[0].mxu0
    %v2405 = vadd.f32 0.0, %v2404
    %v2406 = vpop.f32.mrb[0].mxu0
    %v2407 = vadd.f32 0.0, %v2406
    %v2408 = vpop.f32.mrb[0].mxu0
    %v2409 = vpop.f32.mrb[0].mxu0
    %2410 = vdwg.mxu0
    %2411 = vmatprep.subr.bf16.mxu0 %v2194
    %2412 = vmatpush1.bf16.msra.mxu0 %v2193
    %2413 = vmatprep.subr.bf16.mxu0 %v2198
    %2414 = vmatpush1.bf16.msra.mxu0 %v2197
    %2415 = vmatprep.subr.bf16.mxu0 %v2202
    %2416 = vmatpush1.bf16.msra.mxu0 %v2201
    %2417 = vmatprep.subr.bf16.mxu0 %v2206
    %2418 = vmatpush1.bf16.msra.mxu0 %v2205
    %2419 = vmatprep.subr.bf16.mxu0 %v2210
    %2420 = vmatpush1.bf16.msra.mxu0 %v2209
    %2421 = vmatprep.subr.bf16.mxu0 %v2214
    %2422 = vmatpush1.bf16.msra.mxu0 %v2213
    %2423 = vmatprep.subr.bf16.mxu0 %v2218
    %2424 = vmatpush1.bf16.msra.mxu0 %v2217
    %2425 = vmatprep.subr.bf16.mxu0 %v2222
    %2426 = vmatpush1.bf16.msra.mxu0 %v2221
    %2427 = vmatprep.subr.bf16.mxu0 0
    %2428 = vmatpush1.bf16.msra.mxu0 0
    %2429 = vmatprep.subr.bf16.mxu0 0
    %2430 = vmatpush1.bf16.msra.mxu0 0
    %2431 = vmatprep.subr.bf16.mxu0 0
    %2432 = vmatpush1.bf16.msra.mxu0 0
    %2433 = vmatprep.subr.bf16.mxu0 0
    %2434 = vmatpush1.bf16.msra.mxu0 0
    %2435 = vmatprep.subr.bf16.mxu0 0
    %2436 = vmatpush1.bf16.msra.mxu0 0
    %2437 = vmatprep.subr.bf16.mxu0 0
    %2438 = vmatpush1.bf16.msra.mxu0 0
    %2439 = vmatprep.subr.bf16.mxu0 0
    %2440 = vmatpush1.bf16.msra.mxu0 0
    %2441 = vmatprep.subr.bf16.mxu0 0
    %2442 = vmatpush1.bf16.msra.mxu0 0
    %2443 = vmatprep.mubr.bf16.mxu0 0
    %2444 = vmatmul.mubr.bf16.gmra.mrb[0].mxu0 %v2369
    %v2445 = vpop.f32.mrb[0].mxu0
    %v2446 = vadd.f32 0.0, %v2445
    %v2447 = vpop.f32.mrb[0].mxu0
    %v2448 = vadd.f32 0.0, %v2447
    %v2449 = vpop.f32.mrb[0].mxu0
    %v2450 = vpop.f32.mrb[0].mxu0
    %2451 = vdwg.mxu0
    %v2452 = vadd.f32 %v2365, %v2405
    %v2453 = vadd.f32 %v2366, %v2407
    %v2454 = vadd.f32 %v2367, %v2446
    %v2455 = vadd.f32 %v2368, %v2448
    %v2456 = vxor.u32 %v2452, 2147483648
    %v2457 = vxor.u32 %v2453, 2147483648
    %v2458 = vxor.u32 %v2454, 2147483648
    %v2459 = vmul.f32 %v2456, 1.442695
    %v2460 = vpow.pop %v2459
    %v2461 = vmul.f32 %v2457, 1.442695
    %v2462 = vpow.pop %v2461
    %v2463 = vmul.f32 %v2458, 1.442695
    %v2464 = vpow.pop %v2463
    %v2465 = vadd.f32 %v2460, 1.0
    %v2466 = vadd.f32 %v2462, 1.0
    %v2467 = vadd.f32 %v2464, 1.0
    %v2468 = vrcp.pop %v2465
    %v2469 = vmul.f32 1.0, %v2468
    %v2470 = vrcp.pop %v2466
    %v2471 = vmul.f32 1.0, %v2470
    %v2472 = vrcp.pop %v2467
    %v2473 = vmul.f32 1.0, %v2472
    %v2474 = vtanh.pop %v2455
    %v2475 = vmul.f32 %v2471, %v2362
    %v2476 = vmul.f32 %v2469, %v2474
    %v2477 = vadd.f32 %v2475, %v2476
    %v2478 = vtanh.pop %v2477
    %v2479 = vmul.f32 %v2473, %v2478
    %v2480 = vld [vmem:[%s928] sm:$0xff]
    %v2481 = vld [vmem:[%s928 + $0x8] sm:$0xff]
    %v2482 = vld [vmem:[%s928 + $0x10] sm:$0xff]
    %v2483 = vld [vmem:[%s928 + $0x18] sm:$0xff]
    %v2484 = vpack.c.bf16 %v2479, %v2479
    %2485 = vmatprep.subr.bf16.mxu0 %v2192
    %2486 = vmatpush1.bf16.msra.mxu0 %v2191
    %2487 = vmatprep.subr.bf16.mxu0 %v2196
    %2488 = vmatpush1.bf16.msra.mxu0 %v2195
    %2489 = vmatprep.subr.bf16.mxu0 %v2200
    %2490 = vmatpush1.bf16.msra.mxu0 %v2199
    %2491 = vmatprep.subr.bf16.mxu0 %v2204
    %2492 = vmatpush1.bf16.msra.mxu0 %v2203
    %2493 = vmatprep.subr.bf16.mxu0 %v2208
    %2494 = vmatpush1.bf16.msra.mxu0 %v2207
    %2495 = vmatprep.subr.bf16.mxu0 %v2212
    %2496 = vmatpush1.bf16.msra.mxu0 %v2211
    %2497 = vmatprep.subr.bf16.mxu0 %v2216
    %2498 = vmatpush1.bf16.msra.mxu0 %v2215
    %2499 = vmatprep.subr.bf16.mxu0 %v2220
    %2500 = vmatpush1.bf16.msra.mxu0 %v2219
    %2501 = vmatprep.subr.bf16.mxu0 0
    %2502 = vmatpush1.bf16.msra.mxu0 0
    %2503 = vmatprep.subr.bf16.mxu0 0
    %2504 = vmatpush1.bf16.msra.mxu0 0
    %2505 = vmatprep.subr.bf16.mxu0 0
    %2506 = vmatpush1.bf16.msra.mxu0 0
    %2507 = vmatprep.subr.bf16.mxu0 0
    %2508 = vmatpush1.bf16.msra.mxu0 0
    %2509 = vmatprep.subr.bf16.mxu0 0
    %2510 = vmatpush1.bf16.msra.mxu0 0
    %2511 = vmatprep.subr.bf16.mxu0 0
    %2512 = vmatpush1.bf16.msra.mxu0 0
    %2513 = vmatprep.subr.bf16.mxu0 0
    %2514 = vmatpush1.bf16.msra.mxu0 0
    %2515 = vmatprep.subr.bf16.mxu0 0
    %2516 = vmatpush1.bf16.msra.mxu0 0
    %2517 = vmatprep.mubr.bf16.mxu0 0
    %2518 = vmatmul.mubr.bf16.gmra.mrb[0].mxu0 %v2484
    %v2519 = vpop.f32.mrb[0].mxu0
    %v2520 = vadd.f32 0.0, %v2519
    %v2521 = vpop.f32.mrb[0].mxu0
    %v2522 = vadd.f32 0.0, %v2521
    %v2523 = vpop.f32.mrb[0].mxu0
    %v2524 = vpop.f32.mrb[0].mxu0
    %2525 = vdwg.mxu0
    %2526 = vmatprep.subr.bf16.mxu0 %v2194
    %2527 = vmatpush1.bf16.msra.mxu0 %v2193
    %2528 = vmatprep.subr.bf16.mxu0 %v2198
    %2529 = vmatpush1.bf16.msra.mxu0 %v2197
    %2530 = vmatprep.subr.bf16.mxu0 %v2202
    %2531 = vmatpush1.bf16.msra.mxu0 %v2201
    %2532 = vmatprep.subr.bf16.mxu0 %v2206
    %2533 = vmatpush1.bf16.msra.mxu0 %v2205
    %2534 = vmatprep.subr.bf16.mxu0 %v2210
    %2535 = vmatpush1.bf16.msra.mxu0 %v2209
    %2536 = vmatprep.subr.bf16.mxu0 %v2214
    %2537 = vmatpush1.bf16.msra.mxu0 %v2213
    %2538 = vmatprep.subr.bf16.mxu0 %v2218
    %2539 = vmatpush1.bf16.msra.mxu0 %v2217
    %2540 = vmatprep.subr.bf16.mxu0 %v2222
    %2541 = vmatpush1.bf16.msra.mxu0 %v2221
    %2542 = vmatprep.subr.bf16.mxu0 0
    %2543 = vmatpush1.bf16.msra.mxu0 0
    %2544 = vmatprep.subr.bf16.mxu0 0
    %2545 = vmatpush1.bf16.msra.mxu0 0
    %2546 = vmatprep.subr.bf16.mxu0 0
    %2547 = vmatpush1.bf16.msra.mxu0 0
    %2548 = vmatprep.subr.bf16.mxu0 0
    %2549 = vmatpush1.bf16.msra.mxu0 0
    %2550 = vmatprep.subr.bf16.mxu0 0
    %2551 = vmatpush1.bf16.msra.mxu0 0
    %2552 = vmatprep.subr.bf16.mxu0 0
    %2553 = vmatpush1.bf16.msra.mxu0 0
    %2554 = vmatprep.subr.bf16.mxu0 0
    %2555 = vmatpush1.bf16.msra.mxu0 0
    %2556 = vmatprep.subr.bf16.mxu0 0
    %2557 = vmatpush1.bf16.msra.mxu0 0
    %2558 = vmatprep.mubr.bf16.mxu0 0
    %2559 = vmatmul.mubr.bf16.gmra.mrb[0].mxu0 %v2484
    %v2560 = vpop.f32.mrb[0].mxu0
    %v2561 = vadd.f32 0.0, %v2560
    %v2562 = vpop.f32.mrb[0].mxu0
    %v2563 = vadd.f32 0.0, %v2562
    %v2564 = vpop.f32.mrb[0].mxu0
    %v2565 = vpop.f32.mrb[0].mxu0
    %2566 = vdwg.mxu0
    %v2567 = vadd.f32 %v2480, %v2520
    %v2568 = vadd.f32 %v2481, %v2522
    %v2569 = vadd.f32 %v2482, %v2561
    %v2570 = vadd.f32 %v2483, %v2563
    %v2571 = vxor.u32 %v2567, 2147483648
    %v2572 = vxor.u32 %v2568, 2147483648
    %v2573 = vxor.u32 %v2569, 2147483648
    %v2574 = vmul.f32 %v2571, 1.442695
    %v2575 = vpow.pop %v2574
    %v2576 = vmul.f32 %v2572, 1.442695
    %v2577 = vpow.pop %v2576
    %v2578 = vmul.f32 %v2573, 1.442695
    %v2579 = vpow.pop %v2578
    %v2580 = vadd.f32 %v2575, 1.0
    %v2581 = vadd.f32 %v2577, 1.0
    %v2582 = vadd.f32 %v2579, 1.0
    %v2583 = vrcp.pop %v2580
    %v2584 = vmul.f32 1.0, %v2583
    %v2585 = vrcp.pop %v2581
    %v2586 = vmul.f32 1.0, %v2585
    %v2587 = vrcp.pop %v2582
    %v2588 = vmul.f32 1.0, %v2587
    %v2589 = vtanh.pop %v2570
    %v2590 = vmul.f32 %v2586, %v2477
    %v2591 = vmul.f32 %v2584, %v2589
    %v2592 = vadd.f32 %v2590, %v2591
    %v2593 = vtanh.pop %v2592
    %v2594 = vmul.f32 %v2588, %v2593
    %v2595 = vld [vmem:[%s1048] sm:$0xff]
    %v2596 = vld [vmem:[%s1048 + $0x8] sm:$0xff]
    %v2597 = vld [vmem:[%s1048 + $0x10] sm:$0xff]
    %v2598 = vld [vmem:[%s1048 + $0x18] sm:$0xff]
    %v2599 = vpack.c.bf16 %v2594, %v2594
    %2600 = vmatprep.subr.bf16.mxu0 %v2192
    %2601 = vmatpush1.bf16.msra.mxu0 %v2191
    %2602 = vmatprep.subr.bf16.mxu0 %v2196
    %2603 = vmatpush1.bf16.msra.mxu0 %v2195
    %2604 = vmatprep.subr.bf16.mxu0 %v2200
    %2605 = vmatpush1.bf16.msra.mxu0 %v2199
    %2606 = vmatprep.subr.bf16.mxu0 %v2204
    %2607 = vmatpush1.bf16.msra.mxu0 %v2203
    %2608 = vmatprep.subr.bf16.mxu0 %v2208
    %2609 = vmatpush1.bf16.msra.mxu0 %v2207
    %2610 = vmatprep.subr.bf16.mxu0 %v2212
    %2611 = vmatpush1.bf16.msra.mxu0 %v2211
    %2612 = vmatprep.subr.bf16.mxu0 %v2216
    %2613 = vmatpush1.bf16.msra.mxu0 %v2215
    %2614 = vmatprep.subr.bf16.mxu0 %v2220
    %2615 = vmatpush1.bf16.msra.mxu0 %v2219
    %2616 = vmatprep.subr.bf16.mxu0 0
    %2617 = vmatpush1.bf16.msra.mxu0 0
    %2618 = vmatprep.subr.bf16.mxu0 0
    %2619 = vmatpush1.bf16.msra.mxu0 0
    %2620 = vmatprep.subr.bf16.mxu0 0
    %2621 = vmatpush1.bf16.msra.mxu0 0
    %2622 = vmatprep.subr.bf16.mxu0 0
    %2623 = vmatpush1.bf16.msra.mxu0 0
    %2624 = vmatprep.subr.bf16.mxu0 0
    %2625 = vmatpush1.bf16.msra.mxu0 0
    %2626 = vmatprep.subr.bf16.mxu0 0
    %2627 = vmatpush1.bf16.msra.mxu0 0
    %2628 = vmatprep.subr.bf16.mxu0 0
    %2629 = vmatpush1.bf16.msra.mxu0 0
    %2630 = vmatprep.subr.bf16.mxu0 0
    %2631 = vmatpush1.bf16.msra.mxu0 0
    %2632 = vmatprep.mubr.bf16.mxu0 0
    %2633 = vmatmul.mubr.bf16.gmra.mrb[0].mxu0 %v2599
    %v2634 = vpop.f32.mrb[0].mxu0
    %v2635 = vadd.f32 0.0, %v2634
    %v2636 = vpop.f32.mrb[0].mxu0
    %v2637 = vadd.f32 0.0, %v2636
    %v2638 = vpop.f32.mrb[0].mxu0
    %v2639 = vpop.f32.mrb[0].mxu0
    %2640 = vdwg.mxu0
    %2641 = vmatprep.subr.bf16.mxu0 %v2194
    %2642 = vmatpush1.bf16.msra.mxu0 %v2193
    %2643 = vmatprep.subr.bf16.mxu0 %v2198
    %2644 = vmatpush1.bf16.msra.mxu0 %v2197
    %2645 = vmatprep.subr.bf16.mxu0 %v2202
    %2646 = vmatpush1.bf16.msra.mxu0 %v2201
    %2647 = vmatprep.subr.bf16.mxu0 %v2206
    %2648 = vmatpush1.bf16.msra.mxu0 %v2205
    %2649 = vmatprep.subr.bf16.mxu0 %v2210
    %2650 = vmatpush1.bf16.msra.mxu0 %v2209
    %2651 = vmatprep.subr.bf16.mxu0 %v2214
    %2652 = vmatpush1.bf16.msra.mxu0 %v2213
    %2653 = vmatprep.subr.bf16.mxu0 %v2218
    %2654 = vmatpush1.bf16.msra.mxu0 %v2217
    %2655 = vmatprep.subr.bf16.mxu0 %v2222
    %2656 = vmatpush1.bf16.msra.mxu0 %v2221
    %2657 = vmatprep.subr.bf16.mxu0 0
    %2658 = vmatpush1.bf16.msra.mxu0 0
    %2659 = vmatprep.subr.bf16.mxu0 0
    %2660 = vmatpush1.bf16.msra.mxu0 0
    %2661 = vmatprep.subr.bf16.mxu0 0
    %2662 = vmatpush1.bf16.msra.mxu0 0
    %2663 = vmatprep.subr.bf16.mxu0 0
    %2664 = vmatpush1.bf16.msra.mxu0 0
    %2665 = vmatprep.subr.bf16.mxu0 0
    %2666 = vmatpush1.bf16.msra.mxu0 0
    %2667 = vmatprep.subr.bf16.mxu0 0
    %2668 = vmatpush1.bf16.msra.mxu0 0
    %2669 = vmatprep.subr.bf16.mxu0 0
    %2670 = vmatpush1.bf16.msra.mxu0 0
    %2671 = vmatprep.subr.bf16.mxu0 0
    %2672 = vmatpush1.bf16.msra.mxu0 0
    %2673 = vmatprep.mubr.bf16.mxu0 0
    %2674 = vmatmul.mubr.bf16.gmra.mrb[0].mxu0 %v2599
    %v2675 = vpop.f32.mrb[0].mxu0
    %v2676 = vadd.f32 0.0, %v2675
    %v2677 = vpop.f32.mrb[0].mxu0
    %v2678 = vadd.f32 0.0, %v2677
    %v2679 = vpop.f32.mrb[0].mxu0
    %v2680 = vpop.f32.mrb[0].mxu0
    %2681 = vdwg.mxu0
    %v2682 = vadd.f32 %v2595, %v2635
    %v2683 = vadd.f32 %v2596, %v2637
    %v2684 = vadd.f32 %v2597, %v2676
    %v2685 = vadd.f32 %v2598, %v2678
    %v2686 = vxor.u32 %v2682, 2147483648
    %v2687 = vxor.u32 %v2683, 2147483648
    %v2688 = vxor.u32 %v2684, 2147483648
    %v2689 = vmul.f32 %v2686, 1.442695
    %v2690 = vpow.pop %v2689
    %v2691 = vmul.f32 %v2687, 1.442695
    %v2692 = vpow.pop %v2691
    %v2693 = vmul.f32 %v2688, 1.442695
    %v2694 = vpow.pop %v2693
    %v2695 = vadd.f32 %v2690, 1.0
    %v2696 = vadd.f32 %v2692, 1.0
    %v2697 = vadd.f32 %v2694, 1.0
    %v2698 = vrcp.pop %v2695
    %v2699 = vmul.f32 1.0, %v2698
    %v2700 = vrcp.pop %v2696
    %v2701 = vmul.f32 1.0, %v2700
    %v2702 = vrcp.pop %v2697
    %v2703 = vmul.f32 1.0, %v2702
    %v2704 = vtanh.pop %v2685
    %v2705 = vmul.f32 %v2701, %v2592
    %v2706 = vmul.f32 %v2699, %v2704
    %v2707 = vadd.f32 %v2705, %v2706
    %v2708 = vtanh.pop %v2707
    %v2709 = vmul.f32 %v2703, %v2708
    %v2710 = vld [vmem:[%s1168] sm:$0xff]
    %v2711 = vld [vmem:[%s1168 + $0x8] sm:$0xff]
    %v2712 = vld [vmem:[%s1168 + $0x10] sm:$0xff]
    %v2713 = vld [vmem:[%s1168 + $0x18] sm:$0xff]
    %v2714 = vpack.c.bf16 %v2709, %v2709
    %2715 = vmatprep.subr.bf16.mxu0 %v2192
    %2716 = vmatpush1.bf16.msra.mxu0 %v2191
    %2717 = vmatprep.subr.bf16.mxu0 %v2196
    %2718 = vmatpush1.bf16.msra.mxu0 %v2195
    %2719 = vmatprep.subr.bf16.mxu0 %v2200
    %2720 = vmatpush1.bf16.msra.mxu0 %v2199
    %2721 = vmatprep.subr.bf16.mxu0 %v2204
    %2722 = vmatpush1.bf16.msra.mxu0 %v2203
    %2723 = vmatprep.subr.bf16.mxu0 %v2208
    %2724 = vmatpush1.bf16.msra.mxu0 %v2207
    %2725 = vmatprep.subr.bf16.mxu0 %v2212
    %2726 = vmatpush1.bf16.msra.mxu0 %v2211
    %2727 = vmatprep.subr.bf16.mxu0 %v2216
    %2728 = vmatpush1.bf16.msra.mxu0 %v2215
    %2729 = vmatprep.subr.bf16.mxu0 %v2220
    %2730 = vmatpush1.bf16.msra.mxu0 %v2219
    %2731 = vmatprep.subr.bf16.mxu0 0
    %2732 = vmatpush1.bf16.msra.mxu0 0
    %2733 = vmatprep.subr.bf16.mxu0 0
    %2734 = vmatpush1.bf16.msra.mxu0 0
    %2735 = vmatprep.subr.bf16.mxu0 0
    %2736 = vmatpush1.bf16.msra.mxu0 0
    %2737 = vmatprep.subr.bf16.mxu0 0
    %2738 = vmatpush1.bf16.msra.mxu0 0
    %2739 = vmatprep.subr.bf16.mxu0 0
    %2740 = vmatpush1.bf16.msra.mxu0 0
    %2741 = vmatprep.subr.bf16.mxu0 0
    %2742 = vmatpush1.bf16.msra.mxu0 0
    %2743 = vmatprep.subr.bf16.mxu0 0
    %2744 = vmatpush1.bf16.msra.mxu0 0
    %2745 = vmatprep.subr.bf16.mxu0 0
    %2746 = vmatpush1.bf16.msra.mxu0 0
    %2747 = vmatprep.mubr.bf16.mxu0 0
    %2748 = vmatmul.mubr.bf16.gmra.mrb[0].mxu0 %v2714
    %v2749 = vpop.f32.mrb[0].mxu0
    %v2750 = vadd.f32 0.0, %v2749
    %v2751 = vpop.f32.mrb[0].mxu0
    %v2752 = vadd.f32 0.0, %v2751
    %v2753 = vpop.f32.mrb[0].mxu0
    %v2754 = vpop.f32.mrb[0].mxu0
    %2755 = vdwg.mxu0
    %2756 = vmatprep.subr.bf16.mxu0 %v2194
    %2757 = vmatpush1.bf16.msra.mxu0 %v2193
    %2758 = vmatprep.subr.bf16.mxu0 %v2198
    %2759 = vmatpush1.bf16.msra.mxu0 %v2197
    %2760 = vmatprep.subr.bf16.mxu0 %v2202
    %2761 = vmatpush1.bf16.msra.mxu0 %v2201
    %2762 = vmatprep.subr.bf16.mxu0 %v2206
    %2763 = vmatpush1.bf16.msra.mxu0 %v2205
    %2764 = vmatprep.subr.bf16.mxu0 %v2210
    %2765 = vmatpush1.bf16.msra.mxu0 %v2209
    %2766 = vmatprep.subr.bf16.mxu0 %v2214
    %2767 = vmatpush1.bf16.msra.mxu0 %v2213
    %2768 = vmatprep.subr.bf16.mxu0 %v2218
    %2769 = vmatpush1.bf16.msra.mxu0 %v2217
    %2770 = vmatprep.subr.bf16.mxu0 %v2222
    %2771 = vmatpush1.bf16.msra.mxu0 %v2221
    %2772 = vmatprep.subr.bf16.mxu0 0
    %2773 = vmatpush1.bf16.msra.mxu0 0
    %2774 = vmatprep.subr.bf16.mxu0 0
    %2775 = vmatpush1.bf16.msra.mxu0 0
    %2776 = vmatprep.subr.bf16.mxu0 0
    %2777 = vmatpush1.bf16.msra.mxu0 0
    %2778 = vmatprep.subr.bf16.mxu0 0
    %2779 = vmatpush1.bf16.msra.mxu0 0
    %2780 = vmatprep.subr.bf16.mxu0 0
    %2781 = vmatpush1.bf16.msra.mxu0 0
    %2782 = vmatprep.subr.bf16.mxu0 0
    %2783 = vmatpush1.bf16.msra.mxu0 0
    %2784 = vmatprep.subr.bf16.mxu0 0
    %2785 = vmatpush1.bf16.msra.mxu0 0
    %2786 = vmatprep.subr.bf16.mxu0 0
    %2787 = vmatpush1.bf16.msra.mxu0 0
    %2788 = vmatprep.mubr.bf16.mxu0 0
    %2789 = vmatmul.mubr.bf16.gmra.mrb[0].mxu0 %v2714
    %v2790 = vpop.f32.mrb[0].mxu0
    %v2791 = vadd.f32 0.0, %v2790
    %v2792 = vpop.f32.mrb[0].mxu0
    %v2793 = vadd.f32 0.0, %v2792
    %v2794 = vpop.f32.mrb[0].mxu0
    %v2795 = vpop.f32.mrb[0].mxu0
    %2796 = vdwg.mxu0
    %v2797 = vadd.f32 %v2710, %v2750
    %v2798 = vadd.f32 %v2711, %v2752
    %v2799 = vadd.f32 %v2712, %v2791
    %v2800 = vadd.f32 %v2713, %v2793
    %v2801 = vxor.u32 %v2797, 2147483648
    %v2802 = vxor.u32 %v2798, 2147483648
    %v2803 = vxor.u32 %v2799, 2147483648
    %v2804 = vmul.f32 %v2801, 1.442695
    %v2805 = vpow.pop %v2804
    %v2806 = vmul.f32 %v2802, 1.442695
    %v2807 = vpow.pop %v2806
    %v2808 = vmul.f32 %v2803, 1.442695
    %v2809 = vpow.pop %v2808
    %v2810 = vadd.f32 %v2805, 1.0
    %v2811 = vadd.f32 %v2807, 1.0
    %v2812 = vadd.f32 %v2809, 1.0
    %v2813 = vrcp.pop %v2810
    %v2814 = vmul.f32 1.0, %v2813
    %v2815 = vrcp.pop %v2811
    %v2816 = vmul.f32 1.0, %v2815
    %v2817 = vrcp.pop %v2812
    %v2818 = vmul.f32 1.0, %v2817
    %v2819 = vtanh.pop %v2800
    %v2820 = vmul.f32 %v2816, %v2707
    %v2821 = vmul.f32 %v2814, %v2819
    %v2822 = vadd.f32 %v2820, %v2821
    %v2823 = vtanh.pop %v2822
    %v2824 = vmul.f32 %v2818, %v2823
    %v2825 = vld [vmem:[%s1288] sm:$0xff]
    %v2826 = vld [vmem:[%s1288 + $0x8] sm:$0xff]
    %v2827 = vld [vmem:[%s1288 + $0x10] sm:$0xff]
    %v2828 = vld [vmem:[%s1288 + $0x18] sm:$0xff]
    %v2829 = vpack.c.bf16 %v2824, %v2824
    %2830 = vmatprep.subr.bf16.mxu0 %v2192
    %2831 = vmatpush1.bf16.msra.mxu0 %v2191
    %2832 = vmatprep.subr.bf16.mxu0 %v2196
    %2833 = vmatpush1.bf16.msra.mxu0 %v2195
    %2834 = vmatprep.subr.bf16.mxu0 %v2200
    %2835 = vmatpush1.bf16.msra.mxu0 %v2199
    %2836 = vmatprep.subr.bf16.mxu0 %v2204
    %2837 = vmatpush1.bf16.msra.mxu0 %v2203
    %2838 = vmatprep.subr.bf16.mxu0 %v2208
    %2839 = vmatpush1.bf16.msra.mxu0 %v2207
    %2840 = vmatprep.subr.bf16.mxu0 %v2212
    %2841 = vmatpush1.bf16.msra.mxu0 %v2211
    %2842 = vmatprep.subr.bf16.mxu0 %v2216
    %2843 = vmatpush1.bf16.msra.mxu0 %v2215
    %2844 = vmatprep.subr.bf16.mxu0 %v2220
    %2845 = vmatpush1.bf16.msra.mxu0 %v2219
    %2846 = vmatprep.subr.bf16.mxu0 0
    %2847 = vmatpush1.bf16.msra.mxu0 0
    %2848 = vmatprep.subr.bf16.mxu0 0
    %2849 = vmatpush1.bf16.msra.mxu0 0
    %2850 = vmatprep.subr.bf16.mxu0 0
    %2851 = vmatpush1.bf16.msra.mxu0 0
    %2852 = vmatprep.subr.bf16.mxu0 0
    %2853 = vmatpush1.bf16.msra.mxu0 0
    %2854 = vmatprep.subr.bf16.mxu0 0
    %2855 = vmatpush1.bf16.msra.mxu0 0
    %2856 = vmatprep.subr.bf16.mxu0 0
    %2857 = vmatpush1.bf16.msra.mxu0 0
    %2858 = vmatprep.subr.bf16.mxu0 0
    %2859 = vmatpush1.bf16.msra.mxu0 0
    %2860 = vmatprep.subr.bf16.mxu0 0
    %2861 = vmatpush1.bf16.msra.mxu0 0
    %2862 = vmatprep.mubr.bf16.mxu0 0
    %2863 = vmatmul.mubr.bf16.gmra.mrb[0].mxu0 %v2829
    %v2864 = vpop.f32.mrb[0].mxu0
    %v2865 = vadd.f32 0.0, %v2864
    %v2866 = vpop.f32.mrb[0].mxu0
    %v2867 = vadd.f32 0.0, %v2866
    %v2868 = vpop.f32.mrb[0].mxu0
    %v2869 = vpop.f32.mrb[0].mxu0
    %2870 = vdwg.mxu0
    %2871 = vmatprep.subr.bf16.mxu0 %v2194
    %2872 = vmatpush1.bf16.msra.mxu0 %v2193
    %2873 = vmatprep.subr.bf16.mxu0 %v2198
    %2874 = vmatpush1.bf16.msra.mxu0 %v2197
    %2875 = vmatprep.subr.bf16.mxu0 %v2202
    %2876 = vmatpush1.bf16.msra.mxu0 %v2201
    %2877 = vmatprep.subr.bf16.mxu0 %v2206
    %2878 = vmatpush1.bf16.msra.mxu0 %v2205
    %2879 = vmatprep.subr.bf16.mxu0 %v2210
    %2880 = vmatpush1.bf16.msra.mxu0 %v2209
    %2881 = vmatprep.subr.bf16.mxu0 %v2214
    %2882 = vmatpush1.bf16.msra.mxu0 %v2213
    %2883 = vmatprep.subr.bf16.mxu0 %v2218
    %2884 = vmatpush1.bf16.msra.mxu0 %v2217
    %2885 = vmatprep.subr.bf16.mxu0 %v2222
    %2886 = vmatpush1.bf16.msra.mxu0 %v2221
    %2887 = vmatprep.subr.bf16.mxu0 0
    %2888 = vmatpush1.bf16.msra.mxu0 0
    %2889 = vmatprep.subr.bf16.mxu0 0
    %2890 = vmatpush1.bf16.msra.mxu0 0
    %2891 = vmatprep.subr.bf16.mxu0 0
    %2892 = vmatpush1.bf16.msra.mxu0 0
    %2893 = vmatprep.subr.bf16.mxu0 0
    %2894 = vmatpush1.bf16.msra.mxu0 0
    %2895 = vmatprep.subr.bf16.mxu0 0
    %2896 = vmatpush1.bf16.msra.mxu0 0
    %2897 = vmatprep.subr.bf16.mxu0 0
    %2898 = vmatpush1.bf16.msra.mxu0 0
    %2899 = vmatprep.subr.bf16.mxu0 0
    %2900 = vmatpush1.bf16.msra.mxu0 0
    %2901 = vmatprep.subr.bf16.mxu0 0
    %2902 = vmatpush1.bf16.msra.mxu0 0
    %2903 = vmatprep.mubr.bf16.mxu0 0
    %2904 = vmatmul.mubr.bf16.gmra.mrb[0].mxu0 %v2829
    %v2905 = vpop.f32.mrb[0].mxu0
    %v2906 = vadd.f32 0.0, %v2905
    %v2907 = vpop.f32.mrb[0].mxu0
    %v2908 = vadd.f32 0.0, %v2907
    %v2909 = vpop.f32.mrb[0].mxu0
    %v2910 = vpop.f32.mrb[0].mxu0
    %2911 = vdwg.mxu0
    %v2912 = vadd.f32 %v2825, %v2865
    %v2913 = vadd.f32 %v2826, %v2867
    %v2914 = vadd.f32 %v2827, %v2906
    %v2915 = vadd.f32 %v2828, %v2908
    %v2916 = vxor.u32 %v2912, 2147483648
    %v2917 = vxor.u32 %v2913, 2147483648
    %v2918 = vxor.u32 %v2914, 2147483648
    %v2919 = vmul.f32 %v2916, 1.442695
    %v2920 = vpow.pop %v2919
    %v2921 = vmul.f32 %v2917, 1.442695
    %v2922 = vpow.pop %v2921
    %v2923 = vmul.f32 %v2918, 1.442695
    %v2924 = vpow.pop %v2923
    %v2925 = vadd.f32 %v2920, 1.0
    %v2926 = vadd.f32 %v2922, 1.0
    %v2927 = vadd.f32 %v2924, 1.0
    %v2928 = vrcp.pop %v2925
    %v2929 = vmul.f32 1.0, %v2928
    %v2930 = vrcp.pop %v2926
    %v2931 = vmul.f32 1.0, %v2930
    %v2932 = vrcp.pop %v2927
    %v2933 = vmul.f32 1.0, %v2932
    %v2934 = vtanh.pop %v2915
    %v2935 = vmul.f32 %v2931, %v2822
    %v2936 = vmul.f32 %v2929, %v2934
    %v2937 = vadd.f32 %v2935, %v2936
    %v2938 = vtanh.pop %v2937
    %v2939 = vmul.f32 %v2933, %v2938
    %v2940 = vld [vmem:[%s1408] sm:$0xff]
    %v2941 = vld [vmem:[%s1408 + $0x8] sm:$0xff]
    %v2942 = vld [vmem:[%s1408 + $0x10] sm:$0xff]
    %v2943 = vld [vmem:[%s1408 + $0x18] sm:$0xff]
    %v2944 = vpack.c.bf16 %v2939, %v2939
    %2945 = vmatprep.subr.bf16.mxu0 %v2192
    %2946 = vmatpush1.bf16.msra.mxu0 %v2191
    %2947 = vmatprep.subr.bf16.mxu0 %v2196
    %2948 = vmatpush1.bf16.msra.mxu0 %v2195
    %2949 = vmatprep.subr.bf16.mxu0 %v2200
    %2950 = vmatpush1.bf16.msra.mxu0 %v2199
    %2951 = vmatprep.subr.bf16.mxu0 %v2204
    %2952 = vmatpush1.bf16.msra.mxu0 %v2203
    %2953 = vmatprep.subr.bf16.mxu0 %v2208
    %2954 = vmatpush1.bf16.msra.mxu0 %v2207
    %2955 = vmatprep.subr.bf16.mxu0 %v2212
    %2956 = vmatpush1.bf16.msra.mxu0 %v2211
    %2957 = vmatprep.subr.bf16.mxu0 %v2216
    %2958 = vmatpush1.bf16.msra.mxu0 %v2215
    %2959 = vmatprep.subr.bf16.mxu0 %v2220
    %2960 = vmatpush1.bf16.msra.mxu0 %v2219
    %2961 = vmatprep.subr.bf16.mxu0 0
    %2962 = vmatpush1.bf16.msra.mxu0 0
    %2963 = vmatprep.subr.bf16.mxu0 0
    %2964 = vmatpush1.bf16.msra.mxu0 0
    %2965 = vmatprep.subr.bf16.mxu0 0
    %2966 = vmatpush1.bf16.msra.mxu0 0
    %2967 = vmatprep.subr.bf16.mxu0 0
    %2968 = vmatpush1.bf16.msra.mxu0 0
    %2969 = vmatprep.subr.bf16.mxu0 0
    %2970 = vmatpush1.bf16.msra.mxu0 0
    %2971 = vmatprep.subr.bf16.mxu0 0
    %2972 = vmatpush1.bf16.msra.mxu0 0
    %2973 = vmatprep.subr.bf16.mxu0 0
    %2974 = vmatpush1.bf16.msra.mxu0 0
    %2975 = vmatprep.subr.bf16.mxu0 0
    %2976 = vmatpush1.bf16.msra.mxu0 0
    %2977 = vmatprep.mubr.bf16.mxu0 0
    %2978 = vmatmul.mubr.bf16.gmra.mrb[0].mxu0 %v2944
    %v2979 = vpop.f32.mrb[0].mxu0
    %v2980 = vadd.f32 0.0, %v2979
    %v2981 = vpop.f32.mrb[0].mxu0
    %v2982 = vadd.f32 0.0, %v2981
    %v2983 = vpop.f32.mrb[0].mxu0
    %v2984 = vpop.f32.mrb[0].mxu0
    %2985 = vdwg.mxu0
    %2986 = vmatprep.subr.bf16.mxu0 %v2194
    %2987 = vmatpush1.bf16.msra.mxu0 %v2193
    %2988 = vmatprep.subr.bf16.mxu0 %v2198
    %2989 = vmatpush1.bf16.msra.mxu0 %v2197
    %2990 = vmatprep.subr.bf16.mxu0 %v2202
    %2991 = vmatpush1.bf16.msra.mxu0 %v2201
    %2992 = vmatprep.subr.bf16.mxu0 %v2206
    %2993 = vmatpush1.bf16.msra.mxu0 %v2205
    %2994 = vmatprep.subr.bf16.mxu0 %v2210
    %2995 = vmatpush1.bf16.msra.mxu0 %v2209
    %2996 = vmatprep.subr.bf16.mxu0 %v2214
    %2997 = vmatpush1.bf16.msra.mxu0 %v2213
    %2998 = vmatprep.subr.bf16.mxu0 %v2218
    %2999 = vmatpush1.bf16.msra.mxu0 %v2217
    %3000 = vmatprep.subr.bf16.mxu0 %v2222
    %3001 = vmatpush1.bf16.msra.mxu0 %v2221
    %3002 = vmatprep.subr.bf16.mxu0 0
    %3003 = vmatpush1.bf16.msra.mxu0 0
    %3004 = vmatprep.subr.bf16.mxu0 0
    %3005 = vmatpush1.bf16.msra.mxu0 0
    %3006 = vmatprep.subr.bf16.mxu0 0
    %3007 = vmatpush1.bf16.msra.mxu0 0
    %3008 = vmatprep.subr.bf16.mxu0 0
    %3009 = vmatpush1.bf16.msra.mxu0 0
    %3010 = vmatprep.subr.bf16.mxu0 0
    %3011 = vmatpush1.bf16.msra.mxu0 0
    %3012 = vmatprep.subr.bf16.mxu0 0
    %3013 = vmatpush1.bf16.msra.mxu0 0
    %3014 = vmatprep.subr.bf16.mxu0 0
    %3015 = vmatpush1.bf16.msra.mxu0 0
    %3016 = vmatprep.subr.bf16.mxu0 0
    %3017 = vmatpush1.bf16.msra.mxu0 0
    %3018 = vmatprep.mubr.bf16.mxu0 0
    %3019 = vmatmul.mubr.bf16.gmra.mrb[0].mxu0 %v2944
    %v3020 = vpop.f32.mrb[0].mxu0
    %v3021 = vadd.f32 0.0, %v3020
    %v3022 = vpop.f32.mrb[0].mxu0
    %v3023 = vadd.f32 0.0, %v3022
    %v3024 = vpop.f32.mrb[0].mxu0
    %v3025 = vpop.f32.mrb[0].mxu0
    %3026 = vdwg.mxu0
    %v3027 = vadd.f32 %v2940, %v2980
    %v3028 = vadd.f32 %v2941, %v2982
    %v3029 = vadd.f32 %v2942, %v3021
    %v3030 = vadd.f32 %v2943, %v3023
    %v3031 = vxor.u32 %v3027, 2147483648
    %v3032 = vxor.u32 %v3028, 2147483648
    %v3033 = vxor.u32 %v3029, 2147483648
    %v3034 = vmul.f32 %v3031, 1.442695
    %v3035 = vpow.pop %v3034
    %v3036 = vmul.f32 %v3032, 1.442695
    %v3037 = vpow.pop %v3036
    %v3038 = vmul.f32 %v3033, 1.442695
    %v3039 = vpow.pop %v3038
    %v3040 = vadd.f32 %v3035, 1.0
    %v3041 = vadd.f32 %v3037, 1.0
    %v3042 = vadd.f32 %v3039, 1.0
    %v3043 = vrcp.pop %v3040
    %v3044 = vmul.f32 1.0, %v3043
    %v3045 = vrcp.pop %v3041
    %v3046 = vmul.f32 1.0, %v3045
    %v3047 = vrcp.pop %v3042
    %v3048 = vmul.f32 1.0, %v3047
    %v3049 = vtanh.pop %v3030
    %v3050 = vmul.f32 %v3046, %v2937
    %v3051 = vmul.f32 %v3044, %v3049
    %v3052 = vadd.f32 %v3050, %v3051
    %v3053 = vtanh.pop %v3052
    %v3054 = vmul.f32 %v3048, %v3053
    %v3055 = vld [vmem:[%s1528] sm:$0xff]
    %v3056 = vld [vmem:[%s1528 + $0x8] sm:$0xff]
    %v3057 = vld [vmem:[%s1528 + $0x10] sm:$0xff]
    %v3058 = vld [vmem:[%s1528 + $0x18] sm:$0xff]
    %v3059 = vpack.c.bf16 %v3054, %v3054
    %3060 = vmatprep.subr.bf16.mxu0 %v2192
    %3061 = vmatpush1.bf16.msra.mxu0 %v2191
    %3062 = vmatprep.subr.bf16.mxu0 %v2196
    %3063 = vmatpush1.bf16.msra.mxu0 %v2195
    %3064 = vmatprep.subr.bf16.mxu0 %v2200
    %3065 = vmatpush1.bf16.msra.mxu0 %v2199
    %3066 = vmatprep.subr.bf16.mxu0 %v2204
    %3067 = vmatpush1.bf16.msra.mxu0 %v2203
    %3068 = vmatprep.subr.bf16.mxu0 %v2208
    %3069 = vmatpush1.bf16.msra.mxu0 %v2207
    %3070 = vmatprep.subr.bf16.mxu0 %v2212
    %3071 = vmatpush1.bf16.msra.mxu0 %v2211
    %3072 = vmatprep.subr.bf16.mxu0 %v2216
    %3073 = vmatpush1.bf16.msra.mxu0 %v2215
    %3074 = vmatprep.subr.bf16.mxu0 %v2220
    %3075 = vmatpush1.bf16.msra.mxu0 %v2219
    %3076 = vmatprep.subr.bf16.mxu0 0
    %3077 = vmatpush1.bf16.msra.mxu0 0
    %3078 = vmatprep.subr.bf16.mxu0 0
    %3079 = vmatpush1.bf16.msra.mxu0 0
    %3080 = vmatprep.subr.bf16.mxu0 0
    %3081 = vmatpush1.bf16.msra.mxu0 0
    %3082 = vmatprep.subr.bf16.mxu0 0
    %3083 = vmatpush1.bf16.msra.mxu0 0
    %3084 = vmatprep.subr.bf16.mxu0 0
    %3085 = vmatpush1.bf16.msra.mxu0 0
    %3086 = vmatprep.subr.bf16.mxu0 0
    %3087 = vmatpush1.bf16.msra.mxu0 0
    %3088 = vmatprep.subr.bf16.mxu0 0
    %3089 = vmatpush1.bf16.msra.mxu0 0
    %3090 = vmatprep.subr.bf16.mxu0 0
    %3091 = vmatpush1.bf16.msra.mxu0 0
    %3092 = vmatprep.mubr.bf16.mxu0 0
    %3093 = vmatmul.mubr.bf16.gmra.mrb[0].mxu0 %v3059
    %v3094 = vpop.f32.mrb[0].mxu0
    %v3095 = vadd.f32 0.0, %v3094
    %v3096 = vpop.f32.mrb[0].mxu0
    %v3097 = vadd.f32 0.0, %v3096
    %v3098 = vpop.f32.mrb[0].mxu0
    %v3099 = vpop.f32.mrb[0].mxu0
    %3100 = vdwg.mxu0
    %3101 = vmatprep.subr.bf16.mxu0 %v2194
    %3102 = vmatpush1.bf16.msra.mxu0 %v2193
    %3103 = vmatprep.subr.bf16.mxu0 %v2198
    %3104 = vmatpush1.bf16.msra.mxu0 %v2197
    %3105 = vmatprep.subr.bf16.mxu0 %v2202
    %3106 = vmatpush1.bf16.msra.mxu0 %v2201
    %3107 = vmatprep.subr.bf16.mxu0 %v2206
    %3108 = vmatpush1.bf16.msra.mxu0 %v2205
    %3109 = vmatprep.subr.bf16.mxu0 %v2210
    %3110 = vmatpush1.bf16.msra.mxu0 %v2209
    %3111 = vmatprep.subr.bf16.mxu0 %v2214
    %3112 = vmatpush1.bf16.msra.mxu0 %v2213
    %3113 = vmatprep.subr.bf16.mxu0 %v2218
    %3114 = vmatpush1.bf16.msra.mxu0 %v2217
    %3115 = vmatprep.subr.bf16.mxu0 %v2222
    %3116 = vmatpush1.bf16.msra.mxu0 %v2221
    %3117 = vmatprep.subr.bf16.mxu0 0
    %3118 = vmatpush1.bf16.msra.mxu0 0
    %3119 = vmatprep.subr.bf16.mxu0 0
    %3120 = vmatpush1.bf16.msra.mxu0 0
    %3121 = vmatprep.subr.bf16.mxu0 0
    %3122 = vmatpush1.bf16.msra.mxu0 0
    %3123 = vmatprep.subr.bf16.mxu0 0
    %3124 = vmatpush1.bf16.msra.mxu0 0
    %3125 = vmatprep.subr.bf16.mxu0 0
    %3126 = vmatpush1.bf16.msra.mxu0 0
    %3127 = vmatprep.subr.bf16.mxu0 0
    %3128 = vmatpush1.bf16.msra.mxu0 0
    %3129 = vmatprep.subr.bf16.mxu0 0
    %3130 = vmatpush1.bf16.msra.mxu0 0
    %3131 = vmatprep.subr.bf16.mxu0 0
    %3132 = vmatpush1.bf16.msra.mxu0 0
    %3133 = vmatprep.mubr.bf16.mxu0 0
    %3134 = vmatmul.mubr.bf16.gmra.mrb[0].mxu0 %v3059
    %v3135 = vpop.f32.mrb[0].mxu0
    %v3136 = vadd.f32 0.0, %v3135
    %v3137 = vpop.f32.mrb[0].mxu0
    %v3138 = vadd.f32 0.0, %v3137
    %v3139 = vpop.f32.mrb[0].mxu0
    %v3140 = vpop.f32.mrb[0].mxu0
    %3141 = vdwg.mxu0
    %v3142 = vadd.f32 %v3055, %v3095
    %v3143 = vadd.f32 %v3056, %v3097
    %v3144 = vadd.f32 %v3057, %v3136
    %v3145 = vadd.f32 %v3058, %v3138
    %v3146 = vxor.u32 %v3142, 2147483648
    %v3147 = vxor.u32 %v3143, 2147483648
    %v3148 = vxor.u32 %v3144, 2147483648
    %v3149 = vmul.f32 %v3146, 1.442695
    %v3150 = vpow.pop %v3149
    %v3151 = vmul.f32 %v3147, 1.442695
    %v3152 = vpow.pop %v3151
    %v3153 = vmul.f32 %v3148, 1.442695
    %v3154 = vpow.pop %v3153
    %v3155 = vadd.f32 %v3150, 1.0
    %v3156 = vadd.f32 %v3152, 1.0
    %v3157 = vadd.f32 %v3154, 1.0
    %v3158 = vrcp.pop %v3155
    %v3159 = vmul.f32 1.0, %v3158
    %v3160 = vrcp.pop %v3156
    %v3161 = vmul.f32 1.0, %v3160
    %v3162 = vrcp.pop %v3157
    %v3163 = vmul.f32 1.0, %v3162
    %v3164 = vtanh.pop %v3145
    %v3165 = vmul.f32 %v3161, %v3052
    %v3166 = vmul.f32 %v3159, %v3164
    %v3167 = vadd.f32 %v3165, %v3166
    %v3168 = vtanh.pop %v3167
    %v3169 = vmul.f32 %v3163, %v3168
    %3170 = vst [vmem:[%s2086] sm:$0xff] %v3169
    %3171 = vst [vmem:[%s2088] sm:$0xff] %v3167
    // Predicated region
    $region50: #{lstm_model_forward.1} parent=1 // pred_check
      %p3172 = pneg %p61
    $region51: #{lstm_model_forward.1} parent=1 // pred_check_branch
      %3174 = sbr.rel (%p3172) target = $region53
    $region52: #{lstm_model_forward.1} parent=1 // pred_region
      %v3175 = vpack.c.bf16 %v3169, %v3169
      %v3176 = vld [vmem:[%s5] sm:$0xf]
      %v3177 = vld [vmem:[%s5 + $0x4] sm:$0xf]
      %v3178 = vld [vmem:[%s5 + $0x8] sm:$0xf]
      %v3179 = vld [vmem:[%s5 + $0xc] sm:$0xf]
      %v3180 = vld [vmem:[%s5 + $0x10] sm:$0xf]
      %v3181 = vld [vmem:[%s5 + $0x14] sm:$0xf]
      %v3182 = vld [vmem:[%s5 + $0x18] sm:$0xf]
      %v3183 = vld [vmem:[%s5 + $0x1c] sm:$0xf]
      %v3184 = vld [vmem:[%s5 + $0x20] sm:$0xf]
      %v3185 = vld [vmem:[%s5 + $0x24] sm:$0xf]
      %v3186 = vld [vmem:[%s5 + $0x28] sm:$0xf]
      %v3187 = vld [vmem:[%s5 + $0x2c] sm:$0xf]
      %v3188 = vld [vmem:[%s5 + $0x30] sm:$0xf]
      %v3189 = vld [vmem:[%s5 + $0x34] sm:$0xf]
      %v3190 = vld [vmem:[%s5 + $0x38] sm:$0xf]
      %v3191 = vld [vmem:[%s5 + $0x3c] sm:$0xf]
      %v3192 = vld [vmem:[%s6] sm:$0x1]
      %v3194 = vlaneseq
      %v3195 = vshrl.u32 %v3194, 7
      %v3196 = vsub.s32 0, %v3195
      %v3197 = vrot.slane %v3192, %v3196
      %v3215 = vunpack.c.l.b16 %v3176
      %v3216 = vunpack.c.l.b16 %v3177
      %v3217 = vunpack.c.l.b16 %v3178
      %v3218 = vunpack.c.l.b16 %v3179
      %v3219 = vunpack.c.l.b16 %v3180
      %v3220 = vunpack.c.l.b16 %v3181
      %v3221 = vunpack.c.l.b16 %v3182
      %v3222 = vunpack.c.l.b16 %v3183
      %v3223 = vunpack.c.l.b16 %v3184
      %v3224 = vunpack.c.l.b16 %v3185
      %v3225 = vunpack.c.l.b16 %v3186
      %v3226 = vunpack.c.l.b16 %v3187
      %v3227 = vunpack.c.l.b16 %v3188
      %v3228 = vunpack.c.l.b16 %v3189
      %v3229 = vunpack.c.l.b16 %v3190
      %v3230 = vunpack.c.l.b16 %v3191
      %v3231 = vpack.c.b16 %v3216, %v3215
      %v3232 = vpack.c.b16 %v3218, %v3217
      %v3233 = vpack.c.b16 %v3220, %v3219
      %v3234 = vpack.c.b16 %v3222, %v3221
      %v3235 = vpack.c.b16 %v3224, %v3223
      %v3236 = vpack.c.b16 %v3226, %v3225
      %v3237 = vpack.c.b16 %v3228, %v3227
      %v3238 = vpack.c.b16 %v3230, %v3229
      %3247 = vmatprep.subr.bf16.mxu0 0
      %3248 = vmatpush1.bf16.msra.mxu0 %v3231
      %3249 = vmatprep.subr.bf16.mxu0 0
      %3250 = vmatpush1.bf16.msra.mxu0 %v3232
      %3251 = vmatprep.subr.bf16.mxu0 0
      %3252 = vmatpush1.bf16.msra.mxu0 %v3233
      %3253 = vmatprep.subr.bf16.mxu0 0
      %3254 = vmatpush1.bf16.msra.mxu0 %v3234
      %3255 = vmatprep.subr.bf16.mxu0 0
      %3256 = vmatpush1.bf16.msra.mxu0 %v3235
      %3257 = vmatprep.subr.bf16.mxu0 0
      %3258 = vmatpush1.bf16.msra.mxu0 %v3236
      %3259 = vmatprep.subr.bf16.mxu0 0
      %3260 = vmatpush1.bf16.msra.mxu0 %v3237
      %3261 = vmatprep.subr.bf16.mxu0 0
      %3262 = vmatpush1.bf16.msra.mxu0 %v3238
      %3263 = vmatprep.subr.bf16.mxu0 0
      %3264 = vmatpush1.bf16.msra.mxu0 0
      %3265 = vmatprep.subr.bf16.mxu0 0
      %3266 = vmatpush1.bf16.msra.mxu0 0
      %3267 = vmatprep.subr.bf16.mxu0 0
      %3268 = vmatpush1.bf16.msra.mxu0 0
      %3269 = vmatprep.subr.bf16.mxu0 0
      %3270 = vmatpush1.bf16.msra.mxu0 0
      %3271 = vmatprep.subr.bf16.mxu0 0
      %3272 = vmatpush1.bf16.msra.mxu0 0
      %3273 = vmatprep.subr.bf16.mxu0 0
      %3274 = vmatpush1.bf16.msra.mxu0 0
      %3275 = vmatprep.subr.bf16.mxu0 0
      %3276 = vmatpush1.bf16.msra.mxu0 0
      %3277 = vmatprep.subr.bf16.mxu0 0
      %3278 = vmatpush1.bf16.msra.mxu0 0
      %3279 = vmatprep.mubr.bf16.mxu0 0
      %3280 = vmatmul.mubr.bf16.gmra.mrb[0].mxu0 %v3175
      %v3281 = vpop.f32.mrb[0].mxu0
      %v3282 = vadd.f32 %v3197, %v3281
      %v3283 = vpop.f32.mrb[0].mxu0
      %v3284 = vpop.f32.mrb[0].mxu0
      %v3285 = vpop.f32.mrb[0].mxu0
      %3286 = vdwg.mxu0
      %v3287 = vmax.f32 %v3282, 0.0
      %v3288 = vpack.c.bf16 %v3287, %v3287
      %v3289 = vld [vmem:[%s7] sm:$0xf]
      %v3290 = vld [vmem:[%s7 + $0x4] sm:$0xf]
      %v3291 = vld [vmem:[%s7 + $0x8] sm:$0xf]
      %v3292 = vld [vmem:[%s7 + $0xc] sm:$0xf]
      %v3293 = vld [vmem:[%s7 + $0x10] sm:$0xf]
      %v3294 = vld [vmem:[%s7 + $0x14] sm:$0xf]
      %v3295 = vld [vmem:[%s7 + $0x18] sm:$0xf]
      %v3296 = vld [vmem:[%s7 + $0x1c] sm:$0xf]
      %v3297 = vld [vmem:[%s7 + $0x20] sm:$0xf]
      %v3298 = vld [vmem:[%s7 + $0x24] sm:$0xf]
      %v3299 = vld [vmem:[%s7 + $0x28] sm:$0xf]
      %v3300 = vld [vmem:[%s7 + $0x2c] sm:$0xf]
      %v3301 = vld [vmem:[%s7 + $0x30] sm:$0xf]
      %v3302 = vld [vmem:[%s7 + $0x34] sm:$0xf]
      %v3303 = vld [vmem:[%s7 + $0x38] sm:$0xf]
      %v3304 = vld [vmem:[%s7 + $0x3c] sm:$0xf]
      %v3305 = vld [vmem:[%s8] sm:$0x1]
      %v3307 = vlaneseq
      %v3308 = vshrl.u32 %v3307, 7
      %v3309 = vsub.s32 0, %v3308
      %v3310 = vrot.slane %v3305, %v3309
      %v3328 = vunpack.c.l.b16 %v3289
      %v3329 = vunpack.c.l.b16 %v3290
      %v3330 = vunpack.c.l.b16 %v3291
      %v3331 = vunpack.c.l.b16 %v3292
      %v3332 = vunpack.c.l.b16 %v3293
      %v3333 = vunpack.c.l.b16 %v3294
      %v3334 = vunpack.c.l.b16 %v3295
      %v3335 = vunpack.c.l.b16 %v3296
      %v3336 = vunpack.c.l.b16 %v3297
      %v3337 = vunpack.c.l.b16 %v3298
      %v3338 = vunpack.c.l.b16 %v3299
      %v3339 = vunpack.c.l.b16 %v3300
      %v3340 = vunpack.c.l.b16 %v3301
      %v3341 = vunpack.c.l.b16 %v3302
      %v3342 = vunpack.c.l.b16 %v3303
      %v3343 = vunpack.c.l.b16 %v3304
      %v3344 = vpack.c.b16 %v3329, %v3328
      %v3345 = vpack.c.b16 %v3331, %v3330
      %v3346 = vpack.c.b16 %v3333, %v3332
      %v3347 = vpack.c.b16 %v3335, %v3334
      %v3348 = vpack.c.b16 %v3337, %v3336
      %v3349 = vpack.c.b16 %v3339, %v3338
      %v3350 = vpack.c.b16 %v3341, %v3340
      %v3351 = vpack.c.b16 %v3343, %v3342
      %3360 = vmatprep.subr.bf16.mxu0 0
      %3361 = vmatpush1.bf16.msra.mxu0 %v3344
      %3362 = vmatprep.subr.bf16.mxu0 0
      %3363 = vmatpush1.bf16.msra.mxu0 %v3345
      %3364 = vmatprep.subr.bf16.mxu0 0
      %3365 = vmatpush1.bf16.msra.mxu0 %v3346
      %3366 = vmatprep.subr.bf16.mxu0 0
      %3367 = vmatpush1.bf16.msra.mxu0 %v3347
      %3368 = vmatprep.subr.bf16.mxu0 0
      %3369 = vmatpush1.bf16.msra.mxu0 %v3348
      %3370 = vmatprep.subr.bf16.mxu0 0
      %3371 = vmatpush1.bf16.msra.mxu0 %v3349
      %3372 = vmatprep.subr.bf16.mxu0 0
      %3373 = vmatpush1.bf16.msra.mxu0 %v3350
      %3374 = vmatprep.subr.bf16.mxu0 0
      %3375 = vmatpush1.bf16.msra.mxu0 %v3351
      %3376 = vmatprep.subr.bf16.mxu0 0
      %3377 = vmatpush1.bf16.msra.mxu0 0
      %3378 = vmatprep.subr.bf16.mxu0 0
      %3379 = vmatpush1.bf16.msra.mxu0 0
      %3380 = vmatprep.subr.bf16.mxu0 0
      %3381 = vmatpush1.bf16.msra.mxu0 0
      %3382 = vmatprep.subr.bf16.mxu0 0
      %3383 = vmatpush1.bf16.msra.mxu0 0
      %3384 = vmatprep.subr.bf16.mxu0 0
      %3385 = vmatpush1.bf16.msra.mxu0 0
      %3386 = vmatprep.subr.bf16.mxu0 0
      %3387 = vmatpush1.bf16.msra.mxu0 0
      %3388 = vmatprep.subr.bf16.mxu0 0
      %3389 = vmatpush1.bf16.msra.mxu0 0
      %3390 = vmatprep.subr.bf16.mxu0 0
      %3391 = vmatpush1.bf16.msra.mxu0 0
      %3392 = vmatprep.mubr.bf16.mxu0 0
      %3393 = vmatmul.mubr.bf16.gmra.mrb[0].mxu0 %v3288
      %v3394 = vpop.f32.mrb[0].mxu0
      %v3395 = vadd.f32 %v3310, %v3394
      %v3396 = vpop.f32.mrb[0].mxu0
      %v3397 = vpop.f32.mrb[0].mxu0
      %v3398 = vpop.f32.mrb[0].mxu0
      %3399 = vdwg.mxu0
      %3400 = vst [vmem:[%s9] sm:$0xff] %v3395
    $region53: #{lstm_model_forward.1} parent=1 // pred_fallthru
      _
    // Predicated region
    $region54: #{lstm_model_forward.1} parent=1 // pred_check
      _
    $region55: #{lstm_model_forward.1} parent=1 // pred_check_branch
      %3402 = sbr.rel (0) target = $region57
    $region56: #{lstm_model_forward.1} parent=1 // pred_region
      _
    $region57: #{lstm_model_forward.1} parent=1 // pred_fallthru
      _
    // Predicated region
    $region58: #{lstm_model_forward.1} parent=1 // pred_check
      _
    $region59: #{lstm_model_forward.1} parent=1 // pred_check_branch
      %3404 = sbr.rel (0) target = $region61
    $region60: #{lstm_model_forward.1} parent=1 // pred_region
      _
    $region61: #{lstm_model_forward.1} parent=1 // pred_fallthru
      _
    %3405 = vsyncpa [#allocation7], 1
    %3406 = vsyncpa [#allocation9], 1

</llo_original>
